<compile_context>
chip_gen: v5e
topology: v5e:2x2
jax: 0.10.0
libtpu: 0.0.40
codegen_flags: <defaults>
</compile_context>

<pallas_src>
import jax
import jax.numpy as jnp
from jax import lax
from jax.experimental import pallas as pl
from jax.experimental.pallas import tpu as pltpu


def bottleneck_kernel(x_ref, xt_ref, xb_ref,
                      w1_ref, b1_ref, w2_ref, b2_ref, w3_ref, b3_ref,
                      out_ref, hpad_ref):
    # x_ref   : (1, th, W, Cin)  bf16 main row tile
    # xt_ref  : (1, 1, W, Cin)   bf16 top halo row (clamped; zeroed at top boundary)
    # xb_ref  : (1, 1, W, Cin)   bf16 bottom halo row (clamped; zeroed at bottom boundary)
    # w1_ref  : (Cin, P)         bf16, 1x1 conv (BN1 scale folded)
    # w2_ref  : (3, 3P, P)       bf16, 3x3 conv, kw-major: w2_ref[b, a*P+ci, co]
    # w3_ref  : (P, Cout)        bf16, 1x1 conv (BN3 scale folded)
    # b*_ref  : folded BN biases, f32
    # out_ref : (1, th, W, Cout) bf16
    # hpad_ref: VMEM scratch (th+2, W+2, P) bf16 — padded conv1 activations for this tile
    i = pl.program_id(1)
    last = pl.num_programs(1) - 1
    _, th, W, Cin = x_ref.shape
    Hp, Wp, P = hpad_ref.shape
    Cout = w3_ref.shape[1]

    # ---- conv1 (1x1, BN scale folded) + bias + relu on tile + its two halo rows ----
    x_ext = jnp.concatenate([xt_ref[0], x_ref[0], xb_ref[0]], axis=0)    # (Hp, W, Cin)
    h1 = jnp.dot(x_ext.reshape(Hp * W, Cin), w1_ref[...],
                 preferred_element_type=jnp.float32)
    h1 = jnp.maximum(h1 + b1_ref[...], 0.0)                              # (Hp*W, P) f32
    h1b = h1.reshape(Hp, W, P).astype(hpad_ref.dtype)

    # ---- build padded slab in VMEM scratch ----
    # Border columns are re-zeroed every step (tiny: 2*Hp*P elements) so there is no
    # cross-step scratch state and both grid axes stay truly parallel (megacore-safe).
    zcol = jnp.zeros((Hp, 1, P), hpad_ref.dtype)
    hpad_ref[:, 0:1, :] = zcol
    hpad_ref[:, Wp - 1:Wp, :] = zcol
    hpad_ref[:, 1:W + 1, :] = h1b                       # interior (incl. halo rows)
    zrow = jnp.zeros((1, W, P), hpad_ref.dtype)

    @pl.when(i == 0)
    def _():                                            # top image boundary: pad row = 0
        hpad_ref[0:1, 1:W + 1, :] = zrow

    @pl.when(i == last)
    def _():                                            # bottom image boundary: pad row = 0
        hpad_ref[Hp - 1:Hp, 1:W + 1, :] = zrow

    # ---- conv2 (3x3, stride 1, pad 1) + bias + relu ----
    # Grouped by kw: one sublane-realigned window read per kw; the three kh shifts are
    # free leading-dim slices. Narrow layers: 3 accumulated K=3P matmuls (im2col width
    # only 3P). Wide layers (P >= 256): skip the concat, accumulate 9 K=P matmuls.
    use_direct = P >= 256
    h2 = jnp.zeros((th * W, P), jnp.float32)
    for b in range(3):
        colslab = hpad_ref[:, b:b + W, :]               # (Hp, W, P) bf16
        w2b = w2_ref[b]                                 # (3P, P) bf16
        if use_direct:
            for a in range(3):
                h2 = h2 + jnp.dot(colslab[a:a + th].reshape(th * W, P),
                                  w2b[a * P:(a + 1) * P],
                                  preferred_element_type=jnp.float32)
        else:
            patches = jnp.concatenate(
                [colslab[a:a + th].reshape(th * W, P) for a in range(3)], axis=-1)
            h2 = h2 + jnp.dot(patches, w2b, preferred_element_type=jnp.float32)
    h2 = jnp.maximum(h2 + b2_ref[...], 0.0)             # (th*W, P) f32

    # ---- conv3 (1x1, BN scale folded) + bias, identity residual, relu (f32 epilogue) ----
    h3 = jnp.dot(h2.astype(jnp.bfloat16), w3_ref[...],
                 preferred_element_type=jnp.float32) + b3_ref[...]       # (th*W, Cout)
    res = x_ref[0].reshape(th * W, Cin).astype(jnp.float32)
    out = jnp.maximum(h3 + res, 0.0)
    out_ref[0] = out.reshape(th, W, Cout).astype(out_ref.dtype)


def _pick_tile_h(H, W, Cin, P, Cout, budget_bytes=2 << 20):
    """Largest divisor of H whose per-step working set fits ~budget (or th*W <= 256)."""
    for th in range(H, 0, -1):
        if H % th:
            continue
        hp, wp = th + 2, W + 2
        tile_bytes = (
            2 * (th * W * Cin * 2 + 2 * W * Cin * 2 + th * W * Cout * 2)   # dbl-buffered I/O
            + hp * wp * P * 2                                              # padded slab
            + hp * W * (Cin * 2 + P * 4)                                   # x_ext + h1(f32)
            + th * W * (3 * P * 2 + P * 4 + Cout * 4 + Cin * 4)            # patches/h2/h3/res
        )
        if tile_bytes <= budget_bytes or th * W <= 256:
            return th
    return H


def bottleneck_forward_nhwc(x_nhwc, w1, s1, b1, w2, s2, b2, w3, s3, b3, *, tile_h=None):
    """Primary NHWC entry point.

    x_nhwc: (N, H, W, Cin). Weights: w1 (Cin, P), w2 (3, 3, P, P) HWIO, w3 (P, Cout).
    s*/b*: folded inference-BN scale/bias per channel. Returns bf16 NHWC output.
    """
    N, H, W, Cin = x_nhwc.shape
    P = w1.shape[1]
    Cout = w3.shape[1]
    assert Cin == Cout, "downsample=None requires inplanes == planes * expansion"

    f32 = jnp.float32
    # Fold BN scale into conv weights in f32 (exact: conv(x,w)*s == conv(x, w*s)), then bf16.
    w1f = (w1.astype(f32) * s1.astype(f32)[None, :]).astype(jnp.bfloat16)          # (Cin,P)
    w2s = w2.astype(f32) * s2.astype(f32)[None, None, None, :]                     # (kh,kw,ci,co)
    w2f = jnp.transpose(w2s, (1, 0, 2, 3)).reshape(3, 3 * P, P).astype(jnp.bfloat16)
    w3f = (w3.astype(f32) * s3.astype(f32)[None, :]).astype(jnp.bfloat16)          # (P,Cout)
    b1f = b1.reshape(1, P).astype(f32)
    b2f = b2.reshape(1, P).astype(f32)
    b3f = b3.reshape(1, Cout).astype(f32)

    xb = x_nhwc.astype(jnp.bfloat16)      # bf16 activation I/O (these layers are HBM-bound)

    if tile_h is None:
        tile_h = _pick_tile_h(H, W, Cin, P, Cout)
    th = int(tile_h)
    assert H % th == 0, "tile_h must divide H"
    n_tiles = H // th
    Hp, Wp = th + 2, W + 2

    # ---- VMEM budget: per-step working set + weights, capped below physical VMEM ----
    tile_bytes = (
        2 * (th * W * Cin * 2 + 2 * W * Cin * 2 + th * W * Cout * 2)
        + Hp * Wp * P * 2
        + Hp * W * (Cin * 2 + P * 4)
        + th * W * (3 * P * 2 + P * 4 + Cout * 4 + Cin * 4)
    )
    w_bytes = (Cin * P + 9 * P * P + P * Cout) * 2 + (2 * P + Cout) * 4
    try:
        vmem_cap = int(pltpu.get_tpu_info().vmem_capacity_bytes)
    except Exception:
        vmem_cap = 64 << 20               # conservative default (v7x per-TC VMEM)
    vmem_limit = int(min(vmem_cap * 3 // 4, max(32 << 20, 2 * (tile_bytes + w_bytes))))

    flops = 2 * N * H * W * (Cin * P + 9 * P * P + P * Cout)
    bytes_accessed = (N * H * W * (Cin + Cout) * 2            # bf16 activations in/out
                      + N * n_tiles * 2 * W * Cin * 2         # halo row refetch
                      + w_bytes)
    cost = pl.CostEstimate(flops=flops, transcendentals=0, bytes_accessed=bytes_accessed)

    def build(single_buffer_consts):
        def const_spec(shape):
            imap = lambda n, i: (0,) * len(shape)
            if single_buffer_consts:
                # Constant-index operands are DMA'd once; keep a single VMEM buffer
                # (saves several MiB at wide stages — matters on v7x's 64 MiB VMEM).
                return pl.BlockSpec(shape, imap, pipeline_mode=pl.Buffered(1))
            return pl.BlockSpec(shape, imap)

        return pl.pallas_call(
            bottleneck_kernel,
            out_shape=jax.ShapeDtypeStruct((N, H, W, Cout), jnp.bfloat16),
            grid_spec=pltpu.PrefetchScalarGridSpec(
                num_scalar_prefetch=0,
                grid=(N, n_tiles),
                in_specs=[
                    # main row tile
                    pl.BlockSpec((1, th, W, Cin), lambda n, i: (n, i, 0, 0)),
                    # top halo row (clamped at the image top; zeroed in-kernel when i==0)
                    pl.BlockSpec((1, 1, W, Cin),
                                 lambda n, i: (n, jnp.maximum(i * th - 1, 0), 0, 0)),
                    # bottom halo row (clamped at the image bottom; zeroed when i==last)
                    pl.BlockSpec((1, 1, W, Cin),
                                 lambda n, i: (n, jnp.minimum((i + 1) * th, H - 1), 0, 0)),
                    const_spec((Cin, P)),
                    const_spec((1, P)),
                    const_spec((3, 3 * P, P)),
                    const_spec((1, P)),
                    const_spec((P, Cout)),
                    const_spec((1, Cout)),
                ],
                out_specs=pl.BlockSpec((1, th, W, Cout), lambda n, i: (n, i, 0, 0)),
                scratch_shapes=[pltpu.VMEM((Hp, Wp, P), jnp.bfloat16)],
            ),
            compiler_params=pltpu.CompilerParams(
                dimension_semantics=("parallel", "parallel"),
                vmem_limit_bytes=vmem_limit),
            cost_estimate=cost,
        )

    args = (xb, xb, xb, w1f, b1f, w2f, b2f, w3f, b3f)
    try:
        return build(True)(*args)
    except Exception:
        # Fallback if single-buffering constant operands is unsupported in this jax build.
        return build(False)(*args)


def bottleneck_forward(x_nchw, w1, s1, b1, w2, s2, b2, w3, s3, b3, *, tile_h=None):
    """PyTorch-layout compatibility shim: (N, Cin, H, W) -> (N, Cout, H, W).

    NOTE: the two transposes are extra HBM passes; prefer bottleneck_forward_nhwc
    in an NHWC pipeline (they exist only for NCHW callers / testing).
    """
    x = jnp.transpose(x_nchw, (0, 2, 3, 1))
    out = bottleneck_forward_nhwc(x, w1, s1, b1, w2, s2, b2, w3, s3, b3, tile_h=tile_h)
    return jnp.transpose(out, (0, 3, 1, 2))


if __name__ == "__main__":
    key = jax.random.PRNGKey(0)
    N, H, W = 2, 16, 16
    planes = 4
    expansion = 4
    inplanes = planes * expansion        # identity residual requires Cin == Cout
    Cout = planes * expansion

    keys = jax.random.split(key, 16)
    x_nchw = jax.random.normal(keys[0], (N, inplanes, H, W), jnp.float32)

    eps = 1e-5

    def bn_fold(kg, kb, km, kv, c):
        gamma = jax.random.uniform(kg, (c,), jnp.float32, 0.5, 1.5)
        beta = jax.random.normal(kb, (c,), jnp.float32) * 0.1
        mean = jax.random.normal(km, (c,), jnp.float32) * 0.1
        var = jax.random.uniform(kv, (c,), jnp.float32, 0.5, 1.5)
        scale = gamma / jnp.sqrt(var + eps)
        bias = beta - mean * scale
        return scale, bias

    # conv weights in (in, out) / HWIO layouts
    w1 = jax.random.normal(keys[1], (inplanes, planes), jnp.float32) * 0.1
    s1, b1 = bn_fold(keys[2], keys[3], keys[4], keys[5], planes)
    w2 = jax.random.normal(keys[6], (3, 3, planes, planes), jnp.float32) * 0.1
    s2, b2 = bn_fold(keys[7], keys[8], keys[9], keys[10], planes)
    w3 = jax.random.normal(keys[11], (planes, Cout), jnp.float32) * 0.1
    s3, b3 = bn_fold(keys[12], keys[13], keys[14], keys[15], Cout)

    # NHWC is the primary API; this transpose is test-harness plumbing only.
    x_nhwc = jnp.transpose(x_nchw, (0, 2, 3, 1))

    # tile_h=8 exercises the row-tiled halo path: grid = (N=2, row_tiles=2).
    out = bottleneck_forward_nhwc(x_nhwc, w1, s1, b1, w2, s2, b2, w3, s3, b3, tile_h=8)
    out = jax.block_until_ready(out)

    # ---- pure-JAX f32 reference (same folded inference-BN semantics) ----
    def conv(z, w, pad):
        return lax.conv_general_dilated(
            z, w, (1, 1), pad, dimension_numbers=('NHWC', 'HWIO', 'NHWC'))

    r = jnp.maximum(conv(x_nhwc, w1.reshape(1, 1, inplanes, planes), 'VALID') * s1 + b1, 0.0)
    r = jnp.maximum(conv(r, w2, 'SAME') * s2 + b2, 0.0)
    r = conv(r, w3.reshape(1, 1, planes, Cout), 'VALID') * s3 + b3
    ref = jnp.maximum(r + x_nhwc, 0.0)

    out_f32 = out.astype(jnp.float32)
    max_err = float(jnp.max(jnp.abs(out_f32 - ref)))
    # bf16 activations/weights inside the kernel vs f32 reference -> loosened tolerance.
    assert jnp.allclose(out_f32, ref, atol=3e-2, rtol=3e-2), f"max_err={max_err}"
    print("KERNEL_OK")
</pallas_src>

<mosaic_0001>
module attributes {stable_mosaic.version = 11 : i64} {
  func.func @bottleneck_kernel(%arg0: i32, %arg1: i32, %arg2: memref<1x8x16x16xbf16, #tpu.memory_space<vmem>>, %arg3: memref<1x1x16x16xbf16, #tpu.memory_space<vmem>>, %arg4: memref<1x1x16x16xbf16, #tpu.memory_space<vmem>>, %arg5: memref<16x4xbf16, #tpu.memory_space<vmem>>, %arg6: memref<1x4xf32, #tpu.memory_space<vmem>>, %arg7: memref<3x12x4xbf16, #tpu.memory_space<vmem>>, %arg8: memref<1x4xf32, #tpu.memory_space<vmem>>, %arg9: memref<4x16xbf16, #tpu.memory_space<vmem>>, %arg10: memref<1x16xf32, #tpu.memory_space<vmem>>, %arg11: memref<1x8x16x16xbf16, #tpu.memory_space<vmem>>, %arg12: memref<10x18x4xbf16, #tpu.memory_space<vmem>>) attributes {dimension_semantics = [#tpu.dimension_semantics<parallel>, #tpu.dimension_semantics<parallel>], iteration_bounds = array<i64: 2, 2>, scalar_prefetch = 0 : i64, scratch_operands = 1 : i64, tpu.core_type = #tpu.core_type<tc>, window_params = [{transform_indices = @transform_0, window_bounds = array<i64: 1, 8, 16, 16>}, {transform_indices = @transform_1, window_bounds = array<i64: 1, 1, 16, 16>}, {transform_indices = @transform_2, window_bounds = array<i64: 1, 1, 16, 16>}, {pipeline_mode = #tpu.pipeline_mode<synchronous>, transform_indices = @transform_3, window_bounds = array<i64: 16, 4>}, {pipeline_mode = #tpu.pipeline_mode<synchronous>, transform_indices = @transform_4, window_bounds = array<i64: 1, 4>}, {pipeline_mode = #tpu.pipeline_mode<synchronous>, transform_indices = @transform_5, window_bounds = array<i64: 3, 12, 4>}, {pipeline_mode = #tpu.pipeline_mode<synchronous>, transform_indices = @transform_6, window_bounds = array<i64: 1, 4>}, {pipeline_mode = #tpu.pipeline_mode<synchronous>, transform_indices = @transform_7, window_bounds = array<i64: 4, 16>}, {pipeline_mode = #tpu.pipeline_mode<synchronous>, transform_indices = @transform_8, window_bounds = array<i64: 1, 16>}, {transform_indices = @transform_9, window_bounds = array<i64: 1, 8, 16, 16>}]} {
    %c0 = arith.constant 0 : index
    %c0_0 = arith.constant 0 : index
    %c0_1 = arith.constant 0 : index
    %c0_2 = arith.constant 0 : index
    %0 = vector.load %arg3[%c0, %c0_0, %c0_1, %c0_2] : memref<1x1x16x16xbf16, #tpu.memory_space<vmem>>, vector<1x1x16x16xbf16>
    %1 = vector.shape_cast %0 : vector<1x1x16x16xbf16> to vector<1x16x16xbf16>
    %c0_3 = arith.constant 0 : index
    %c0_4 = arith.constant 0 : index
    %c0_5 = arith.constant 0 : index
    %c0_6 = arith.constant 0 : index
    %2 = vector.load %arg2[%c0_3, %c0_4, %c0_5, %c0_6] : memref<1x8x16x16xbf16, #tpu.memory_space<vmem>>, vector<1x8x16x16xbf16>
    %3 = vector.shape_cast %2 : vector<1x8x16x16xbf16> to vector<8x16x16xbf16>
    %c0_7 = arith.constant 0 : index
    %c0_8 = arith.constant 0 : index
    %c0_9 = arith.constant 0 : index
    %c0_10 = arith.constant 0 : index
    %4 = vector.load %arg4[%c0_7, %c0_8, %c0_9, %c0_10] : memref<1x1x16x16xbf16, #tpu.memory_space<vmem>>, vector<1x1x16x16xbf16>
    %5 = vector.shape_cast %4 : vector<1x1x16x16xbf16> to vector<1x16x16xbf16>
    %6 = tpu.concatenate %1, %3, %5 in 0 : vector<1x16x16xbf16>, vector<8x16x16xbf16>, vector<1x16x16xbf16> -> vector<10x16x16xbf16>
    %7 = vector.shape_cast %6 : vector<10x16x16xbf16> to vector<160x16xbf16>
    %c0_11 = arith.constant 0 : index
    %c0_12 = arith.constant 0 : index
    %8 = vector.load %arg5[%c0_11, %c0_12] : memref<16x4xbf16, #tpu.memory_space<vmem>>, vector<16x4xbf16>
    %cst = arith.constant dense<0.000000e+00> : vector<160x4xf32>
    %9 = tpu.matmul %7, %8, %cst {dimension_numbers = #tpu.dot_dimension_numbers<[1], [0], [0], [1], [0, 0, 1, 1], [], []>} : vector<160x16xbf16>, vector<16x4xbf16>, vector<160x4xf32> -> vector<160x4xf32>
    %c0_13 = arith.constant 0 : index
    %c0_14 = arith.constant 0 : index
    %10 = vector.load %arg6[%c0_13, %c0_14] : memref<1x4xf32, #tpu.memory_space<vmem>>, vector<1x4xf32>
    %11 = vector.broadcast %10 : vector<1x4xf32> to vector<160x4xf32>
    %12 = arith.addf %9, %11 : vector<160x4xf32>
    %cst_15 = arith.constant 0.000000e+00 : f32
    %13 = vector.broadcast %cst_15 : f32 to vector<160x4xf32>
    %14 = arith.maximumf %12, %13 : vector<160x4xf32>
    %15 = vector.shape_cast %14 : vector<160x4xf32> to vector<10x16x4xf32>
    %16 = arith.truncf %15 : vector<10x16x4xf32> to vector<10x16x4xbf16>
    %cst_16 = arith.constant 0.000000e+00 : bf16
    %17 = vector.broadcast %cst_16 : bf16 to vector<10x1x4xbf16>
    %c0_17 = arith.constant 0 : index
    %c0_18 = arith.constant 0 : index
    %c0_19 = arith.constant 0 : index
    %18 = vector.load %arg12[%c0_17, %c0_18, %c0_19] : memref<10x18x4xbf16, #tpu.memory_space<vmem>>, vector<10x1x4xbf16>
    tpu.vector_store %arg12[%c0_17, %c0_18, %c0_19], %17 {strides = array<i32>} : memref<10x18x4xbf16, #tpu.memory_space<vmem>>, vector<10x1x4xbf16>,
    %c0_20 = arith.constant 0 : index
    %c17 = arith.constant 17 : index
    %c0_21 = arith.constant 0 : index
    %19 = vector.load %arg12[%c0_20, %c17, %c0_21] : memref<10x18x4xbf16, #tpu.memory_space<vmem>>, vector<10x1x4xbf16>
    tpu.vector_store %arg12[%c0_20, %c17, %c0_21], %17 {strides = array<i32>} : memref<10x18x4xbf16, #tpu.memory_space<vmem>>, vector<10x1x4xbf16>,
    %c0_22 = arith.constant 0 : index
    %c1 = arith.constant 1 : index
    %c0_23 = arith.constant 0 : index
    %20 = vector.load %arg12[%c0_22, %c1, %c0_23] : memref<10x18x4xbf16, #tpu.memory_space<vmem>>, vector<10x16x4xbf16>
    tpu.vector_store %arg12[%c0_22, %c1, %c0_23], %16 {strides = array<i32>} : memref<10x18x4xbf16, #tpu.memory_space<vmem>>, vector<10x16x4xbf16>,
    %cst_24 = arith.constant 0.000000e+00 : bf16
    %21 = vector.broadcast %cst_24 : bf16 to vector<1x16x4xbf16>
    %c0_i32 = arith.constant 0 : i32
    %22 = arith.cmpi eq, %arg1, %c0_i32 : i32
    %23 = arith.extui %22 : i1 to i32
    %c0_i32_25 = arith.constant 0 : i32
    %24 = arith.cmpi ne, %23, %c0_i32_25 : i32
    scf.if %24 {
      %c0_65 = arith.constant 0 : index
      %c1_66 = arith.constant 1 : index
      %c0_67 = arith.constant 0 : index
      %88 = vector.load %arg12[%c0_65, %c1_66, %c0_67] : memref<10x18x4xbf16, #tpu.memory_space<vmem>>, vector<1x16x4xbf16>
      tpu.vector_store %arg12[%c0_65, %c1_66, %c0_67], %21 {strides = array<i32>} : memref<10x18x4xbf16, #tpu.memory_space<vmem>>, vector<1x16x4xbf16>,
    } else {
    }
    %c1_i32 = arith.constant 1 : i32
    %25 = arith.cmpi eq, %arg1, %c1_i32 : i32
    %26 = arith.extui %25 : i1 to i32
    %c0_i32_26 = arith.constant 0 : i32
    %27 = arith.cmpi ne, %26, %c0_i32_26 : i32
    scf.if %27 {
      %c9 = arith.constant 9 : index
      %c1_65 = arith.constant 1 : index
      %c0_66 = arith.constant 0 : index
      %88 = vector.load %arg12[%c9, %c1_65, %c0_66] : memref<10x18x4xbf16, #tpu.memory_space<vmem>>, vector<1x16x4xbf16>
      tpu.vector_store %arg12[%c9, %c1_65, %c0_66], %21 {strides = array<i32>} : memref<10x18x4xbf16, #tpu.memory_space<vmem>>, vector<1x16x4xbf16>,
    } else {
    }
    %cst_27 = arith.constant 0.000000e+00 : f32
    %28 = vector.broadcast %cst_27 : f32 to vector<128x4xf32>
    %c0_28 = arith.constant 0 : index
    %c0_29 = arith.constant 0 : index
    %c0_30 = arith.constant 0 : index
    %29 = vector.load %arg12[%c0_28, %c0_29, %c0_30] : memref<10x18x4xbf16, #tpu.memory_space<vmem>>, vector<10x16x4xbf16>
    %c0_31 = arith.constant 0 : index
    %c0_32 = arith.constant 0 : index
    %c0_33 = arith.constant 0 : index
    %30 = vector.load %arg7[%c0_31, %c0_32, %c0_33] : memref<3x12x4xbf16, #tpu.memory_space<vmem>>, vector<1x12x4xbf16>
    %31 = vector.shape_cast %30 : vector<1x12x4xbf16> to vector<12x4xbf16>
    %32 = vector.extract_strided_slice %29 {offsets = [0, 0, 0], sizes = [8, 16, 4], strides = [1, 1, 1]} : vector<10x16x4xbf16> to vector<8x16x4xbf16>
    %33 = vector.shape_cast %32 : vector<8x16x4xbf16> to vector<128x4xbf16>
    %34 = vector.extract_strided_slice %29 {offsets = [1, 0, 0], sizes = [8, 16, 4], strides = [1, 1, 1]} : vector<10x16x4xbf16> to vector<8x16x4xbf16>
    %35 = vector.shape_cast %34 : vector<8x16x4xbf16> to vector<128x4xbf16>
    %36 = vector.extract_strided_slice %29 {offsets = [2, 0, 0], sizes = [8, 16, 4], strides = [1, 1, 1]} : vector<10x16x4xbf16> to vector<8x16x4xbf16>
    %37 = vector.shape_cast %36 : vector<8x16x4xbf16> to vector<128x4xbf16>
    %38 = tpu.concatenate %33, %35, %37 in 1 : vector<128x4xbf16>, vector<128x4xbf16>, vector<128x4xbf16> -> vector<128x12xbf16>
    %cst_34 = arith.constant dense<0.000000e+00> : vector<128x4xf32>
    %39 = tpu.matmul %38, %31, %cst_34 {dimension_numbers = #tpu.dot_dimension_numbers<[1], [0], [0], [1], [0, 0, 1, 1], [], []>} : vector<128x12xbf16>, vector<12x4xbf16>, vector<128x4xf32> -> vector<128x4xf32>
    %40 = arith.addf %28, %39 : vector<128x4xf32>
    %c0_35 = arith.constant 0 : index
    %c1_36 = arith.constant 1 : index
    %c0_37 = arith.constant 0 : index
    %41 = vector.load %arg12[%c0_35, %c1_36, %c0_37] : memref<10x18x4xbf16, #tpu.memory_space<vmem>>, vector<10x16x4xbf16>
    %c1_38 = arith.constant 1 : index
    %c0_39 = arith.constant 0 : index
    %c0_40 = arith.constant 0 : index
    %42 = vector.load %arg7[%c1_38, %c0_39, %c0_40] : memref<3x12x4xbf16, #tpu.memory_space<vmem>>, vector<1x12x4xbf16>
    %43 = vector.shape_cast %42 : vector<1x12x4xbf16> to vector<12x4xbf16>
    %44 = vector.extract_strided_slice %41 {offsets = [0, 0, 0], sizes = [8, 16, 4], strides = [1, 1, 1]} : vector<10x16x4xbf16> to vector<8x16x4xbf16>
    %45 = vector.shape_cast %44 : vector<8x16x4xbf16> to vector<128x4xbf16>
    %46 = vector.extract_strided_slice %41 {offsets = [1, 0, 0], sizes = [8, 16, 4], strides = [1, 1, 1]} : vector<10x16x4xbf16> to vector<8x16x4xbf16>
    %47 = vector.shape_cast %46 : vector<8x16x4xbf16> to vector<128x4xbf16>
    %48 = vector.extract_strided_slice %41 {offsets = [2, 0, 0], sizes = [8, 16, 4], strides = [1, 1, 1]} : vector<10x16x4xbf16> to vector<8x16x4xbf16>
    %49 = vector.shape_cast %48 : vector<8x16x4xbf16> to vector<128x4xbf16>
    %50 = tpu.concatenate %45, %47, %49 in 1 : vector<128x4xbf16>, vector<128x4xbf16>, vector<128x4xbf16> -> vector<128x12xbf16>
    %cst_41 = arith.constant dense<0.000000e+00> : vector<128x4xf32>
    %51 = tpu.matmul %50, %43, %cst_41 {dimension_numbers = #tpu.dot_dimension_numbers<[1], [0], [0], [1], [0, 0, 1, 1], [], []>} : vector<128x12xbf16>, vector<12x4xbf16>, vector<128x4xf32> -> vector<128x4xf32>
    %52 = arith.addf %40, %51 : vector<128x4xf32>
    %c0_42 = arith.constant 0 : index
    %c2 = arith.constant 2 : index
    %c0_43 = arith.constant 0 : index
    %53 = vector.load %arg12[%c0_42, %c2, %c0_43] : memref<10x18x4xbf16, #tpu.memory_space<vmem>>, vector<10x16x4xbf16>
    %c2_44 = arith.constant 2 : index
    %c0_45 = arith.constant 0 : index
    %c0_46 = arith.constant 0 : index
    %54 = vector.load %arg7[%c2_44, %c0_45, %c0_46] : memref<3x12x4xbf16, #tpu.memory_space<vmem>>, vector<1x12x4xbf16>
    %55 = vector.shape_cast %54 : vector<1x12x4xbf16> to vector<12x4xbf16>
    %56 = vector.extract_strided_slice %53 {offsets = [0, 0, 0], sizes = [8, 16, 4], strides = [1, 1, 1]} : vector<10x16x4xbf16> to vector<8x16x4xbf16>
    %57 = vector.shape_cast %56 : vector<8x16x4xbf16> to vector<128x4xbf16>
    %58 = vector.extract_strided_slice %53 {offsets = [1, 0, 0], sizes = [8, 16, 4], strides = [1, 1, 1]} : vector<10x16x4xbf16> to vector<8x16x4xbf16>
    %59 = vector.shape_cast %58 : vector<8x16x4xbf16> to vector<128x4xbf16>
    %60 = vector.extract_strided_slice %53 {offsets = [2, 0, 0], sizes = [8, 16, 4], strides = [1, 1, 1]} : vector<10x16x4xbf16> to vector<8x16x4xbf16>
    %61 = vector.shape_cast %60 : vector<8x16x4xbf16> to vector<128x4xbf16>
    %62 = tpu.concatenate %57, %59, %61 in 1 : vector<128x4xbf16>, vector<128x4xbf16>, vector<128x4xbf16> -> vector<128x12xbf16>
    %cst_47 = arith.constant dense<0.000000e+00> : vector<128x4xf32>
    %63 = tpu.matmul %62, %55, %cst_47 {dimension_numbers = #tpu.dot_dimension_numbers<[1], [0], [0], [1], [0, 0, 1, 1], [], []>} : vector<128x12xbf16>, vector<12x4xbf16>, vector<128x4xf32> -> vector<128x4xf32>
    %64 = arith.addf %52, %63 : vector<128x4xf32>
    %c0_48 = arith.constant 0 : index
    %c0_49 = arith.constant 0 : index
    %65 = vector.load %arg8[%c0_48, %c0_49] : memref<1x4xf32, #tpu.memory_space<vmem>>, vector<1x4xf32>
    %66 = vector.broadcast %65 : vector<1x4xf32> to vector<128x4xf32>
    %67 = arith.addf %64, %66 : vector<128x4xf32>
    %cst_50 = arith.constant 0.000000e+00 : f32
    %68 = vector.broadcast %cst_50 : f32 to vector<128x4xf32>
    %69 = arith.maximumf %67, %68 : vector<128x4xf32>
    %70 = arith.truncf %69 : vector<128x4xf32> to vector<128x4xbf16>
    %c0_51 = arith.constant 0 : index
    %c0_52 = arith.constant 0 : index
    %71 = vector.load %arg9[%c0_51, %c0_52] : memref<4x16xbf16, #tpu.memory_space<vmem>>, vector<4x16xbf16>
    %cst_53 = arith.constant dense<0.000000e+00> : vector<128x16xf32>
    %72 = tpu.matmul %70, %71, %cst_53 {dimension_numbers = #tpu.dot_dimension_numbers<[1], [0], [0], [1], [0, 0, 1, 1], [], []>} : vector<128x4xbf16>, vector<4x16xbf16>, vector<128x16xf32> -> vector<128x16xf32>
    %c0_54 = arith.constant 0 : index
    %c0_55 = arith.constant 0 : index
    %73 = vector.load %arg10[%c0_54, %c0_55] : memref<1x16xf32, #tpu.memory_space<vmem>>, vector<1x16xf32>
    %74 = vector.broadcast %73 : vector<1x16xf32> to vector<128x16xf32>
    %75 = arith.addf %72, %74 : vector<128x16xf32>
    %c0_56 = arith.constant 0 : index
    %c0_57 = arith.constant 0 : index
    %c0_58 = arith.constant 0 : index
    %c0_59 = arith.constant 0 : index
    %76 = vector.load %arg2[%c0_56, %c0_57, %c0_58, %c0_59] : memref<1x8x16x16xbf16, #tpu.memory_space<vmem>>, vector<1x8x16x16xbf16>
    %77 = vector.shape_cast %76 : vector<1x8x16x16xbf16> to vector<8x16x16xbf16>
    %78 = vector.shape_cast %77 : vector<8x16x16xbf16> to vector<128x16xbf16>
    %79 = arith.extf %78 : vector<128x16xbf16> to vector<128x16xf32>
    %80 = arith.addf %75, %79 : vector<128x16xf32>
    %cst_60 = arith.constant 0.000000e+00 : f32
    %81 = vector.broadcast %cst_60 : f32 to vector<128x16xf32>
    %82 = arith.maximumf %80, %81 : vector<128x16xf32>
    %83 = vector.shape_cast %82 : vector<128x16xf32> to vector<8x16x16xf32>
    %84 = arith.truncf %83 : vector<8x16x16xf32> to vector<8x16x16xbf16>
    %c0_61 = arith.constant 0 : index
    %c0_62 = arith.constant 0 : index
    %c0_63 = arith.constant 0 : index
    %c0_64 = arith.constant 0 : index
    %85 = vector.load %arg11[%c0_61, %c0_62, %c0_63, %c0_64] : memref<1x8x16x16xbf16, #tpu.memory_space<vmem>>, vector<1x8x16x16xbf16>
    %86 = vector.shape_cast %85 : vector<1x8x16x16xbf16> to vector<8x16x16xbf16>
    %87 = vector.shape_cast %84 : vector<8x16x16xbf16> to vector<1x8x16x16xbf16>
    tpu.vector_store %arg11[%c0_61, %c0_62, %c0_63, %c0_64], %87 {strides = array<i32>} : memref<1x8x16x16xbf16, #tpu.memory_space<vmem>>, vector<1x8x16x16xbf16>,
    return
  }
  func.func @transform_0(%arg0: i32, %arg1: i32) -> (i32, i32, i32, i32) {
    %c0_i32 = arith.constant 0 : i32
    %c0_i32_0 = arith.constant 0 : i32
    %c0_i32_1 = arith.constant 0 : i32
    return %arg0, %arg1, %c0_i32, %c0_i32_0 : i32, i32, i32, i32
  }
  func.func @transform_1(%arg0: i32, %arg1: i32) -> (i32, i32, i32, i32) {
    %c8_i32 = arith.constant 8 : i32
    %0 = arith.muli %arg1, %c8_i32 : i32
    %c1_i32 = arith.constant 1 : i32
    %1 = arith.subi %0, %c1_i32 : i32
    %c0_i32 = arith.constant 0 : i32
    %2 = arith.maxsi %1, %c0_i32 : i32
    %c0_i32_0 = arith.constant 0 : i32
    %c0_i32_1 = arith.constant 0 : i32
    %c0_i32_2 = arith.constant 0 : i32
    return %arg0, %2, %c0_i32_0, %c0_i32_1 : i32, i32, i32, i32
  }
  func.func @transform_2(%arg0: i32, %arg1: i32) -> (i32, i32, i32, i32) {
    %c1_i32 = arith.constant 1 : i32
    %0 = arith.addi %arg1, %c1_i32 : i32
    %c8_i32 = arith.constant 8 : i32
    %1 = arith.muli %0, %c8_i32 : i32
    %c15_i32 = arith.constant 15 : i32
    %2 = arith.minsi %1, %c15_i32 : i32
    %c0_i32 = arith.constant 0 : i32
    %c0_i32_0 = arith.constant 0 : i32
    %c0_i32_1 = arith.constant 0 : i32
    return %arg0, %2, %c0_i32, %c0_i32_0 : i32, i32, i32, i32
  }
  func.func @transform_3(%arg0: i32, %arg1: i32) -> (i32, i32) {
    %c0_i32 = arith.constant 0 : i32
    %c0_i32_0 = arith.constant 0 : i32
    %c0_i32_1 = arith.constant 0 : i32
    return %c0_i32, %c0_i32_0 : i32, i32
  }
  func.func @transform_4(%arg0: i32, %arg1: i32) -> (i32, i32) {
    %c0_i32 = arith.constant 0 : i32
    %c0_i32_0 = arith.constant 0 : i32
    %c0_i32_1 = arith.constant 0 : i32
    return %c0_i32, %c0_i32_0 : i32, i32
  }
  func.func @transform_5(%arg0: i32, %arg1: i32) -> (i32, i32, i32) {
    %c0_i32 = arith.constant 0 : i32
    %c0_i32_0 = arith.constant 0 : i32
    %c0_i32_1 = arith.constant 0 : i32
    %c0_i32_2 = arith.constant 0 : i32
    return %c0_i32, %c0_i32_0, %c0_i32_1 : i32, i32, i32
  }
  func.func @transform_6(%arg0: i32, %arg1: i32) -> (i32, i32) {
    %c0_i32 = arith.constant 0 : i32
    %c0_i32_0 = arith.constant 0 : i32
    %c0_i32_1 = arith.constant 0 : i32
    return %c0_i32, %c0_i32_0 : i32, i32
  }
  func.func @transform_7(%arg0: i32, %arg1: i32) -> (i32, i32) {
    %c0_i32 = arith.constant 0 : i32
    %c0_i32_0 = arith.constant 0 : i32
    %c0_i32_1 = arith.constant 0 : i32
    return %c0_i32, %c0_i32_0 : i32, i32
  }
  func.func @transform_8(%arg0: i32, %arg1: i32) -> (i32, i32) {
    %c0_i32 = arith.constant 0 : i32
    %c0_i32_0 = arith.constant 0 : i32
    %c0_i32_1 = arith.constant 0 : i32
    return %c0_i32, %c0_i32_0 : i32, i32
  }
  func.func @transform_9(%arg0: i32, %arg1: i32) -> (i32, i32, i32, i32) {
    %c0_i32 = arith.constant 0 : i32
    %c0_i32_0 = arith.constant 0 : i32
    %c0_i32_1 = arith.constant 0 : i32
    return %arg0, %arg1, %c0_i32, %c0_i32_0 : i32, i32, i32, i32
  }
}

module attributes {stable_mosaic.version = 11 : i64} {
  func.func @bottleneck_kernel(%arg0: i32, %arg1: i32, %arg2: memref<1x8x16x16xbf16, #tpu.memory_space<vmem>>, %arg3: memref<1x1x16x16xbf16, #tpu.memory_space<vmem>>, %arg4: memref<1x1x16x16xbf16, #tpu.memory_space<vmem>>, %arg5: memref<16x4xbf16, #tpu.memory_space<vmem>>, %arg6: memref<1x4xf32, #tpu.memory_space<vmem>>, %arg7: memref<3x12x4xbf16, #tpu.memory_space<vmem>>, %arg8: memref<1x4xf32, #tpu.memory_space<vmem>>, %arg9: memref<4x16xbf16, #tpu.memory_space<vmem>>, %arg10: memref<1x16xf32, #tpu.memory_space<vmem>>, %arg11: memref<1x8x16x16xbf16, #tpu.memory_space<vmem>>, %arg12: memref<10x18x4xbf16, #tpu.memory_space<vmem>>) attributes {dimension_semantics = [#tpu.dimension_semantics<parallel>, #tpu.dimension_semantics<parallel>], iteration_bounds = array<i64: 2, 2>, scalar_prefetch = 0 : i64, scratch_operands = 1 : i64, tpu.core_type = #tpu.core_type<tc>, window_params = [{transform_indices = @transform_0, window_bounds = array<i64: 1, 8, 16, 16>}, {transform_indices = @transform_1, window_bounds = array<i64: 1, 1, 16, 16>}, {transform_indices = @transform_2, window_bounds = array<i64: 1, 1, 16, 16>}, {pipeline_mode = #tpu.pipeline_mode<synchronous>, transform_indices = @transform_3, window_bounds = array<i64: 16, 4>}, {pipeline_mode = #tpu.pipeline_mode<synchronous>, transform_indices = @transform_4, window_bounds = array<i64: 1, 4>}, {pipeline_mode = #tpu.pipeline_mode<synchronous>, transform_indices = @transform_5, window_bounds = array<i64: 3, 12, 4>}, {pipeline_mode = #tpu.pipeline_mode<synchronous>, transform_indices = @transform_6, window_bounds = array<i64: 1, 4>}, {pipeline_mode = #tpu.pipeline_mode<synchronous>, transform_indices = @transform_7, window_bounds = array<i64: 4, 16>}, {pipeline_mode = #tpu.pipeline_mode<synchronous>, transform_indices = @transform_8, window_bounds = array<i64: 1, 16>}, {transform_indices = @transform_9, window_bounds = array<i64: 1, 8, 16, 16>}]} {
    %c0 = arith.constant 0 : index
    %c0_0 = arith.constant 0 : index
    %c0_1 = arith.constant 0 : index
    %c0_2 = arith.constant 0 : index
    %0 = vector.load %arg3[%c0, %c0_0, %c0_1, %c0_2] : memref<1x1x16x16xbf16, #tpu.memory_space<vmem>>, vector<1x1x16x16xbf16>
    %1 = vector.shape_cast %0 : vector<1x1x16x16xbf16> to vector<1x16x16xbf16>
    %c0_3 = arith.constant 0 : index
    %c0_4 = arith.constant 0 : index
    %c0_5 = arith.constant 0 : index
    %c0_6 = arith.constant 0 : index
    %2 = vector.load %arg2[%c0_3, %c0_4, %c0_5, %c0_6] : memref<1x8x16x16xbf16, #tpu.memory_space<vmem>>, vector<1x8x16x16xbf16>
    %3 = vector.shape_cast %2 : vector<1x8x16x16xbf16> to vector<8x16x16xbf16>
    %c0_7 = arith.constant 0 : index
    %c0_8 = arith.constant 0 : index
    %c0_9 = arith.constant 0 : index
    %c0_10 = arith.constant 0 : index
    %4 = vector.load %arg4[%c0_7, %c0_8, %c0_9, %c0_10] : memref<1x1x16x16xbf16, #tpu.memory_space<vmem>>, vector<1x1x16x16xbf16>
    %5 = vector.shape_cast %4 : vector<1x1x16x16xbf16> to vector<1x16x16xbf16>
    %6 = tpu.concatenate %1, %3, %5 in 0 : vector<1x16x16xbf16>, vector<8x16x16xbf16>, vector<1x16x16xbf16> -> vector<10x16x16xbf16>
    %7 = vector.shape_cast %6 : vector<10x16x16xbf16> to vector<160x16xbf16>
    %c0_11 = arith.constant 0 : index
    %c0_12 = arith.constant 0 : index
    %8 = vector.load %arg5[%c0_11, %c0_12] : memref<16x4xbf16, #tpu.memory_space<vmem>>, vector<16x4xbf16>
    %cst = arith.constant dense<0.000000e+00> : vector<160x4xf32>
    %9 = tpu.matmul %7, %8, %cst {dimension_numbers = #tpu.dot_dimension_numbers<[1], [0], [0], [1], [0, 0, 1, 1], [], []>} : vector<160x16xbf16>, vector<16x4xbf16>, vector<160x4xf32> -> vector<160x4xf32>
    %c0_13 = arith.constant 0 : index
    %c0_14 = arith.constant 0 : index
    %10 = vector.load %arg6[%c0_13, %c0_14] : memref<1x4xf32, #tpu.memory_space<vmem>>, vector<1x4xf32>
    %11 = vector.broadcast %10 : vector<1x4xf32> to vector<160x4xf32>
    %12 = arith.addf %9, %11 : vector<160x4xf32>
    %cst_15 = arith.constant 0.000000e+00 : f32
    %13 = vector.broadcast %cst_15 : f32 to vector<160x4xf32>
    %14 = arith.maximumf %12, %13 : vector<160x4xf32>
    %15 = vector.shape_cast %14 : vector<160x4xf32> to vector<10x16x4xf32>
    %16 = arith.truncf %15 : vector<10x16x4xf32> to vector<10x16x4xbf16>
    %cst_16 = arith.constant 0.000000e+00 : bf16
    %17 = vector.broadcast %cst_16 : bf16 to vector<10x1x4xbf16>
    %c0_17 = arith.constant 0 : index
    %c0_18 = arith.constant 0 : index
    %c0_19 = arith.constant 0 : index
    %18 = vector.load %arg12[%c0_17, %c0_18, %c0_19] : memref<10x18x4xbf16, #tpu.memory_space<vmem>>, vector<10x1x4xbf16>
    tpu.vector_store %arg12[%c0_17, %c0_18, %c0_19], %17 {strides = array<i32>} : memref<10x18x4xbf16, #tpu.memory_space<vmem>>, vector<10x1x4xbf16>,
    %c0_20 = arith.constant 0 : index
    %c17 = arith.constant 17 : index
    %c0_21 = arith.constant 0 : index
    %19 = vector.load %arg12[%c0_20, %c17, %c0_21] : memref<10x18x4xbf16, #tpu.memory_space<vmem>>, vector<10x1x4xbf16>
    tpu.vector_store %arg12[%c0_20, %c17, %c0_21], %17 {strides = array<i32>} : memref<10x18x4xbf16, #tpu.memory_space<vmem>>, vector<10x1x4xbf16>,
    %c0_22 = arith.constant 0 : index
    %c1 = arith.constant 1 : index
    %c0_23 = arith.constant 0 : index
    %20 = vector.load %arg12[%c0_22, %c1, %c0_23] : memref<10x18x4xbf16, #tpu.memory_space<vmem>>, vector<10x16x4xbf16>
    tpu.vector_store %arg12[%c0_22, %c1, %c0_23], %16 {strides = array<i32>} : memref<10x18x4xbf16, #tpu.memory_space<vmem>>, vector<10x16x4xbf16>,
    %cst_24 = arith.constant 0.000000e+00 : bf16
    %21 = vector.broadcast %cst_24 : bf16 to vector<1x16x4xbf16>
    %c0_i32 = arith.constant 0 : i32
    %22 = arith.cmpi eq, %arg1, %c0_i32 : i32
    %23 = arith.extui %22 : i1 to i32
    %c0_i32_25 = arith.constant 0 : i32
    %24 = arith.cmpi ne, %23, %c0_i32_25 : i32
    scf.if %24 {
      %c0_65 = arith.constant 0 : index
      %c1_66 = arith.constant 1 : index
      %c0_67 = arith.constant 0 : index
      %88 = vector.load %arg12[%c0_65, %c1_66, %c0_67] : memref<10x18x4xbf16, #tpu.memory_space<vmem>>, vector<1x16x4xbf16>
      tpu.vector_store %arg12[%c0_65, %c1_66, %c0_67], %21 {strides = array<i32>} : memref<10x18x4xbf16, #tpu.memory_space<vmem>>, vector<1x16x4xbf16>,
    } else {
    }
    %c1_i32 = arith.constant 1 : i32
    %25 = arith.cmpi eq, %arg1, %c1_i32 : i32
    %26 = arith.extui %25 : i1 to i32
    %c0_i32_26 = arith.constant 0 : i32
    %27 = arith.cmpi ne, %26, %c0_i32_26 : i32
    scf.if %27 {
      %c9 = arith.constant 9 : index
      %c1_65 = arith.constant 1 : index
      %c0_66 = arith.constant 0 : index
      %88 = vector.load %arg12[%c9, %c1_65, %c0_66] : memref<10x18x4xbf16, #tpu.memory_space<vmem>>, vector<1x16x4xbf16>
      tpu.vector_store %arg12[%c9, %c1_65, %c0_66], %21 {strides = array<i32>} : memref<10x18x4xbf16, #tpu.memory_space<vmem>>, vector<1x16x4xbf16>,
    } else {
    }
    %cst_27 = arith.constant 0.000000e+00 : f32
    %28 = vector.broadcast %cst_27 : f32 to vector<128x4xf32>
    %c0_28 = arith.constant 0 : index
    %c0_29 = arith.constant 0 : index
    %c0_30 = arith.constant 0 : index
    %29 = vector.load %arg12[%c0_28, %c0_29, %c0_30] : memref<10x18x4xbf16, #tpu.memory_space<vmem>>, vector<10x16x4xbf16>
    %c0_31 = arith.constant 0 : index
    %c0_32 = arith.constant 0 : index
    %c0_33 = arith.constant 0 : index
    %30 = vector.load %arg7[%c0_31, %c0_32, %c0_33] : memref<3x12x4xbf16, #tpu.memory_space<vmem>>, vector<1x12x4xbf16>
    %31 = vector.shape_cast %30 : vector<1x12x4xbf16> to vector<12x4xbf16>
    %32 = vector.extract_strided_slice %29 {offsets = [0, 0, 0], sizes = [8, 16, 4], strides = [1, 1, 1]} : vector<10x16x4xbf16> to vector<8x16x4xbf16>
    %33 = vector.shape_cast %32 : vector<8x16x4xbf16> to vector<128x4xbf16>
    %34 = vector.extract_strided_slice %29 {offsets = [1, 0, 0], sizes = [8, 16, 4], strides = [1, 1, 1]} : vector<10x16x4xbf16> to vector<8x16x4xbf16>
    %35 = vector.shape_cast %34 : vector<8x16x4xbf16> to vector<128x4xbf16>
    %36 = vector.extract_strided_slice %29 {offsets = [2, 0, 0], sizes = [8, 16, 4], strides = [1, 1, 1]} : vector<10x16x4xbf16> to vector<8x16x4xbf16>
    %37 = vector.shape_cast %36 : vector<8x16x4xbf16> to vector<128x4xbf16>
    %38 = tpu.concatenate %33, %35, %37 in 1 : vector<128x4xbf16>, vector<128x4xbf16>, vector<128x4xbf16> -> vector<128x12xbf16>
    %cst_34 = arith.constant dense<0.000000e+00> : vector<128x4xf32>
    %39 = tpu.matmul %38, %31, %cst_34 {dimension_numbers = #tpu.dot_dimension_numbers<[1], [0], [0], [1], [0, 0, 1, 1], [], []>} : vector<128x12xbf16>, vector<12x4xbf16>, vector<128x4xf32> -> vector<128x4xf32>
    %40 = arith.addf %28, %39 : vector<128x4xf32>
    %c0_35 = arith.constant 0 : index
    %c1_36 = arith.constant 1 : index
    %c0_37 = arith.constant 0 : index
    %41 = vector.load %arg12[%c0_35, %c1_36, %c0_37] : memref<10x18x4xbf16, #tpu.memory_space<vmem>>, vector<10x16x4xbf16>
    %c1_38 = arith.constant 1 : index
    %c0_39 = arith.constant 0 : index
    %c0_40 = arith.constant 0 : index
    %42 = vector.load %arg7[%c1_38, %c0_39, %c0_40] : memref<3x12x4xbf16, #tpu.memory_space<vmem>>, vector<1x12x4xbf16>
    %43 = vector.shape_cast %42 : vector<1x12x4xbf16> to vector<12x4xbf16>
    %44 = vector.extract_strided_slice %41 {offsets = [0, 0, 0], sizes = [8, 16, 4], strides = [1, 1, 1]} : vector<10x16x4xbf16> to vector<8x16x4xbf16>
    %45 = vector.shape_cast %44 : vector<8x16x4xbf16> to vector<128x4xbf16>
    %46 = vector.extract_strided_slice %41 {offsets = [1, 0, 0], sizes = [8, 16, 4], strides = [1, 1, 1]} : vector<10x16x4xbf16> to vector<8x16x4xbf16>
    %47 = vector.shape_cast %46 : vector<8x16x4xbf16> to vector<128x4xbf16>
    %48 = vector.extract_strided_slice %41 {offsets = [2, 0, 0], sizes = [8, 16, 4], strides = [1, 1, 1]} : vector<10x16x4xbf16> to vector<8x16x4xbf16>
    %49 = vector.shape_cast %48 : vector<8x16x4xbf16> to vector<128x4xbf16>
    %50 = tpu.concatenate %45, %47, %49 in 1 : vector<128x4xbf16>, vector<128x4xbf16>, vector<128x4xbf16> -> vector<128x12xbf16>
    %cst_41 = arith.constant dense<0.000000e+00> : vector<128x4xf32>
    %51 = tpu.matmul %50, %43, %cst_41 {dimension_numbers = #tpu.dot_dimension_numbers<[1], [0], [0], [1], [0, 0, 1, 1], [], []>} : vector<128x12xbf16>, vector<12x4xbf16>, vector<128x4xf32> -> vector<128x4xf32>
    %52 = arith.addf %40, %51 : vector<128x4xf32>
    %c0_42 = arith.constant 0 : index
    %c2 = arith.constant 2 : index
    %c0_43 = arith.constant 0 : index
    %53 = vector.load %arg12[%c0_42, %c2, %c0_43] : memref<10x18x4xbf16, #tpu.memory_space<vmem>>, vector<10x16x4xbf16>
    %c2_44 = arith.constant 2 : index
    %c0_45 = arith.constant 0 : index
    %c0_46 = arith.constant 0 : index
    %54 = vector.load %arg7[%c2_44, %c0_45, %c0_46] : memref<3x12x4xbf16, #tpu.memory_space<vmem>>, vector<1x12x4xbf16>
    %55 = vector.shape_cast %54 : vector<1x12x4xbf16> to vector<12x4xbf16>
    %56 = vector.extract_strided_slice %53 {offsets = [0, 0, 0], sizes = [8, 16, 4], strides = [1, 1, 1]} : vector<10x16x4xbf16> to vector<8x16x4xbf16>
    %57 = vector.shape_cast %56 : vector<8x16x4xbf16> to vector<128x4xbf16>
    %58 = vector.extract_strided_slice %53 {offsets = [1, 0, 0], sizes = [8, 16, 4], strides = [1, 1, 1]} : vector<10x16x4xbf16> to vector<8x16x4xbf16>
    %59 = vector.shape_cast %58 : vector<8x16x4xbf16> to vector<128x4xbf16>
    %60 = vector.extract_strided_slice %53 {offsets = [2, 0, 0], sizes = [8, 16, 4], strides = [1, 1, 1]} : vector<10x16x4xbf16> to vector<8x16x4xbf16>
    %61 = vector.shape_cast %60 : vector<8x16x4xbf16> to vector<128x4xbf16>
    %62 = tpu.concatenate %57, %59, %61 in 1 : vector<128x4xbf16>, vector<128x4xbf16>, vector<128x4xbf16> -> vector<128x12xbf16>
    %cst_47 = arith.constant dense<0.000000e+00> : vector<128x4xf32>
    %63 = tpu.matmul %62, %55, %cst_47 {dimension_numbers = #tpu.dot_dimension_numbers<[1], [0], [0], [1], [0, 0, 1, 1], [], []>} : vector<128x12xbf16>, vector<12x4xbf16>, vector<128x4xf32> -> vector<128x4xf32>
    %64 = arith.addf %52, %63 : vector<128x4xf32>
    %c0_48 = arith.constant 0 : index
    %c0_49 = arith.constant 0 : index
    %65 = vector.load %arg8[%c0_48, %c0_49] : memref<1x4xf32, #tpu.memory_space<vmem>>, vector<1x4xf32>
    %66 = vector.broadcast %65 : vector<1x4xf32> to vector<128x4xf32>
    %67 = arith.addf %64, %66 : vector<128x4xf32>
    %cst_50 = arith.constant 0.000000e+00 : f32
    %68 = vector.broadcast %cst_50 : f32 to vector<128x4xf32>
    %69 = arith.maximumf %67, %68 : vector<128x4xf32>
    %70 = arith.truncf %69 : vector<128x4xf32> to vector<128x4xbf16>
    %c0_51 = arith.constant 0 : index
    %c0_52 = arith.constant 0 : index
    %71 = vector.load %arg9[%c0_51, %c0_52] : memref<4x16xbf16, #tpu.memory_space<vmem>>, vector<4x16xbf16>
    %cst_53 = arith.constant dense<0.000000e+00> : vector<128x16xf32>
    %72 = tpu.matmul %70, %71, %cst_53 {dimension_numbers = #tpu.dot_dimension_numbers<[1], [0], [0], [1], [0, 0, 1, 1], [], []>} : vector<128x4xbf16>, vector<4x16xbf16>, vector<128x16xf32> -> vector<128x16xf32>
    %c0_54 = arith.constant 0 : index
    %c0_55 = arith.constant 0 : index
    %73 = vector.load %arg10[%c0_54, %c0_55] : memref<1x16xf32, #tpu.memory_space<vmem>>, vector<1x16xf32>
    %74 = vector.broadcast %73 : vector<1x16xf32> to vector<128x16xf32>
    %75 = arith.addf %72, %74 : vector<128x16xf32>
    %c0_56 = arith.constant 0 : index
    %c0_57 = arith.constant 0 : index
    %c0_58 = arith.constant 0 : index
    %c0_59 = arith.constant 0 : index
    %76 = vector.load %arg2[%c0_56, %c0_57, %c0_58, %c0_59] : memref<1x8x16x16xbf16, #tpu.memory_space<vmem>>, vector<1x8x16x16xbf16>
    %77 = vector.shape_cast %76 : vector<1x8x16x16xbf16> to vector<8x16x16xbf16>
    %78 = vector.shape_cast %77 : vector<8x16x16xbf16> to vector<128x16xbf16>
    %79 = arith.extf %78 : vector<128x16xbf16> to vector<128x16xf32>
    %80 = arith.addf %75, %79 : vector<128x16xf32>
    %cst_60 = arith.constant 0.000000e+00 : f32
    %81 = vector.broadcast %cst_60 : f32 to vector<128x16xf32>
    %82 = arith.maximumf %80, %81 : vector<128x16xf32>
    %83 = vector.shape_cast %82 : vector<128x16xf32> to vector<8x16x16xf32>
    %84 = arith.truncf %83 : vector<8x16x16xf32> to vector<8x16x16xbf16>
    %c0_61 = arith.constant 0 : index
    %c0_62 = arith.constant 0 : index
    %c0_63 = arith.constant 0 : index
    %c0_64 = arith.constant 0 : index
    %85 = vector.load %arg11[%c0_61, %c0_62, %c0_63, %c0_64] : memref<1x8x16x16xbf16, #tpu.memory_space<vmem>>, vector<1x8x16x16xbf16>
    %86 = vector.shape_cast %85 : vector<1x8x16x16xbf16> to vector<8x16x16xbf16>
    %87 = vector.shape_cast %84 : vector<8x16x16xbf16> to vector<1x8x16x16xbf16>
    tpu.vector_store %arg11[%c0_61, %c0_62, %c0_63, %c0_64], %87 {strides = array<i32>} : memref<1x8x16x16xbf16, #tpu.memory_space<vmem>>, vector<1x8x16x16xbf16>,
    return
  }
  func.func @transform_0(%arg0: i32, %arg1: i32) -> (i32, i32, i32, i32) {
    %c0_i32 = arith.constant 0 : i32
    %c0_i32_0 = arith.constant 0 : i32
    %c0_i32_1 = arith.constant 0 : i32
    return %arg0, %arg1, %c0_i32, %c0_i32_0 : i32, i32, i32, i32
  }
  func.func @transform_1(%arg0: i32, %arg1: i32) -> (i32, i32, i32, i32) {
    %c8_i32 = arith.constant 8 : i32
    %0 = arith.muli %arg1, %c8_i32 : i32
    %c1_i32 = arith.constant 1 : i32
    %1 = arith.subi %0, %c1_i32 : i32
    %c0_i32 = arith.constant 0 : i32
    %2 = arith.maxsi %1, %c0_i32 : i32
    %c0_i32_0 = arith.constant 0 : i32
    %c0_i32_1 = arith.constant 0 : i32
    %c0_i32_2 = arith.constant 0 : i32
    return %arg0, %2, %c0_i32_0, %c0_i32_1 : i32, i32, i32, i32
  }
  func.func @transform_2(%arg0: i32, %arg1: i32) -> (i32, i32, i32, i32) {
    %c1_i32 = arith.constant 1 : i32
    %0 = arith.addi %arg1, %c1_i32 : i32
    %c8_i32 = arith.constant 8 : i32
    %1 = arith.muli %0, %c8_i32 : i32
    %c15_i32 = arith.constant 15 : i32
    %2 = arith.minsi %1, %c15_i32 : i32
    %c0_i32 = arith.constant 0 : i32
    %c0_i32_0 = arith.constant 0 : i32
    %c0_i32_1 = arith.constant 0 : i32
    return %arg0, %2, %c0_i32, %c0_i32_0 : i32, i32, i32, i32
  }
  func.func @transform_3(%arg0: i32, %arg1: i32) -> (i32, i32) {
    %c0_i32 = arith.constant 0 : i32
    %c0_i32_0 = arith.constant 0 : i32
    %c0_i32_1 = arith.constant 0 : i32
    return %c0_i32, %c0_i32_0 : i32, i32
  }
  func.func @transform_4(%arg0: i32, %arg1: i32) -> (i32, i32) {
    %c0_i32 = arith.constant 0 : i32
    %c0_i32_0 = arith.constant 0 : i32
    %c0_i32_1 = arith.constant 0 : i32
    return %c0_i32, %c0_i32_0 : i32, i32
  }
  func.func @transform_5(%arg0: i32, %arg1: i32) -> (i32, i32, i32) {
    %c0_i32 = arith.constant 0 : i32
    %c0_i32_0 = arith.constant 0 : i32
    %c0_i32_1 = arith.constant 0 : i32
    %c0_i32_2 = arith.constant 0 : i32
    return %c0_i32, %c0_i32_0, %c0_i32_1 : i32, i32, i32
  }
  func.func @transform_6(%arg0: i32, %arg1: i32) -> (i32, i32) {
    %c0_i32 = arith.constant 0 : i32
    %c0_i32_0 = arith.constant 0 : i32
    %c0_i32_1 = arith.constant 0 : i32
    return %c0_i32, %c0_i32_0 : i32, i32
  }
  func.func @transform_7(%arg0: i32, %arg1: i32) -> (i32, i32) {
    %c0_i32 = arith.constant 0 : i32
    %c0_i32_0 = arith.constant 0 : i32
    %c0_i32_1 = arith.constant 0 : i32
    return %c0_i32, %c0_i32_0 : i32, i32
  }
  func.func @transform_8(%arg0: i32, %arg1: i32) -> (i32, i32) {
    %c0_i32 = arith.constant 0 : i32
    %c0_i32_0 = arith.constant 0 : i32
    %c0_i32_1 = arith.constant 0 : i32
    return %c0_i32, %c0_i32_0 : i32, i32
  }
  func.func @transform_9(%arg0: i32, %arg1: i32) -> (i32, i32, i32, i32) {
    %c0_i32 = arith.constant 0 : i32
    %c0_i32_0 = arith.constant 0 : i32
    %c0_i32_1 = arith.constant 0 : i32
    return %arg0, %arg1, %c0_i32, %c0_i32_0 : i32, i32, i32, i32
  }
}

</mosaic_0001>

<llo_original>
// kernel: tpu_custom_call.1
$region0: #{tpu_custom_call.1}
  #allocation0 [shape = 'u32[]', space=smem, size = 0x4, offset = 0x4, fixed_abs, tag = 'smem constant byte address 0x4 - core index']
  #allocation1 [shape = 'u32[72,128]{1,0:T(1,128)}', space=vmem, size = 0x9000, scoped, tag = 'internal scratch']
  #allocation2 [shape = 'bf16[10,18,4]{2,1,0:T(8,128)(2,1)}', space=vmem, size = 0xf000, scoped, tag = 'scratch operand']
  %s0 = inlined_call_operand.hbm [shape: bf16[2,16,16,16], index: 0, kind: input, shape index: {}]
  %s1 = inlined_call_operand.hbm [shape: bf16[2,16,16,16], index: 1, kind: input, shape index: {}]
  %s2 = inlined_call_operand.hbm [shape: bf16[2,16,16,16], index: 2, kind: input, shape index: {}]
  %s3 = inlined_call_operand.vmem [shape: bf16[16,4], index: 3, kind: input, shape index: {}]
  %s4 = inlined_call_operand.vmem [shape: f32[1,4], index: 4, kind: input, shape index: {}]
  %s5 = inlined_call_operand.vmem [shape: bf16[3,12,4], index: 5, kind: input, shape index: {}]
  %s6 = inlined_call_operand.vmem [shape: f32[1,4], index: 6, kind: input, shape index: {}]
  %s7 = inlined_call_operand.vmem [shape: bf16[4,16], index: 7, kind: input, shape index: {}]
  %s8 = inlined_call_operand.vmem [shape: f32[1,16], index: 8, kind: input, shape index: {}]
  %s9 = inlined_call_operand.hbm [shape: bf16[2,16,16,16], index: 9, kind: output, shape index: {}]
  %s10 = sld [smem:[#allocation0]]
  $region89: #{tpu_custom_call.1} parent=0
    _
  %s12 = ssub.s32 1, %s10
  %s13 = scalar_select 0, %s12, %s10
  $region1: #{tpu_custom_call.1} parent=0
    #allocation3 [shape = 'u8[65536]{0}', space=vmem, size = 0x10000, scoped, tag = 'input window, operand 0']
    #allocation4 [shape = 's32[2]{0}', space=sflag, size = 0x8, scoped, tag = 'scoped memory for tpu_custom_call.1']
    #allocation5 [shape = 's32[2]{0}', space=sflag, size = 0x8, scoped, tag = 'scoped memory for tpu_custom_call.1']
    #allocation6 [shape = 'u8[8192]{0}', space=vmem, size = 0x2000, scoped, tag = 'input window, operand 1']
    #allocation7 [shape = 's32[2]{0}', space=sflag, size = 0x8, scoped, tag = 'scoped memory for tpu_custom_call.1']
    #allocation8 [shape = 'u8[8192]{0}', space=vmem, size = 0x2000, scoped, tag = 'input window, operand 2']
    #allocation9 [shape = 'u8[65536]{0}', space=vmem, size = 0x10000, scoped, tag = 'output window, operand 0']
    %14 = vsyncpa [#allocation4], 0
    %s15 = scalar_lea.sflag [#allocation4], 1
    %16 = vsyncpa %s15, 0
    %17 = vsyncpa [#allocation7], 0
    %s18 = scalar_lea.sflag [#allocation7], 1
    %19 = vsyncpa %s18, 0
    %20 = vsyncpa [#allocation5], 0
    %s21 = scalar_lea.sflag [#allocation5], 1
    %22 = vsyncpa %s21, 0
    loop: start=0, step=1, limit=6
    $region2: #{tpu_custom_call.1} parent=1 // loop_pre_header
      _
    $region3: #{tpu_custom_call.1} parent=1 // loop_header
      %s24 = sphi 0, %s28
      %p25 = scmp.ge.s32.totalorder %s24, 6
      %s31 = sphi 0, %s43
      %s32 = sphi 0, %s39
      %s33 = sphi 0, %s31
      %s34 = sphi 0, %s32
      %s35 = sphi 0, %s33
      %s36 = sphi 0, %s34
      %s48 = sphi 0, %s50
      %s51 = sphi 0, %s48
      %s52 = sphi 0, %s51
      %s68 = sphi 0, %s52
      %s84 = sphi 0, %s86
      %s87 = sphi 0, %s84
      %s88 = sphi 0, %s87
      %s104 = sphi 0, %s88
      %s120 = sphi 0, %s122
      %s123 = sphi 0, %s120
      %s124 = sphi 0, %s123
      %s140 = sphi 0, %s124
      %s144 = sphi 0, %s144
      %s146 = sphi 0, %s144
      %s147 = sphi 0, %s146
      %s161 = sphi 0, %s147
      %s165 = sphi 0, %s165
      %s167 = sphi 0, %s165
      %s168 = sphi 0, %s167
      %s182 = sphi 0, %s168
      %s186 = sphi 0, %s186
      %s188 = sphi 0, %s186
      %s189 = sphi 0, %s188
      %s203 = sphi 0, %s189
      %s207 = sphi 0, %s207
      %s209 = sphi 0, %s207
      %s210 = sphi 0, %s209
      %s224 = sphi 0, %s210
      %s228 = sphi 0, %s228
      %s230 = sphi 0, %s228
      %s231 = sphi 0, %s230
      %s245 = sphi 0, %s231
      %s249 = sphi 0, %s249
      %s251 = sphi 0, %s249
      %s252 = sphi 0, %s251
      %s266 = sphi 0, %s252
      %s274 = sphi 0, %s276
      %s277 = sphi 0, %s274
      %s278 = sphi 0, %s277
      %s294 = sphi 0, %s278
    $region4: #{tpu_custom_call.1} parent=1 // loop_header_branch
      %27 = sbr.rel (%p25) target = $region8
    $region5: #{tpu_custom_call.1} parent=1 // loop_body
      %s29 = ssub.s32 %s24, 1
      %s30 = ssub.s32 %s24, 2
      %s37 = sadd.s32 1, %s32
      %p38 = scmp.ge.s32.totalorder %s37, 2
      %s39 = scalar_select %p38, 0, %s37
      %s40 = sadd.s32 1, %s31
      %s41 = scalar_select %p38, %s40, %s31
      %p42 = scmp.ge.s32.totalorder %s41, 2
      %s43 = scalar_select %p42, 0, %s41
      %s44 = ssub.s32 %s31, %s43
      %s45 = ssub.s32 %s32, %s39
      %s46 = sor.u32 %s44, %s45
      %p47 = scmp.eq.s32.totalorder %s46, 0
      %s49 = sadd.s32 %s48, 1
      %s50 = scalar_select %p47, %s48, %s49
      %p53 = pneg %p47
      %p54 = scmp.eq.s32.totalorder %s24, 3
      %p55 = por %p53, %p54
      %p56 = scmp.ne.s32.totalorder %s48, %s51
      %p57 = scmp.eq.s32.totalorder %s24, 0
      %p58 = por %p56, %p57
      %p59 = scmp.ne.s32.totalorder %s48, %s51
      %p60 = scmp.eq.s32.totalorder %s29, 3
      %p61 = por %p59, %p60
      %p62 = scmp.ne.s32.totalorder %s51, %s52
      %p63 = scmp.eq.s32.totalorder %s29, 0
      %p64 = por %p62, %p63
      %p65 = scmp.ne.s32.totalorder %s51, %s52
      %p66 = scmp.eq.s32.totalorder %s30, 3
      %p67 = por %p65, %p66
      %p69 = scmp.ne.s32.totalorder %s52, %s68
      %p70 = scmp.eq.s32.totalorder %s30, 0
      %p71 = por %p69, %p70
      %s72 = smul.u32 %s32, 8
      %s73 = ssub.s32 %s72, 1
      %p74 = scmp.gt.s32.totalorder %s73, 0
      %s75 = scalar_select %p74, %s73, 0
      %s76 = smul.u32 %s39, 8
      %s77 = ssub.s32 %s76, 1
      %p78 = scmp.gt.s32.totalorder %s77, 0
      %s79 = scalar_select %p78, %s77, 0
      %s80 = ssub.s32 %s31, %s43
      %s81 = ssub.s32 %s75, %s79
      %s82 = sor.u32 %s80, %s81
      %p83 = scmp.eq.s32.totalorder %s82, 0
      %s85 = sadd.s32 %s84, 1
      %s86 = scalar_select %p83, %s84, %s85
      %p89 = pneg %p83
      %p90 = scmp.eq.s32.totalorder %s24, 3
      %p91 = por %p89, %p90
      %p92 = scmp.ne.s32.totalorder %s84, %s87
      %p93 = scmp.eq.s32.totalorder %s24, 0
      %p94 = por %p92, %p93
      %p95 = scmp.ne.s32.totalorder %s84, %s87
      %p96 = scmp.eq.s32.totalorder %s29, 3
      %p97 = por %p95, %p96
      %p98 = scmp.ne.s32.totalorder %s87, %s88
      %p99 = scmp.eq.s32.totalorder %s29, 0
      %p100 = por %p98, %p99
      %p101 = scmp.ne.s32.totalorder %s87, %s88
      %p102 = scmp.eq.s32.totalorder %s30, 3
      %p103 = por %p101, %p102
      %p105 = scmp.ne.s32.totalorder %s88, %s104
      %p106 = scmp.eq.s32.totalorder %s30, 0
      %p107 = por %p105, %p106
      %s108 = sadd.s32 %s32, 1
      %s109 = smul.u32 %s108, 8
      %p110 = scmp.lt.s32.totalorder %s109, 15
      %s111 = scalar_select %p110, %s109, 15
      %s112 = sadd.s32 %s39, 1
      %s113 = smul.u32 %s112, 8
      %p114 = scmp.lt.s32.totalorder %s113, 15
      %s115 = scalar_select %p114, %s113, 15
      %s116 = ssub.s32 %s31, %s43
      %s117 = ssub.s32 %s111, %s115
      %s118 = sor.u32 %s116, %s117
      %p119 = scmp.eq.s32.totalorder %s118, 0
      %s121 = sadd.s32 %s120, 1
      %s122 = scalar_select %p119, %s120, %s121
      %p125 = pneg %p119
      %p126 = scmp.eq.s32.totalorder %s24, 3
      %p127 = por %p125, %p126
      %p128 = scmp.ne.s32.totalorder %s120, %s123
      %p129 = scmp.eq.s32.totalorder %s24, 0
      %p130 = por %p128, %p129
      %p131 = scmp.ne.s32.totalorder %s120, %s123
      %p132 = scmp.eq.s32.totalorder %s29, 3
      %p133 = por %p131, %p132
      %p134 = scmp.ne.s32.totalorder %s123, %s124
      %p135 = scmp.eq.s32.totalorder %s29, 0
      %p136 = por %p134, %p135
      %p137 = scmp.ne.s32.totalorder %s123, %s124
      %p138 = scmp.eq.s32.totalorder %s30, 3
      %p139 = por %p137, %p138
      %p141 = scmp.ne.s32.totalorder %s124, %s140
      %p142 = scmp.eq.s32.totalorder %s30, 0
      %p143 = por %p141, %p142
      %s145 = sadd.s32 %s144, 1
      %p148 = scmp.eq.s32.totalorder %s24, 3
      %p149 = scmp.ne.s32.totalorder %s144, %s146
      %p150 = scmp.eq.s32.totalorder %s24, 0
      %p151 = por %p149, %p150
      %p152 = scmp.ne.s32.totalorder %s144, %s146
      %p153 = scmp.eq.s32.totalorder %s29, 3
      %p154 = por %p152, %p153
      %p155 = scmp.ne.s32.totalorder %s146, %s147
      %p156 = scmp.eq.s32.totalorder %s29, 0
      %p157 = por %p155, %p156
      %p158 = scmp.ne.s32.totalorder %s146, %s147
      %p159 = scmp.eq.s32.totalorder %s30, 3
      %p160 = por %p158, %p159
      %p162 = scmp.ne.s32.totalorder %s147, %s161
      %p163 = scmp.eq.s32.totalorder %s30, 0
      %p164 = por %p162, %p163
      %s166 = sadd.s32 %s165, 1
      %p169 = scmp.eq.s32.totalorder %s24, 3
      %p170 = scmp.ne.s32.totalorder %s165, %s167
      %p171 = scmp.eq.s32.totalorder %s24, 0
      %p172 = por %p170, %p171
      %p173 = scmp.ne.s32.totalorder %s165, %s167
      %p174 = scmp.eq.s32.totalorder %s29, 3
      %p175 = por %p173, %p174
      %p176 = scmp.ne.s32.totalorder %s167, %s168
      %p177 = scmp.eq.s32.totalorder %s29, 0
      %p178 = por %p176, %p177
      %p179 = scmp.ne.s32.totalorder %s167, %s168
      %p180 = scmp.eq.s32.totalorder %s30, 3
      %p181 = por %p179, %p180
      %p183 = scmp.ne.s32.totalorder %s168, %s182
      %p184 = scmp.eq.s32.totalorder %s30, 0
      %p185 = por %p183, %p184
      %s187 = sadd.s32 %s186, 1
      %p190 = scmp.eq.s32.totalorder %s24, 3
      %p191 = scmp.ne.s32.totalorder %s186, %s188
      %p192 = scmp.eq.s32.totalorder %s24, 0
      %p193 = por %p191, %p192
      %p194 = scmp.ne.s32.totalorder %s186, %s188
      %p195 = scmp.eq.s32.totalorder %s29, 3
      %p196 = por %p194, %p195
      %p197 = scmp.ne.s32.totalorder %s188, %s189
      %p198 = scmp.eq.s32.totalorder %s29, 0
      %p199 = por %p197, %p198
      %p200 = scmp.ne.s32.totalorder %s188, %s189
      %p201 = scmp.eq.s32.totalorder %s30, 3
      %p202 = por %p200, %p201
      %p204 = scmp.ne.s32.totalorder %s189, %s203
      %p205 = scmp.eq.s32.totalorder %s30, 0
      %p206 = por %p204, %p205
      %s208 = sadd.s32 %s207, 1
      %p211 = scmp.eq.s32.totalorder %s24, 3
      %p212 = scmp.ne.s32.totalorder %s207, %s209
      %p213 = scmp.eq.s32.totalorder %s24, 0
      %p214 = por %p212, %p213
      %p215 = scmp.ne.s32.totalorder %s207, %s209
      %p216 = scmp.eq.s32.totalorder %s29, 3
      %p217 = por %p215, %p216
      %p218 = scmp.ne.s32.totalorder %s209, %s210
      %p219 = scmp.eq.s32.totalorder %s29, 0
      %p220 = por %p218, %p219
      %p221 = scmp.ne.s32.totalorder %s209, %s210
      %p222 = scmp.eq.s32.totalorder %s30, 3
      %p223 = por %p221, %p222
      %p225 = scmp.ne.s32.totalorder %s210, %s224
      %p226 = scmp.eq.s32.totalorder %s30, 0
      %p227 = por %p225, %p226
      %s229 = sadd.s32 %s228, 1
      %p232 = scmp.eq.s32.totalorder %s24, 3
      %p233 = scmp.ne.s32.totalorder %s228, %s230
      %p234 = scmp.eq.s32.totalorder %s24, 0
      %p235 = por %p233, %p234
      %p236 = scmp.ne.s32.totalorder %s228, %s230
      %p237 = scmp.eq.s32.totalorder %s29, 3
      %p238 = por %p236, %p237
      %p239 = scmp.ne.s32.totalorder %s230, %s231
      %p240 = scmp.eq.s32.totalorder %s29, 0
      %p241 = por %p239, %p240
      %p242 = scmp.ne.s32.totalorder %s230, %s231
      %p243 = scmp.eq.s32.totalorder %s30, 3
      %p244 = por %p242, %p243
      %p246 = scmp.ne.s32.totalorder %s231, %s245
      %p247 = scmp.eq.s32.totalorder %s30, 0
      %p248 = por %p246, %p247
      %s250 = sadd.s32 %s249, 1
      %p253 = scmp.eq.s32.totalorder %s24, 3
      %p254 = scmp.ne.s32.totalorder %s249, %s251
      %p255 = scmp.eq.s32.totalorder %s24, 0
      %p256 = por %p254, %p255
      %p257 = scmp.ne.s32.totalorder %s249, %s251
      %p258 = scmp.eq.s32.totalorder %s29, 3
      %p259 = por %p257, %p258
      %p260 = scmp.ne.s32.totalorder %s251, %s252
      %p261 = scmp.eq.s32.totalorder %s29, 0
      %p262 = por %p260, %p261
      %p263 = scmp.ne.s32.totalorder %s251, %s252
      %p264 = scmp.eq.s32.totalorder %s30, 3
      %p265 = por %p263, %p264
      %p267 = scmp.ne.s32.totalorder %s252, %s266
      %p268 = scmp.eq.s32.totalorder %s30, 0
      %p269 = por %p267, %p268
      %s270 = ssub.s32 %s31, %s43
      %s271 = ssub.s32 %s32, %s39
      %s272 = sor.u32 %s270, %s271
      %p273 = scmp.eq.s32.totalorder %s272, 0
      %s275 = sadd.s32 %s274, 1
      %s276 = scalar_select %p273, %s274, %s275
      %p279 = pneg %p273
      %p280 = scmp.eq.s32.totalorder %s24, 3
      %p281 = por %p279, %p280
      %p282 = scmp.ne.s32.totalorder %s274, %s277
      %p283 = scmp.eq.s32.totalorder %s24, 0
      %p284 = por %p282, %p283
      %p285 = scmp.ne.s32.totalorder %s274, %s277
      %p286 = scmp.eq.s32.totalorder %s29, 3
      %p287 = por %p285, %p286
      %p288 = scmp.ne.s32.totalorder %s277, %s278
      %p289 = scmp.eq.s32.totalorder %s29, 0
      %p290 = por %p288, %p289
      %p291 = scmp.ne.s32.totalorder %s277, %s278
      %p292 = scmp.eq.s32.totalorder %s30, 3
      %p293 = por %p291, %p292
      %p295 = scmp.ne.s32.totalorder %s278, %s294
      %p296 = scmp.eq.s32.totalorder %s30, 0
      %p297 = por %p295, %p296
      %p298 = scmp.le.s32.totalorder 1, %s24
      %p299 = scmp.lt.s32.totalorder %s24, 5
      %p300 = pnand %p298, %p299
      %p301 = pneg %p300
      // Predicated region
      $region9: #{tpu_custom_call.1} parent=5 // pred_check
        _
      $region10: #{tpu_custom_call.1} parent=5 // pred_check_branch
        %303 = sbr.rel (%p300) target = $region12
      $region11: #{tpu_custom_call.1} parent=5 // pred_region
        %s304 = ssub.s32 %s24, 1
        // Predicated region
        $region13: #{tpu_custom_call.1} parent=11 // pred_check
          %p305 = pneg %p157
        $region14: #{tpu_custom_call.1} parent=11 // pred_check_branch
          %307 = sbr.rel (%p305) target = $region16
        $region15: #{tpu_custom_call.1} parent=11 // pred_region
          _
        $region16: #{tpu_custom_call.1} parent=11 // pred_fallthru
          _
        // Predicated region
        $region17: #{tpu_custom_call.1} parent=11 // pred_check
          %p308 = pneg %p178
        $region18: #{tpu_custom_call.1} parent=11 // pred_check_branch
          %310 = sbr.rel (%p308) target = $region20
        $region19: #{tpu_custom_call.1} parent=11 // pred_region
          _
        $region20: #{tpu_custom_call.1} parent=11 // pred_fallthru
          _
        // Predicated region
        $region21: #{tpu_custom_call.1} parent=11 // pred_check
          %p311 = pneg %p199
        $region22: #{tpu_custom_call.1} parent=11 // pred_check_branch
          %313 = sbr.rel (%p311) target = $region24
        $region23: #{tpu_custom_call.1} parent=11 // pred_region
          _
        $region24: #{tpu_custom_call.1} parent=11 // pred_fallthru
          _
        // Predicated region
        $region25: #{tpu_custom_call.1} parent=11 // pred_check
          %p314 = pneg %p220
        $region26: #{tpu_custom_call.1} parent=11 // pred_check_branch
          %316 = sbr.rel (%p314) target = $region28
        $region27: #{tpu_custom_call.1} parent=11 // pred_region
          _
        $region28: #{tpu_custom_call.1} parent=11 // pred_fallthru
          _
        // Predicated region
        $region29: #{tpu_custom_call.1} parent=11 // pred_check
          %p317 = pneg %p241
        $region30: #{tpu_custom_call.1} parent=11 // pred_check_branch
          %319 = sbr.rel (%p317) target = $region32
        $region31: #{tpu_custom_call.1} parent=11 // pred_region
          _
        $region32: #{tpu_custom_call.1} parent=11 // pred_fallthru
          _
        // Predicated region
        $region33: #{tpu_custom_call.1} parent=11 // pred_check
          %p320 = pneg %p262
        $region34: #{tpu_custom_call.1} parent=11 // pred_check_branch
          %322 = sbr.rel (%p320) target = $region36
        $region35: #{tpu_custom_call.1} parent=11 // pred_region
          _
        $region36: #{tpu_custom_call.1} parent=11 // pred_fallthru
          _
      $region12: #{tpu_custom_call.1} parent=5 // pred_fallthru
        _
      %p323 = scmp.lt.s32.totalorder %s24, 4
      // Predicated region
      $region37: #{tpu_custom_call.1} parent=5 // pred_check
        %p324 = pneg %p323
      $region38: #{tpu_custom_call.1} parent=5 // pred_check_branch
        %326 = sbr.rel (%p324) target = $region40
      $region39: #{tpu_custom_call.1} parent=5 // pred_region
        // Predicated region
        $region41: #{tpu_custom_call.1} parent=39 // pred_check
          %p327 = pneg %p58
        $region42: #{tpu_custom_call.1} parent=39 // pred_check_branch
          %329 = sbr.rel (%p327) target = $region44
        $region43: #{tpu_custom_call.1} parent=39 // pred_region
          %s330 = sand.u32 %s48, 1
          %s331 = scalar_lea.sflag [#allocation4], %s330
          %s332 = sand.u32 %s48, 1
          %s333 = smul.addr %s332, 64
          %s334 = scalar_lea.vmem [#allocation3], %s333
          %s335 = smul.u32 8, %s32
          %337 = vsyncadd %s331, 0
          %s338 = smul.addr %s335, 2
          %s339 = smul.addr %s31, 32
          %s340 = sadd.s32 %s338, %s339
          %s341 = smul.addr %s340, 4
          %s342 = scalar_lea.hbm %s0, %s341
          %s343 = sshll.u32 %s342, 4
          %s344 = int_to_ptr.hbm [resolvable:$true] %s343
          %s345 = sshll.u32 %s334, 4
          %s346 = int_to_ptr.vmem [resolvable:$true] %s345
          %351 = dma.hbm_to_vmem [thread:$0]  %s344, 1024, %s346, %s331, 64, 64, 4
        $region44: #{tpu_custom_call.1} parent=39 // pred_fallthru
          _
        // Predicated region
        $region45: #{tpu_custom_call.1} parent=39 // pred_check
          %p352 = pneg %p94
        $region46: #{tpu_custom_call.1} parent=39 // pred_check_branch
          %354 = sbr.rel (%p352) target = $region48
        $region47: #{tpu_custom_call.1} parent=39 // pred_region
          %s355 = sand.u32 %s24, 1
          %s356 = scalar_lea.sflag [#allocation7], %s355
          %s357 = sand.u32 %s84, 1
          %s358 = smul.addr %s357, 8
          %s359 = scalar_lea.vmem [#allocation6], %s358
          %s360 = smul.u32 %s32, 8
          %s361 = ssub.s32 %s360, 1
          %p362 = scmp.gt.s32.totalorder %s361, 0
          %s363 = scalar_select %p362, %s361, 0
          %365 = vsyncadd %s356, 0
          %s366 = smul.addr %s363, 2
          %s367 = smul.addr %s31, 32
          %s368 = sadd.s32 %s366, %s367
          %s369 = smul.addr %s368, 4
          %s370 = scalar_lea.hbm %s1, %s369
          %s371 = sshll.u32 %s370, 4
          %s372 = int_to_ptr.hbm [resolvable:$true] %s371
          %s373 = sshll.u32 %s359, 4
          %s374 = int_to_ptr.vmem [resolvable:$true] %s373
          %379 = dma.hbm_to_vmem [thread:$0]  %s372, 128, %s374, %s356, 64, 64, 4
        $region48: #{tpu_custom_call.1} parent=39 // pred_fallthru
          _
        // Predicated region
        $region49: #{tpu_custom_call.1} parent=39 // pred_check
          %p380 = pneg %p130
        $region50: #{tpu_custom_call.1} parent=39 // pred_check_branch
          %382 = sbr.rel (%p380) target = $region52
        $region51: #{tpu_custom_call.1} parent=39 // pred_region
          %s383 = sand.u32 %s24, 1
          %s384 = scalar_lea.sflag [#allocation7], %s383
          %s385 = sand.u32 %s120, 1
          %s386 = smul.addr %s385, 8
          %s387 = scalar_lea.vmem [#allocation8], %s386
          %s388 = sadd.s32 %s32, 1
          %s389 = smul.u32 %s388, 8
          %p390 = scmp.lt.s32.totalorder %s389, 15
          %s391 = scalar_select %p390, %s389, 15
          %393 = vsyncadd %s384, 0
          %s394 = smul.addr %s391, 2
          %s395 = smul.addr %s31, 32
          %s396 = sadd.s32 %s394, %s395
          %s397 = smul.addr %s396, 4
          %s398 = scalar_lea.hbm %s2, %s397
          %s399 = sshll.u32 %s398, 4
          %s400 = int_to_ptr.hbm [resolvable:$true] %s399
          %s401 = sshll.u32 %s387, 4
          %s402 = int_to_ptr.vmem [resolvable:$true] %s401
          %407 = dma.hbm_to_vmem [thread:$0]  %s400, 128, %s402, %s384, 64, 64, 4
        $region52: #{tpu_custom_call.1} parent=39 // pred_fallthru
          _
      $region40: #{tpu_custom_call.1} parent=5 // pred_fallthru
        _
      %p408 = scmp.le.s32.totalorder 1, %s24
      %p409 = scmp.lt.s32.totalorder %s24, 5
      %p410 = pnand %p408, %p409
      %p411 = pneg %p410
      // Predicated region
      $region53: #{tpu_custom_call.1} parent=5 // pred_check
        _
      $region54: #{tpu_custom_call.1} parent=5 // pred_check_branch
        %413 = sbr.rel (%p410) target = $region56
      $region55: #{tpu_custom_call.1} parent=5 // pred_region
        %s414 = ssub.s32 %s24, 1
        %s415 = sand.u32 %s51, 1
        %s416 = scalar_lea.sflag [#allocation4], %s415
        %s417 = sand.u32 %s51, 1
        %s418 = smul.addr %s417, 64
        %s419 = scalar_lea.vmem [#allocation3], %s418
        // Predicated region
        $region57: #{tpu_custom_call.1} parent=55 // pred_check
          %p420 = pneg %p64
        $region58: #{tpu_custom_call.1} parent=55 // pred_check_branch
          %422 = sbr.rel (%p420) target = $region60
        $region59: #{tpu_custom_call.1} parent=55 // pred_region
          %424 = dma.done %s416, 1024
        $region60: #{tpu_custom_call.1} parent=55 // pred_fallthru
          _
        %s425 = sand.u32 %s29, 1
        %s426 = scalar_lea.sflag [#allocation7], %s425
        %s427 = sand.u32 %s87, 1
        %s428 = smul.addr %s427, 8
        %s429 = scalar_lea.vmem [#allocation6], %s428
        // Predicated region
        $region61: #{tpu_custom_call.1} parent=55 // pred_check
          %p430 = pneg %p100
        $region62: #{tpu_custom_call.1} parent=55 // pred_check_branch
          %432 = sbr.rel (%p430) target = $region64
        $region63: #{tpu_custom_call.1} parent=55 // pred_region
          %434 = dma.done %s426, 128
        $region64: #{tpu_custom_call.1} parent=55 // pred_fallthru
          _
        %s435 = sand.u32 %s29, 1
        %s436 = scalar_lea.sflag [#allocation7], %s435
        %s437 = sand.u32 %s123, 1
        %s438 = smul.addr %s437, 8
        %s439 = scalar_lea.vmem [#allocation8], %s438
        // Predicated region
        $region65: #{tpu_custom_call.1} parent=55 // pred_check
          %p440 = pneg %p136
        $region66: #{tpu_custom_call.1} parent=55 // pred_check_branch
          %442 = sbr.rel (%p440) target = $region68
        $region67: #{tpu_custom_call.1} parent=55 // pred_region
          %444 = dma.done %s436, 128
        $region68: #{tpu_custom_call.1} parent=55 // pred_fallthru
          _
        %s445 = sand.u32 %s51, 1
        %s446 = scalar_lea.sflag [#allocation4], %s445
        %s447 = sand.u32 %s51, 1
        %s448 = smul.addr %s447, 64
        %s449 = scalar_lea.vmem [#allocation3], %s448
        %p450 = pneg %p64
        %p451 = pneg %p61
        %s452 = sand.u32 %s29, 1
        %s453 = scalar_lea.sflag [#allocation7], %s452
        %s454 = sand.u32 %s87, 1
        %s455 = smul.addr %s454, 8
        %s456 = scalar_lea.vmem [#allocation6], %s455
        %p457 = pneg %p100
        %p458 = pneg %p97
        %s459 = sand.u32 %s29, 1
        %s460 = scalar_lea.sflag [#allocation7], %s459
        %s461 = sand.u32 %s123, 1
        %s462 = smul.addr %s461, 8
        %s463 = scalar_lea.vmem [#allocation8], %s462
        %p464 = pneg %p136
        %p465 = pneg %p133
        %p466 = pneg %p157
        %p467 = pneg %p154
        %p468 = pneg %p178
        %p469 = pneg %p175
        %p470 = pneg %p199
        %p471 = pneg %p196
        %p472 = pneg %p220
        %p473 = pneg %p217
        %p474 = pneg %p241
        %p475 = pneg %p238
        %p476 = pneg %p262
        %p477 = pneg %p259
        %p478 = pneg %p290
        %p479 = pneg %p287
        %s480 = sand.u32 %s277, 1
        %s481 = scalar_lea.sflag [#allocation5], %s480
        %s482 = sand.u32 %s277, 1
        %s483 = smul.addr %s482, 64
        %s484 = scalar_lea.vmem [#allocation9], %s483
        %s485 = smul.u32 8, %s34
        %s486 = smul.u32 %s34, 8
        %s487 = ssub.s32 %s486, 1
        %p488 = scmp.gt.s32.totalorder %s487, 0
        %s489 = scalar_select %p488, %s487, 0
        %s490 = sadd.s32 %s34, 1
        %s491 = smul.u32 %s490, 8
        %p492 = scmp.lt.s32.totalorder %s491, 15
        %s493 = scalar_select %p492, %s491, 15
        %s494 = smul.u32 8, %s34
        %v496 = vld [vmem:[%s429] sm:$0xf]
        %v497 = vld [vmem:[%s429 + $0x4] sm:$0xf]
        %v498 = vld [vmem:[%s419] sm:$0xf]
        %v499 = vld [vmem:[%s419 + $0x4] sm:$0xf]
        %v500 = vld [vmem:[%s419 + $0x8] sm:$0xf]
        %v501 = vld [vmem:[%s419 + $0xc] sm:$0xf]
        %v502 = vld [vmem:[%s419 + $0x10] sm:$0xf]
        %v503 = vld [vmem:[%s419 + $0x14] sm:$0xf]
        %v504 = vld [vmem:[%s419 + $0x18] sm:$0xf]
        %v505 = vld [vmem:[%s419 + $0x1c] sm:$0xf]
        %v506 = vld [vmem:[%s419 + $0x20] sm:$0xf]
        %v507 = vld [vmem:[%s419 + $0x24] sm:$0xf]
        %v508 = vld [vmem:[%s419 + $0x28] sm:$0xf]
        %v509 = vld [vmem:[%s419 + $0x2c] sm:$0xf]
        %v510 = vld [vmem:[%s419 + $0x30] sm:$0xf]
        %v511 = vld [vmem:[%s419 + $0x34] sm:$0xf]
        %v512 = vld [vmem:[%s419 + $0x38] sm:$0xf]
        %v513 = vld [vmem:[%s419 + $0x3c] sm:$0xf]
        %v514 = vld [vmem:[%s439] sm:$0xf]
        %v515 = vld [vmem:[%s439 + $0x4] sm:$0xf]
        %v516 = vld [vmem:[%s3] sm:$0xf]
        %v517 = vld [vmem:[%s3 + $0x4] sm:$0xf]
        %v518 = vld [vmem:[%s4] sm:$0x1]
        %v520 = vperm.slane %v518, 0
        %v542 = vunpack.c.l.b16 %v496
        %v543 = vunpack.c.l.b16 %v497
        %v544 = vunpack.c.l.b16 %v498
        %v545 = vunpack.c.l.b16 %v499
        %v546 = vunpack.c.l.b16 %v500
        %v547 = vunpack.c.l.b16 %v501
        %v548 = vunpack.c.l.b16 %v502
        %v549 = vunpack.c.l.b16 %v503
        %v550 = vunpack.c.l.b16 %v504
        %v551 = vunpack.c.l.b16 %v505
        %v552 = vunpack.c.l.b16 %v506
        %v553 = vunpack.c.l.b16 %v507
        %v554 = vunpack.c.l.b16 %v508
        %v555 = vunpack.c.l.b16 %v509
        %v556 = vunpack.c.l.b16 %v510
        %v557 = vunpack.c.l.b16 %v511
        %v558 = vunpack.c.l.b16 %v512
        %v559 = vunpack.c.l.b16 %v513
        %v560 = vunpack.c.l.b16 %v514
        %v561 = vunpack.c.l.b16 %v515
        %v562 = vpack.c.b16 %v543, %v542
        %v563 = vpack.c.b16 %v545, %v544
        %v564 = vpack.c.b16 %v547, %v546
        %v565 = vpack.c.b16 %v549, %v548
        %v566 = vpack.c.b16 %v551, %v550
        %v567 = vpack.c.b16 %v553, %v552
        %v568 = vpack.c.b16 %v555, %v554
        %v569 = vpack.c.b16 %v557, %v556
        %v570 = vpack.c.b16 %v559, %v558
        %v571 = vpack.c.b16 %v561, %v560
        %v574 = vunpack.c.l.b16 %v516
        %v575 = vunpack.c.l.b16 %v517
        %v576 = vpack.c.b16 %v575, %v574
        %vm578 = vcmask 130048
        %v580 = vsel %vm578, %v562, 0
        %v583 = vsel %vm578, %v563, 0
        %v586 = vsel %vm578, %v564, 0
        %v589 = vsel %vm578, %v565, 0
        %v592 = vsel %vm578, %v566, 0
        %v595 = vsel %vm578, %v567, 0
        %v598 = vsel %vm578, %v568, 0
        %v601 = vsel %vm578, %v569, 0
        %v604 = vsel %vm578, %v570, 0
        %v607 = vsel %vm578, %v571, 0
        %609 = vmatpush.bf16.msra.mxu0 0
        %610 = vmatpush.bf16.msra.mxu0 0
        %611 = vmatpush.bf16.msra.mxu0 0
        %612 = vmatpush.bf16.msra.mxu0 0
        %613 = vmatpush.bf16.msra.mxu0 0
        %614 = vmatpush.bf16.msra.mxu0 0
        %615 = vmatpush.bf16.msra.mxu0 0
        %616 = vmatpush.bf16.msra.mxu0 %v576
        %617 = vmatmul.bf16.gmra.mxu0 %v580
        %v618 = vpop.f32.mrf.mxu0
        %v619 = vadd.f32 %v520, %v618
        %v620 = vpop.f32.mrf.mxu0
        %v621 = vadd.f32 %v520, %v620
        %622 = vmatmul.bf16.gmra.mxu0 %v583
        %v623 = vpop.f32.mrf.mxu0
        %v624 = vadd.f32 %v520, %v623
        %v625 = vpop.f32.mrf.mxu0
        %v626 = vadd.f32 %v520, %v625
        %627 = vmatmul.bf16.gmra.mxu0 %v586
        %v628 = vpop.f32.mrf.mxu0
        %v629 = vadd.f32 %v520, %v628
        %v630 = vpop.f32.mrf.mxu0
        %v631 = vadd.f32 %v520, %v630
        %632 = vmatmul.bf16.gmra.mxu0 %v589
        %v633 = vpop.f32.mrf.mxu0
        %v634 = vadd.f32 %v520, %v633
        %v635 = vpop.f32.mrf.mxu0
        %v636 = vadd.f32 %v520, %v635
        %637 = vmatmul.bf16.gmra.mxu0 %v592
        %v638 = vpop.f32.mrf.mxu0
        %v639 = vadd.f32 %v520, %v638
        %v640 = vpop.f32.mrf.mxu0
        %v641 = vadd.f32 %v520, %v640
        %642 = vmatmul.bf16.gmra.mxu0 %v595
        %v643 = vpop.f32.mrf.mxu0
        %v644 = vadd.f32 %v520, %v643
        %v645 = vpop.f32.mrf.mxu0
        %v646 = vadd.f32 %v520, %v645
        %647 = vmatmul.bf16.gmra.mxu0 %v598
        %v648 = vpop.f32.mrf.mxu0
        %v649 = vadd.f32 %v520, %v648
        %v650 = vpop.f32.mrf.mxu0
        %v651 = vadd.f32 %v520, %v650
        %652 = vmatmul.bf16.gmra.mxu0 %v601
        %v653 = vpop.f32.mrf.mxu0
        %v654 = vadd.f32 %v520, %v653
        %v655 = vpop.f32.mrf.mxu0
        %v656 = vadd.f32 %v520, %v655
        %657 = vmatmul.bf16.gmra.mxu0 %v604
        %v658 = vpop.f32.mrf.mxu0
        %v659 = vadd.f32 %v520, %v658
        %v660 = vpop.f32.mrf.mxu0
        %v661 = vadd.f32 %v520, %v660
        %662 = vmatmul.bf16.gmra.mxu0 %v607
        %v663 = vpop.f32.mrf.mxu0
        %v664 = vadd.f32 %v520, %v663
        %v665 = vpop.f32.mrf.mxu0
        %v666 = vadd.f32 %v520, %v665
        %667 = vdwg.mxu0
        %v668 = vmax.f32 %v619, 0.0
        %v669 = vmax.f32 %v621, 0.0
        %v670 = vmax.f32 %v624, 0.0
        %v671 = vmax.f32 %v626, 0.0
        %v672 = vmax.f32 %v629, 0.0
        %v673 = vmax.f32 %v631, 0.0
        %v674 = vmax.f32 %v634, 0.0
        %v675 = vmax.f32 %v636, 0.0
        %v676 = vmax.f32 %v639, 0.0
        %v677 = vmax.f32 %v641, 0.0
        %v678 = vmax.f32 %v644, 0.0
        %v679 = vmax.f32 %v646, 0.0
        %v680 = vmax.f32 %v649, 0.0
        %v681 = vmax.f32 %v651, 0.0
        %v682 = vmax.f32 %v654, 0.0
        %v683 = vmax.f32 %v656, 0.0
        %v684 = vmax.f32 %v659, 0.0
        %v685 = vmax.f32 %v661, 0.0
        %v686 = vmax.f32 %v664, 0.0
        %v687 = vmax.f32 %v666, 0.0
        %v688 = vpack.c.bf16 %v668, %v668
        %v689 = vpack.c.bf16 %v669, %v669
        %v690 = vpack.c.bf16 %v670, %v670
        %v691 = vpack.c.bf16 %v671, %v671
        %v692 = vpack.c.bf16 %v672, %v672
        %v693 = vpack.c.bf16 %v673, %v673
        %v694 = vpack.c.bf16 %v674, %v674
        %v695 = vpack.c.bf16 %v675, %v675
        %v696 = vpack.c.bf16 %v676, %v676
        %v697 = vpack.c.bf16 %v677, %v677
        %v698 = vpack.c.bf16 %v678, %v678
        %v699 = vpack.c.bf16 %v679, %v679
        %v700 = vpack.c.bf16 %v680, %v680
        %v701 = vpack.c.bf16 %v681, %v681
        %v702 = vpack.c.bf16 %v682, %v682
        %v703 = vpack.c.bf16 %v683, %v683
        %v704 = vpack.c.bf16 %v684, %v684
        %v705 = vpack.c.bf16 %v685, %v685
        %v706 = vpack.c.bf16 %v686, %v686
        %v707 = vpack.c.bf16 %v687, %v687
        %vm708 = vcmask 24576
        %vm709 = vsmask.f32 256
        %vm710 = vmand %vm708, %vm709
        %v711 = vld [vmem:[#allocation2] sm:$0x1]
        %v712 = vsel %vm710, 0, %v711
        %713 = vst [vmem:[#allocation2] sm:$0x1] %v712
        %v714 = vld [vmem:[#allocation2 + $0xc] sm:$0x1]
        %v715 = vsel %vm710, 0, %v714
        %716 = vst [vmem:[#allocation2 + $0xc] sm:$0x1] %v715
        %v717 = vld [vmem:[#allocation2 + $0x18] sm:$0x1]
        %v718 = vsel %vm710, 0, %v717
        %719 = vst [vmem:[#allocation2 + $0x18] sm:$0x1] %v718
        %v720 = vld [vmem:[#allocation2 + $0x24] sm:$0x1]
        %v721 = vsel %vm710, 0, %v720
        %722 = vst [vmem:[#allocation2 + $0x24] sm:$0x1] %v721
        %v723 = vld [vmem:[#allocation2 + $0x30] sm:$0x1]
        %v724 = vsel %vm710, 0, %v723
        %725 = vst [vmem:[#allocation2 + $0x30] sm:$0x1] %v724
        %v726 = vld [vmem:[#allocation2 + $0x3c] sm:$0x1]
        %v727 = vsel %vm710, 0, %v726
        %728 = vst [vmem:[#allocation2 + $0x3c] sm:$0x1] %v727
        %v729 = vld [vmem:[#allocation2 + $0x48] sm:$0x1]
        %v730 = vsel %vm710, 0, %v729
        %731 = vst [vmem:[#allocation2 + $0x48] sm:$0x1] %v730
        %v732 = vld [vmem:[#allocation2 + $0x54] sm:$0x1]
        %v733 = vsel %vm710, 0, %v732
        %734 = vst [vmem:[#allocation2 + $0x54] sm:$0x1] %v733
        %v735 = vld [vmem:[#allocation2 + $0x60] sm:$0x1]
        %v736 = vsel %vm710, 0, %v735
        %737 = vst [vmem:[#allocation2 + $0x60] sm:$0x1] %v736
        %v738 = vld [vmem:[#allocation2 + $0x6c] sm:$0x1]
        %v739 = vsel %vm710, 0, %v738
        %740 = vst [vmem:[#allocation2 + $0x6c] sm:$0x1] %v739
        %vm741 = vsmask.f32 7938
        %vm742 = vmand %vm708, %vm741
        %v743 = vld [vmem:[#allocation2 + $0x8] sm:$0x1]
        %v744 = vsel %vm742, 0, %v743
        %745 = vst [vmem:[#allocation2 + $0x8] sm:$0x1] %v744
        %v746 = vld [vmem:[#allocation2 + $0x14] sm:$0x1]
        %v747 = vsel %vm742, 0, %v746
        %748 = vst [vmem:[#allocation2 + $0x14] sm:$0x1] %v747
        %v749 = vld [vmem:[#allocation2 + $0x20] sm:$0x1]
        %v750 = vsel %vm742, 0, %v749
        %751 = vst [vmem:[#allocation2 + $0x20] sm:$0x1] %v750
        %v752 = vld [vmem:[#allocation2 + $0x2c] sm:$0x1]
        %v753 = vsel %vm742, 0, %v752
        %754 = vst [vmem:[#allocation2 + $0x2c] sm:$0x1] %v753
        %v755 = vld [vmem:[#allocation2 + $0x38] sm:$0x1]
        %v756 = vsel %vm742, 0, %v755
        %757 = vst [vmem:[#allocation2 + $0x38] sm:$0x1] %v756
        %v758 = vld [vmem:[#allocation2 + $0x44] sm:$0x1]
        %v759 = vsel %vm742, 0, %v758
        %760 = vst [vmem:[#allocation2 + $0x44] sm:$0x1] %v759
        %v761 = vld [vmem:[#allocation2 + $0x50] sm:$0x1]
        %v762 = vsel %vm742, 0, %v761
        %763 = vst [vmem:[#allocation2 + $0x50] sm:$0x1] %v762
        %v764 = vld [vmem:[#allocation2 + $0x5c] sm:$0x1]
        %v765 = vsel %vm742, 0, %v764
        %766 = vst [vmem:[#allocation2 + $0x5c] sm:$0x1] %v765
        %v767 = vld [vmem:[#allocation2 + $0x68] sm:$0x1]
        %v768 = vsel %vm742, 0, %v767
        %769 = vst [vmem:[#allocation2 + $0x68] sm:$0x1] %v768
        %v770 = vld [vmem:[#allocation2 + $0x74] sm:$0x1]
        %v771 = vsel %vm742, 0, %v770
        %772 = vst [vmem:[#allocation2 + $0x74] sm:$0x1] %v771
        %vm773 = vsmask.f32 4368
        %vm774 = vmor %vm709, %vm773
        %v776 = vshrl.u32 %v688, 16
        %v778 = vrot.slane %v776, 7
        %v779 = vshll.u32 %v688, 16
        %v781 = vor.u32 %v778, %v779
        %v782 = vrot.slane %v778, 4
        %v784 = vshrl.u32 %v689, 16
        %v786 = vrot.slane %v784, 7
        %v787 = vshll.u32 %v689, 16
        %v789 = vor.u32 %v786, %v787
        %v790 = vsel %vm774, %v782, %v789
        %v791 = vrot.slane %v786, 4
        %v793 = vshrl.u32 %v690, 16
        %v795 = vrot.slane %v793, 7
        %v796 = vshll.u32 %v690, 16
        %v798 = vor.u32 %v795, %v796
        %v799 = vrot.slane %v795, 4
        %v801 = vshrl.u32 %v691, 16
        %v803 = vrot.slane %v801, 7
        %v804 = vshll.u32 %v691, 16
        %v806 = vor.u32 %v803, %v804
        %v807 = vsel %vm774, %v799, %v806
        %v808 = vrot.slane %v803, 4
        %v810 = vshrl.u32 %v692, 16
        %v812 = vrot.slane %v810, 7
        %v813 = vshll.u32 %v692, 16
        %v815 = vor.u32 %v812, %v813
        %v816 = vrot.slane %v812, 4
        %v818 = vshrl.u32 %v693, 16
        %v820 = vrot.slane %v818, 7
        %v821 = vshll.u32 %v693, 16
        %v823 = vor.u32 %v820, %v821
        %v824 = vsel %vm774, %v816, %v823
        %v825 = vrot.slane %v820, 4
        %v827 = vshrl.u32 %v694, 16
        %v829 = vrot.slane %v827, 7
        %v830 = vshll.u32 %v694, 16
        %v832 = vor.u32 %v829, %v830
        %v833 = vrot.slane %v829, 4
        %v835 = vshrl.u32 %v695, 16
        %v837 = vrot.slane %v835, 7
        %v838 = vshll.u32 %v695, 16
        %v840 = vor.u32 %v837, %v838
        %v841 = vsel %vm774, %v833, %v840
        %v842 = vrot.slane %v837, 4
        %v844 = vshrl.u32 %v696, 16
        %v846 = vrot.slane %v844, 7
        %v847 = vshll.u32 %v696, 16
        %v849 = vor.u32 %v846, %v847
        %v850 = vrot.slane %v846, 4
        %v852 = vshrl.u32 %v697, 16
        %v854 = vrot.slane %v852, 7
        %v855 = vshll.u32 %v697, 16
        %v857 = vor.u32 %v854, %v855
        %v858 = vsel %vm774, %v850, %v857
        %v859 = vrot.slane %v854, 4
        %v861 = vshrl.u32 %v698, 16
        %v863 = vrot.slane %v861, 7
        %v864 = vshll.u32 %v698, 16
        %v866 = vor.u32 %v863, %v864
        %v867 = vrot.slane %v863, 4
        %v869 = vshrl.u32 %v699, 16
        %v871 = vrot.slane %v869, 7
        %v872 = vshll.u32 %v699, 16
        %v874 = vor.u32 %v871, %v872
        %v875 = vsel %vm774, %v867, %v874
        %v876 = vrot.slane %v871, 4
        %v878 = vshrl.u32 %v700, 16
        %v880 = vrot.slane %v878, 7
        %v881 = vshll.u32 %v700, 16
        %v883 = vor.u32 %v880, %v881
        %v884 = vrot.slane %v880, 4
        %v886 = vshrl.u32 %v701, 16
        %v888 = vrot.slane %v886, 7
        %v889 = vshll.u32 %v701, 16
        %v891 = vor.u32 %v888, %v889
        %v892 = vsel %vm774, %v884, %v891
        %v893 = vrot.slane %v888, 4
        %v895 = vshrl.u32 %v702, 16
        %v897 = vrot.slane %v895, 7
        %v898 = vshll.u32 %v702, 16
        %v900 = vor.u32 %v897, %v898
        %v901 = vrot.slane %v897, 4
        %v903 = vshrl.u32 %v703, 16
        %v905 = vrot.slane %v903, 7
        %v906 = vshll.u32 %v703, 16
        %v908 = vor.u32 %v905, %v906
        %v909 = vsel %vm774, %v901, %v908
        %v910 = vrot.slane %v905, 4
        %v912 = vshrl.u32 %v704, 16
        %v914 = vrot.slane %v912, 7
        %v915 = vshll.u32 %v704, 16
        %v917 = vor.u32 %v914, %v915
        %v918 = vrot.slane %v914, 4
        %v920 = vshrl.u32 %v705, 16
        %v922 = vrot.slane %v920, 7
        %v923 = vshll.u32 %v705, 16
        %v925 = vor.u32 %v922, %v923
        %v926 = vsel %vm774, %v918, %v925
        %v927 = vrot.slane %v922, 4
        %v929 = vshrl.u32 %v706, 16
        %v931 = vrot.slane %v929, 7
        %v932 = vshll.u32 %v706, 16
        %v934 = vor.u32 %v931, %v932
        %v935 = vrot.slane %v931, 4
        %v937 = vshrl.u32 %v707, 16
        %v939 = vrot.slane %v937, 7
        %v940 = vshll.u32 %v707, 16
        %v942 = vor.u32 %v939, %v940
        %v943 = vsel %vm774, %v935, %v942
        %v944 = vrot.slane %v939, 4
        %vm975 = vcmask 27648
        %vm976 = vmand %vm975, %vm741
        %v977 = vld [vmem:[#allocation2] sm:$0xf]
        %v978 = vsel %vm976, %v781, %v977
        %979 = vst [vmem:[#allocation2] sm:$0xf] %v978
        %vm980 = vcmask 27648
        %981 = vst.msk [vmem:[#allocation2 + $0x4] sm:$0xf] %vm980, %v790
        %v982 = vld [vmem:[#allocation2 + $0x8] sm:$0x1]
        %v983 = vsel %vm710, %v791, %v982
        %984 = vst [vmem:[#allocation2 + $0x8] sm:$0x1] %v983
        %v985 = vld [vmem:[#allocation2 + $0xc] sm:$0xf]
        %v986 = vsel %vm976, %v798, %v985
        %987 = vst [vmem:[#allocation2 + $0xc] sm:$0xf] %v986
        %988 = vst.msk [vmem:[#allocation2 + $0x10] sm:$0xf] %vm980, %v807
        %v989 = vld [vmem:[#allocation2 + $0x14] sm:$0x1]
        %v990 = vsel %vm710, %v808, %v989
        %991 = vst [vmem:[#allocation2 + $0x14] sm:$0x1] %v990
        %v992 = vld [vmem:[#allocation2 + $0x18] sm:$0xf]
        %v993 = vsel %vm976, %v815, %v992
        %994 = vst [vmem:[#allocation2 + $0x18] sm:$0xf] %v993
        %995 = vst.msk [vmem:[#allocation2 + $0x1c] sm:$0xf] %vm980, %v824
        %v996 = vld [vmem:[#allocation2 + $0x20] sm:$0x1]
        %v997 = vsel %vm710, %v825, %v996
        %998 = vst [vmem:[#allocation2 + $0x20] sm:$0x1] %v997
        %v999 = vld [vmem:[#allocation2 + $0x24] sm:$0xf]
        %v1000 = vsel %vm976, %v832, %v999
        %1001 = vst [vmem:[#allocation2 + $0x24] sm:$0xf] %v1000
        %1002 = vst.msk [vmem:[#allocation2 + $0x28] sm:$0xf] %vm980, %v841
        %v1003 = vld [vmem:[#allocation2 + $0x2c] sm:$0x1]
        %v1004 = vsel %vm710, %v842, %v1003
        %1005 = vst [vmem:[#allocation2 + $0x2c] sm:$0x1] %v1004
        %v1006 = vld [vmem:[#allocation2 + $0x30] sm:$0xf]
        %v1007 = vsel %vm976, %v849, %v1006
        %1008 = vst [vmem:[#allocation2 + $0x30] sm:$0xf] %v1007
        %1009 = vst.msk [vmem:[#allocation2 + $0x34] sm:$0xf] %vm980, %v858
        %v1010 = vld [vmem:[#allocation2 + $0x38] sm:$0x1]
        %v1011 = vsel %vm710, %v859, %v1010
        %1012 = vst [vmem:[#allocation2 + $0x38] sm:$0x1] %v1011
        %v1013 = vld [vmem:[#allocation2 + $0x3c] sm:$0xf]
        %v1014 = vsel %vm976, %v866, %v1013
        %1015 = vst [vmem:[#allocation2 + $0x3c] sm:$0xf] %v1014
        %1016 = vst.msk [vmem:[#allocation2 + $0x40] sm:$0xf] %vm980, %v875
        %v1017 = vld [vmem:[#allocation2 + $0x44] sm:$0x1]
        %v1018 = vsel %vm710, %v876, %v1017
        %1019 = vst [vmem:[#allocation2 + $0x44] sm:$0x1] %v1018
        %v1020 = vld [vmem:[#allocation2 + $0x48] sm:$0xf]
        %v1021 = vsel %vm976, %v883, %v1020
        %1022 = vst [vmem:[#allocation2 + $0x48] sm:$0xf] %v1021
        %1023 = vst.msk [vmem:[#allocation2 + $0x4c] sm:$0xf] %vm980, %v892
        %v1024 = vld [vmem:[#allocation2 + $0x50] sm:$0x1]
        %v1025 = vsel %vm710, %v893, %v1024
        %1026 = vst [vmem:[#allocation2 + $0x50] sm:$0x1] %v1025
        %v1027 = vld [vmem:[#allocation2 + $0x54] sm:$0xf]
        %v1028 = vsel %vm976, %v900, %v1027
        %1029 = vst [vmem:[#allocation2 + $0x54] sm:$0xf] %v1028
        %1030 = vst.msk [vmem:[#allocation2 + $0x58] sm:$0xf] %vm980, %v909
        %v1031 = vld [vmem:[#allocation2 + $0x5c] sm:$0x1]
        %v1032 = vsel %vm710, %v910, %v1031
        %1033 = vst [vmem:[#allocation2 + $0x5c] sm:$0x1] %v1032
        %v1034 = vld [vmem:[#allocation2 + $0x60] sm:$0xf]
        %v1035 = vsel %vm976, %v917, %v1034
        %1036 = vst [vmem:[#allocation2 + $0x60] sm:$0xf] %v1035
        %1037 = vst.msk [vmem:[#allocation2 + $0x64] sm:$0xf] %vm980, %v926
        %v1038 = vld [vmem:[#allocation2 + $0x68] sm:$0x1]
        %v1039 = vsel %vm710, %v927, %v1038
        %1040 = vst [vmem:[#allocation2 + $0x68] sm:$0x1] %v1039
        %v1041 = vld [vmem:[#allocation2 + $0x6c] sm:$0xf]
        %v1042 = vsel %vm976, %v934, %v1041
        %1043 = vst [vmem:[#allocation2 + $0x6c] sm:$0xf] %v1042
        %1044 = vst.msk [vmem:[#allocation2 + $0x70] sm:$0xf] %vm980, %v943
        %v1045 = vld [vmem:[#allocation2 + $0x74] sm:$0x1]
        %v1046 = vsel %vm710, %v944, %v1045
        %1047 = vst [vmem:[#allocation2 + $0x74] sm:$0x1] %v1046
        %p1048 = scmp.eq.s32.totalorder %s34, 0
        // Predicated region
        $region69: #{tpu_custom_call.1} parent=55 // pred_check
          %p1049 = pneg %p1048
        $region70: #{tpu_custom_call.1} parent=55 // pred_check_branch
          %1051 = sbr.rel (%p1049) target = $region72
        $region71: #{tpu_custom_call.1} parent=55 // pred_region
          %v1052 = vld [vmem:[#allocation2] sm:$0xf]
          %v1053 = vsel %vm976, 0, %v1052
          %1054 = vst [vmem:[#allocation2] sm:$0xf] %v1053
          %1055 = vst.msk [vmem:[#allocation2 + $0x4] sm:$0xf] %vm980, 0
          %v1056 = vld [vmem:[#allocation2 + $0x8] sm:$0x1]
          %v1057 = vsel %vm710, 0, %v1056
          %1058 = vst [vmem:[#allocation2 + $0x8] sm:$0x1] %v1057
        $region72: #{tpu_custom_call.1} parent=55 // pred_fallthru
          _
        %p1059 = scmp.eq.s32.totalorder %s34, 1
        // Predicated region
        $region73: #{tpu_custom_call.1} parent=55 // pred_check
          %p1060 = pneg %p1059
        $region74: #{tpu_custom_call.1} parent=55 // pred_check_branch
          %1062 = sbr.rel (%p1060) target = $region76
        $region75: #{tpu_custom_call.1} parent=55 // pred_region
          %s1063 = scalar_lea.vmem [#allocation2], 108
          %v1064 = vld [vmem:[%s1063] sm:$0xf]
          %v1065 = vsel %vm976, 0, %v1064
          %1066 = vst [vmem:[%s1063] sm:$0xf] %v1065
          %1067 = vst.msk [vmem:[%s1063 + $0x4] sm:$0xf] %vm980, 0
          %v1068 = vld [vmem:[%s1063 + $0x8] sm:$0x1]
          %v1069 = vsel %vm710, 0, %v1068
          %1070 = vst [vmem:[%s1063 + $0x8] sm:$0x1] %v1069
        $region76: #{tpu_custom_call.1} parent=55 // pred_fallthru
          _
        %v1071 = vld [vmem:[#allocation2] sm:$0xf]
        %v1072 = vld [vmem:[#allocation2 + $0x4] sm:$0xf]
        %v1073 = vld [vmem:[#allocation2 + $0xc] sm:$0xf]
        %v1074 = vld [vmem:[#allocation2 + $0x10] sm:$0xf]
        %v1075 = vld [vmem:[#allocation2 + $0x18] sm:$0xf]
        %v1076 = vld [vmem:[#allocation2 + $0x1c] sm:$0xf]
        %v1077 = vld [vmem:[#allocation2 + $0x24] sm:$0xf]
        %v1078 = vld [vmem:[#allocation2 + $0x28] sm:$0xf]
        %v1079 = vld [vmem:[#allocation2 + $0x30] sm:$0xf]
        %v1080 = vld [vmem:[#allocation2 + $0x34] sm:$0xf]
        %v1081 = vld [vmem:[#allocation2 + $0x3c] sm:$0xf]
        %v1082 = vld [vmem:[#allocation2 + $0x40] sm:$0xf]
        %v1083 = vld [vmem:[#allocation2 + $0x48] sm:$0xf]
        %v1084 = vld [vmem:[#allocation2 + $0x4c] sm:$0xf]
        %v1085 = vld [vmem:[#allocation2 + $0x54] sm:$0xf]
        %v1086 = vld [vmem:[#allocation2 + $0x58] sm:$0xf]
        %v1087 = vld [vmem:[#allocation2 + $0x60] sm:$0xf]
        %v1088 = vld [vmem:[#allocation2 + $0x64] sm:$0xf]
        %v1089 = vld [vmem:[#allocation2 + $0x6c] sm:$0xf]
        %v1090 = vld [vmem:[#allocation2 + $0x70] sm:$0xf]
        %v1091 = vld [vmem:[%s5] sm:$0xf]
        %v1092 = vld [vmem:[%s5 + $0x4] sm:$0x3]
        %v1109 = vunpack.c.l.b16 %v1071
        %v1110 = vunpack.c.l.b16 %v1072
        %v1111 = vunpack.c.l.b16 %v1073
        %v1112 = vunpack.c.l.b16 %v1074
        %v1113 = vunpack.c.l.b16 %v1075
        %v1114 = vunpack.c.l.b16 %v1076
        %v1115 = vunpack.c.l.b16 %v1077
        %v1116 = vunpack.c.l.b16 %v1078
        %v1117 = vunpack.c.l.b16 %v1079
        %v1118 = vunpack.c.l.b16 %v1080
        %v1119 = vunpack.c.l.b16 %v1081
        %v1120 = vunpack.c.l.b16 %v1082
        %v1121 = vunpack.c.l.b16 %v1083
        %v1122 = vunpack.c.l.b16 %v1084
        %v1123 = vunpack.c.l.b16 %v1085
        %v1124 = vunpack.c.l.b16 %v1086
        %v1125 = vpack.c.b16 %v1110, %v1109
        %v1126 = vpack.c.b16 %v1112, %v1111
        %v1127 = vpack.c.b16 %v1114, %v1113
        %v1128 = vpack.c.b16 %v1116, %v1115
        %v1129 = vpack.c.b16 %v1118, %v1117
        %v1130 = vpack.c.b16 %v1120, %v1119
        %v1131 = vpack.c.b16 %v1122, %v1121
        %v1132 = vpack.c.b16 %v1124, %v1123
        %v1135 = vunpack.c.l.b16 %v1087
        %v1136 = vunpack.c.l.b16 %v1088
        %v1137 = vpack.c.b16 %v1136, %v1135
        %1138 = vrot.lane.b32.xlu0 %v1126, 4
        %v1139 = vpop.permute.xlu0 %1138
        %1140 = vrot.lane.b32.xlu0 %v1127, 4
        %v1141 = vpop.permute.xlu0 %1140
        %1142 = vrot.lane.b32.xlu0 %v1128, 4
        %v1143 = vpop.permute.xlu0 %1142
        %1144 = vrot.lane.b32.xlu0 %v1129, 4
        %v1145 = vpop.permute.xlu0 %1144
        %1146 = vrot.lane.b32.xlu0 %v1130, 4
        %v1147 = vpop.permute.xlu0 %1146
        %1148 = vrot.lane.b32.xlu0 %v1131, 4
        %v1149 = vpop.permute.xlu0 %1148
        %1150 = vrot.lane.b32.xlu0 %v1132, 4
        %v1151 = vpop.permute.xlu0 %1150
        %1152 = vrot.lane.b32.xlu0 %v1137, 4
        %v1153 = vpop.permute.xlu0 %1152
        %v1156 = vunpack.c.l.b16 %v1089
        %v1157 = vunpack.c.l.b16 %v1090
        %v1158 = vpack.c.b16 %v1157, %v1156
        %1159 = vrot.lane.b32.xlu0 %v1127, 8
        %v1160 = vpop.permute.xlu0 %1159
        %1161 = vrot.lane.b32.xlu0 %v1128, 8
        %v1162 = vpop.permute.xlu0 %1161
        %1163 = vrot.lane.b32.xlu0 %v1129, 8
        %v1164 = vpop.permute.xlu0 %1163
        %1165 = vrot.lane.b32.xlu0 %v1130, 8
        %v1166 = vpop.permute.xlu0 %1165
        %1167 = vrot.lane.b32.xlu0 %v1131, 8
        %v1168 = vpop.permute.xlu0 %1167
        %1169 = vrot.lane.b32.xlu0 %v1132, 8
        %v1170 = vpop.permute.xlu0 %1169
        %1171 = vrot.lane.b32.xlu0 %v1137, 8
        %v1172 = vpop.permute.xlu0 %1171
        %1173 = vrot.lane.b32.xlu0 %v1158, 8
        %v1174 = vpop.permute.xlu0 %1173
        %vm1175 = vcmask 31744
        %v1178 = vsel %vm1175, %v1125, %v1139
        %v1181 = vsel %vm1175, %v1126, %v1141
        %v1184 = vsel %vm1175, %v1127, %v1143
        %v1187 = vsel %vm1175, %v1128, %v1145
        %v1190 = vsel %vm1175, %v1129, %v1147
        %v1193 = vsel %vm1175, %v1130, %v1149
        %v1196 = vsel %vm1175, %v1131, %v1151
        %v1199 = vsel %vm1175, %v1132, %v1153
        %vm1200 = vcmask 64512
        %v1202 = vsel %vm1200, %v1178, %v1160
        %v1204 = vsel %vm1200, %v1181, %v1162
        %v1206 = vsel %vm1200, %v1184, %v1164
        %v1208 = vsel %vm1200, %v1187, %v1166
        %v1210 = vsel %vm1200, %v1190, %v1168
        %v1212 = vsel %vm1200, %v1193, %v1170
        %v1214 = vsel %vm1200, %v1196, %v1172
        %v1216 = vsel %vm1200, %v1199, %v1174
        %v1217 = vld [vmem:[#allocation2 + $0x8] sm:$0x1]
        %v1218 = vld [vmem:[#allocation2 + $0x14] sm:$0x1]
        %v1219 = vld [vmem:[#allocation2 + $0x20] sm:$0x1]
        %v1220 = vld [vmem:[#allocation2 + $0x2c] sm:$0x1]
        %v1221 = vld [vmem:[#allocation2 + $0x38] sm:$0x1]
        %v1222 = vld [vmem:[#allocation2 + $0x44] sm:$0x1]
        %v1223 = vld [vmem:[#allocation2 + $0x50] sm:$0x1]
        %v1224 = vld [vmem:[#allocation2 + $0x5c] sm:$0x1]
        %v1225 = vld [vmem:[#allocation2 + $0x68] sm:$0x1]
        %v1226 = vld [vmem:[#allocation2 + $0x74] sm:$0x1]
        %s1227 = scalar_lea.vmem %s5, 8
        %v1228 = vld [vmem:[%s1227] sm:$0xf]
        %v1229 = vld [vmem:[%s1227 + $0x4] sm:$0x3]
        %vm1230 = vsmask.f32 3328
        %vm1231 = vsmask.f32 7440
        %vm1232 = vmor %vm1230, %vm1231
        %v1234 = vshrl.u32 %v1071, 16
        %v1236 = vrot.slane %v1234, 4
        %v1237 = vshll.u32 %v1071, 16
        %v1239 = vrot.slane %v1237, 5
        %v1240 = vor.u32 %v1236, %v1239
        %v1241 = vrot.slane %v1240, 4
        %v1243 = vshll.u32 %v1072, 16
        %v1245 = vrot.slane %v1243, 5
        %v1246 = vsel %vm1232, %v1241, %v1245
        %v1247 = vshrl.u32 %v1072, 16
        %v1249 = vrot.slane %v1247, 4
        %v1250 = vor.u32 %v1249, %v1245
        %v1251 = vrot.slane %v1250, 4
        %v1253 = vshll.u32 %v1217, 16
        %v1255 = vrot.slane %v1253, 5
        %v1256 = vsel %vm1232, %v1251, %v1255
        %v1258 = vshrl.u32 %v1073, 16
        %v1260 = vrot.slane %v1258, 4
        %v1261 = vshll.u32 %v1073, 16
        %v1263 = vrot.slane %v1261, 5
        %v1264 = vor.u32 %v1260, %v1263
        %v1265 = vrot.slane %v1264, 4
        %v1267 = vshll.u32 %v1074, 16
        %v1269 = vrot.slane %v1267, 5
        %v1270 = vsel %vm1232, %v1265, %v1269
        %v1271 = vshrl.u32 %v1074, 16
        %v1273 = vrot.slane %v1271, 4
        %v1274 = vor.u32 %v1273, %v1269
        %v1275 = vrot.slane %v1274, 4
        %v1277 = vshll.u32 %v1218, 16
        %v1279 = vrot.slane %v1277, 5
        %v1280 = vsel %vm1232, %v1275, %v1279
        %v1282 = vshrl.u32 %v1075, 16
        %v1284 = vrot.slane %v1282, 4
        %v1285 = vshll.u32 %v1075, 16
        %v1287 = vrot.slane %v1285, 5
        %v1288 = vor.u32 %v1284, %v1287
        %v1289 = vrot.slane %v1288, 4
        %v1291 = vshll.u32 %v1076, 16
        %v1293 = vrot.slane %v1291, 5
        %v1294 = vsel %vm1232, %v1289, %v1293
        %v1295 = vshrl.u32 %v1076, 16
        %v1297 = vrot.slane %v1295, 4
        %v1298 = vor.u32 %v1297, %v1293
        %v1299 = vrot.slane %v1298, 4
        %v1301 = vshll.u32 %v1219, 16
        %v1303 = vrot.slane %v1301, 5
        %v1304 = vsel %vm1232, %v1299, %v1303
        %v1306 = vshrl.u32 %v1077, 16
        %v1308 = vrot.slane %v1306, 4
        %v1309 = vshll.u32 %v1077, 16
        %v1311 = vrot.slane %v1309, 5
        %v1312 = vor.u32 %v1308, %v1311
        %v1313 = vrot.slane %v1312, 4
        %v1315 = vshll.u32 %v1078, 16
        %v1317 = vrot.slane %v1315, 5
        %v1318 = vsel %vm1232, %v1313, %v1317
        %v1319 = vshrl.u32 %v1078, 16
        %v1321 = vrot.slane %v1319, 4
        %v1322 = vor.u32 %v1321, %v1317
        %v1323 = vrot.slane %v1322, 4
        %v1325 = vshll.u32 %v1220, 16
        %v1327 = vrot.slane %v1325, 5
        %v1328 = vsel %vm1232, %v1323, %v1327
        %v1330 = vshrl.u32 %v1079, 16
        %v1332 = vrot.slane %v1330, 4
        %v1333 = vshll.u32 %v1079, 16
        %v1335 = vrot.slane %v1333, 5
        %v1336 = vor.u32 %v1332, %v1335
        %v1337 = vrot.slane %v1336, 4
        %v1339 = vshll.u32 %v1080, 16
        %v1341 = vrot.slane %v1339, 5
        %v1342 = vsel %vm1232, %v1337, %v1341
        %v1343 = vshrl.u32 %v1080, 16
        %v1345 = vrot.slane %v1343, 4
        %v1346 = vor.u32 %v1345, %v1341
        %v1347 = vrot.slane %v1346, 4
        %v1349 = vshll.u32 %v1221, 16
        %v1351 = vrot.slane %v1349, 5
        %v1352 = vsel %vm1232, %v1347, %v1351
        %v1354 = vshrl.u32 %v1081, 16
        %v1356 = vrot.slane %v1354, 4
        %v1357 = vshll.u32 %v1081, 16
        %v1359 = vrot.slane %v1357, 5
        %v1360 = vor.u32 %v1356, %v1359
        %v1361 = vrot.slane %v1360, 4
        %v1363 = vshll.u32 %v1082, 16
        %v1365 = vrot.slane %v1363, 5
        %v1366 = vsel %vm1232, %v1361, %v1365
        %v1367 = vshrl.u32 %v1082, 16
        %v1369 = vrot.slane %v1367, 4
        %v1370 = vor.u32 %v1369, %v1365
        %v1371 = vrot.slane %v1370, 4
        %v1373 = vshll.u32 %v1222, 16
        %v1375 = vrot.slane %v1373, 5
        %v1376 = vsel %vm1232, %v1371, %v1375
        %v1378 = vshrl.u32 %v1083, 16
        %v1380 = vrot.slane %v1378, 4
        %v1381 = vshll.u32 %v1083, 16
        %v1383 = vrot.slane %v1381, 5
        %v1384 = vor.u32 %v1380, %v1383
        %v1385 = vrot.slane %v1384, 4
        %v1387 = vshll.u32 %v1084, 16
        %v1389 = vrot.slane %v1387, 5
        %v1390 = vsel %vm1232, %v1385, %v1389
        %v1391 = vshrl.u32 %v1084, 16
        %v1393 = vrot.slane %v1391, 4
        %v1394 = vor.u32 %v1393, %v1389
        %v1395 = vrot.slane %v1394, 4
        %v1397 = vshll.u32 %v1223, 16
        %v1399 = vrot.slane %v1397, 5
        %v1400 = vsel %vm1232, %v1395, %v1399
        %v1402 = vshrl.u32 %v1085, 16
        %v1404 = vrot.slane %v1402, 4
        %v1405 = vshll.u32 %v1085, 16
        %v1407 = vrot.slane %v1405, 5
        %v1408 = vor.u32 %v1404, %v1407
        %v1409 = vrot.slane %v1408, 4
        %v1411 = vshll.u32 %v1086, 16
        %v1413 = vrot.slane %v1411, 5
        %v1414 = vsel %vm1232, %v1409, %v1413
        %v1415 = vshrl.u32 %v1086, 16
        %v1417 = vrot.slane %v1415, 4
        %v1418 = vor.u32 %v1417, %v1413
        %v1419 = vrot.slane %v1418, 4
        %v1421 = vshll.u32 %v1224, 16
        %v1423 = vrot.slane %v1421, 5
        %v1424 = vsel %vm1232, %v1419, %v1423
        %v1426 = vshrl.u32 %v1087, 16
        %v1428 = vrot.slane %v1426, 4
        %v1429 = vshll.u32 %v1087, 16
        %v1431 = vrot.slane %v1429, 5
        %v1432 = vor.u32 %v1428, %v1431
        %v1433 = vrot.slane %v1432, 4
        %v1435 = vshll.u32 %v1088, 16
        %v1437 = vrot.slane %v1435, 5
        %v1438 = vsel %vm1232, %v1433, %v1437
        %v1439 = vshrl.u32 %v1088, 16
        %v1441 = vrot.slane %v1439, 4
        %v1442 = vor.u32 %v1441, %v1437
        %v1443 = vrot.slane %v1442, 4
        %v1445 = vshll.u32 %v1225, 16
        %v1447 = vrot.slane %v1445, 5
        %v1448 = vsel %vm1232, %v1443, %v1447
        %v1450 = vshrl.u32 %v1089, 16
        %v1452 = vrot.slane %v1450, 4
        %v1453 = vshll.u32 %v1089, 16
        %v1455 = vrot.slane %v1453, 5
        %v1456 = vor.u32 %v1452, %v1455
        %v1457 = vrot.slane %v1456, 4
        %v1459 = vshll.u32 %v1090, 16
        %v1461 = vrot.slane %v1459, 5
        %v1462 = vsel %vm1232, %v1457, %v1461
        %v1463 = vshrl.u32 %v1090, 16
        %v1465 = vrot.slane %v1463, 4
        %v1466 = vor.u32 %v1465, %v1461
        %v1467 = vrot.slane %v1466, 4
        %v1469 = vshll.u32 %v1226, 16
        %v1471 = vrot.slane %v1469, 5
        %v1472 = vsel %vm1232, %v1467, %v1471
        %v1473 = vunpack.c.l.b16 %v1246
        %v1474 = vunpack.c.l.b16 %v1256
        %v1475 = vunpack.c.l.b16 %v1270
        %v1476 = vunpack.c.l.b16 %v1280
        %v1477 = vunpack.c.l.b16 %v1294
        %v1478 = vunpack.c.l.b16 %v1304
        %v1479 = vunpack.c.l.b16 %v1318
        %v1480 = vunpack.c.l.b16 %v1328
        %v1481 = vunpack.c.l.b16 %v1342
        %v1482 = vunpack.c.l.b16 %v1352
        %v1483 = vunpack.c.l.b16 %v1366
        %v1484 = vunpack.c.l.b16 %v1376
        %v1485 = vunpack.c.l.b16 %v1390
        %v1486 = vunpack.c.l.b16 %v1400
        %v1487 = vunpack.c.l.b16 %v1414
        %v1488 = vunpack.c.l.b16 %v1424
        %v1489 = vpack.c.b16 %v1474, %v1473
        %v1490 = vpack.c.b16 %v1476, %v1475
        %v1491 = vpack.c.b16 %v1478, %v1477
        %v1492 = vpack.c.b16 %v1480, %v1479
        %v1493 = vpack.c.b16 %v1482, %v1481
        %v1494 = vpack.c.b16 %v1484, %v1483
        %v1495 = vpack.c.b16 %v1486, %v1485
        %v1496 = vpack.c.b16 %v1488, %v1487
        %v1497 = vunpack.c.l.b16 %v1438
        %v1498 = vunpack.c.l.b16 %v1448
        %v1499 = vpack.c.b16 %v1498, %v1497
        %1500 = vrot.lane.b32.xlu0 %v1490, 4
        %v1501 = vpop.permute.xlu0 %1500
        %1502 = vrot.lane.b32.xlu0 %v1491, 4
        %v1503 = vpop.permute.xlu0 %1502
        %1504 = vrot.lane.b32.xlu0 %v1492, 4
        %v1505 = vpop.permute.xlu0 %1504
        %1506 = vrot.lane.b32.xlu0 %v1493, 4
        %v1507 = vpop.permute.xlu0 %1506
        %1508 = vrot.lane.b32.xlu0 %v1494, 4
        %v1509 = vpop.permute.xlu0 %1508
        %1510 = vrot.lane.b32.xlu0 %v1495, 4
        %v1511 = vpop.permute.xlu0 %1510
        %1512 = vrot.lane.b32.xlu0 %v1496, 4
        %v1513 = vpop.permute.xlu0 %1512
        %1514 = vrot.lane.b32.xlu0 %v1499, 4
        %v1515 = vpop.permute.xlu0 %1514
        %v1516 = vunpack.c.l.b16 %v1462
        %v1517 = vunpack.c.l.b16 %v1472
        %v1518 = vpack.c.b16 %v1517, %v1516
        %1519 = vrot.lane.b32.xlu0 %v1491, 8
        %v1520 = vpop.permute.xlu0 %1519
        %1521 = vrot.lane.b32.xlu0 %v1492, 8
        %v1522 = vpop.permute.xlu0 %1521
        %1523 = vrot.lane.b32.xlu0 %v1493, 8
        %v1524 = vpop.permute.xlu0 %1523
        %1525 = vrot.lane.b32.xlu0 %v1494, 8
        %v1526 = vpop.permute.xlu0 %1525
        %1527 = vrot.lane.b32.xlu0 %v1495, 8
        %v1528 = vpop.permute.xlu0 %1527
        %1529 = vrot.lane.b32.xlu0 %v1496, 8
        %v1530 = vpop.permute.xlu0 %1529
        %1531 = vrot.lane.b32.xlu0 %v1499, 8
        %v1532 = vpop.permute.xlu0 %1531
        %1533 = vrot.lane.b32.xlu0 %v1518, 8
        %v1534 = vpop.permute.xlu0 %1533
        %v1537 = vsel %vm1175, %v1489, %v1501
        %v1540 = vsel %vm1175, %v1490, %v1503
        %v1543 = vsel %vm1175, %v1491, %v1505
        %v1546 = vsel %vm1175, %v1492, %v1507
        %v1549 = vsel %vm1175, %v1493, %v1509
        %v1552 = vsel %vm1175, %v1494, %v1511
        %v1555 = vsel %vm1175, %v1495, %v1513
        %v1558 = vsel %vm1175, %v1496, %v1515
        %v1560 = vsel %vm1200, %v1537, %v1520
        %v1562 = vsel %vm1200, %v1540, %v1522
        %v1564 = vsel %vm1200, %v1543, %v1524
        %v1566 = vsel %vm1200, %v1546, %v1526
        %v1568 = vsel %vm1200, %v1549, %v1528
        %v1570 = vsel %vm1200, %v1552, %v1530
        %v1572 = vsel %vm1200, %v1555, %v1532
        %v1574 = vsel %vm1200, %v1558, %v1534
        %v1577 = vunpack.c.l.b16 %v1228
        %v1578 = vunpack.c.l.b16 %v1229
        %v1579 = vpack.c.b16 %v1578, %v1577
        %vm1580 = vcmask 97280
        %v1581 = vsel %vm1580, %v1560, 0
        %v1583 = vsel %vm1580, %v1562, 0
        %v1585 = vsel %vm1580, %v1564, 0
        %v1587 = vsel %vm1580, %v1566, 0
        %v1589 = vsel %vm1580, %v1568, 0
        %v1591 = vsel %vm1580, %v1570, 0
        %v1593 = vsel %vm1580, %v1572, 0
        %v1595 = vsel %vm1580, %v1574, 0
        %vm1597 = vcmask 1045504
        %v1599 = vsel %vm1597, %v1579, 0
        %1601 = vmatpush.bf16.msra.mxu0 0
        %1602 = vmatpush.bf16.msra.mxu0 0
        %1603 = vmatpush.bf16.msra.mxu0 0
        %1604 = vmatpush.bf16.msra.mxu0 0
        %1605 = vmatpush.bf16.msra.mxu0 0
        %1606 = vmatpush.bf16.msra.mxu0 0
        %1607 = vmatpush.bf16.msra.mxu0 0
        %1608 = vmatpush.bf16.msra.mxu0 %v1599
        %1609 = vmatmul.bf16.gmra.mxu0 %v1581
        %v1610 = vpop.f32.mrf.mxu0
        %v1611 = vadd.f32 0.0, %v1610
        %v1612 = vpop.f32.mrf.mxu0
        %v1613 = vadd.f32 0.0, %v1612
        %1614 = vmatmul.bf16.gmra.mxu0 %v1583
        %v1615 = vpop.f32.mrf.mxu0
        %v1616 = vadd.f32 0.0, %v1615
        %v1617 = vpop.f32.mrf.mxu0
        %v1618 = vadd.f32 0.0, %v1617
        %1619 = vmatmul.bf16.gmra.mxu0 %v1585
        %v1620 = vpop.f32.mrf.mxu0
        %v1621 = vadd.f32 0.0, %v1620
        %v1622 = vpop.f32.mrf.mxu0
        %v1623 = vadd.f32 0.0, %v1622
        %1624 = vmatmul.bf16.gmra.mxu0 %v1587
        %v1625 = vpop.f32.mrf.mxu0
        %v1626 = vadd.f32 0.0, %v1625
        %v1627 = vpop.f32.mrf.mxu0
        %v1628 = vadd.f32 0.0, %v1627
        %1629 = vmatmul.bf16.gmra.mxu0 %v1589
        %v1630 = vpop.f32.mrf.mxu0
        %v1631 = vadd.f32 0.0, %v1630
        %v1632 = vpop.f32.mrf.mxu0
        %v1633 = vadd.f32 0.0, %v1632
        %1634 = vmatmul.bf16.gmra.mxu0 %v1591
        %v1635 = vpop.f32.mrf.mxu0
        %v1636 = vadd.f32 0.0, %v1635
        %v1637 = vpop.f32.mrf.mxu0
        %v1638 = vadd.f32 0.0, %v1637
        %1639 = vmatmul.bf16.gmra.mxu0 %v1593
        %v1640 = vpop.f32.mrf.mxu0
        %v1641 = vadd.f32 0.0, %v1640
        %v1642 = vpop.f32.mrf.mxu0
        %v1643 = vadd.f32 0.0, %v1642
        %1644 = vmatmul.bf16.gmra.mxu0 %v1595
        %v1645 = vpop.f32.mrf.mxu0
        %v1646 = vadd.f32 0.0, %v1645
        %v1647 = vpop.f32.mrf.mxu0
        %v1648 = vadd.f32 0.0, %v1647
        %1649 = vdwg.mxu0
        %v1652 = vunpack.c.l.b16 %v1091
        %v1653 = vunpack.c.l.b16 %v1092
        %v1654 = vpack.c.b16 %v1653, %v1652
        %v1655 = vsel %vm1580, %v1202, 0
        %v1657 = vsel %vm1580, %v1204, 0
        %v1659 = vsel %vm1580, %v1206, 0
        %v1661 = vsel %vm1580, %v1208, 0
        %v1663 = vsel %vm1580, %v1210, 0
        %v1665 = vsel %vm1580, %v1212, 0
        %v1667 = vsel %vm1580, %v1214, 0
        %v1669 = vsel %vm1580, %v1216, 0
        %v1672 = vsel %vm1597, %v1654, 0
        %1674 = vmatpush.bf16.msra.mxu0 0
        %1675 = vmatpush.bf16.msra.mxu0 0
        %1676 = vmatpush.bf16.msra.mxu0 0
        %1677 = vmatpush.bf16.msra.mxu0 0
        %1678 = vmatpush.bf16.msra.mxu0 0
        %1679 = vmatpush.bf16.msra.mxu0 0
        %1680 = vmatpush.bf16.msra.mxu0 0
        %1681 = vmatpush.bf16.msra.mxu0 %v1672
        %1682 = vmatmul.bf16.gmra.mxu0 %v1655
        %v1683 = vpop.f32.mrf.mxu0
        %v1684 = vadd.f32 %v1611, %v1683
        %v1685 = vpop.f32.mrf.mxu0
        %v1686 = vadd.f32 %v1613, %v1685
        %1687 = vmatmul.bf16.gmra.mxu0 %v1657
        %v1688 = vpop.f32.mrf.mxu0
        %v1689 = vadd.f32 %v1616, %v1688
        %v1690 = vpop.f32.mrf.mxu0
        %v1691 = vadd.f32 %v1618, %v1690
        %1692 = vmatmul.bf16.gmra.mxu0 %v1659
        %v1693 = vpop.f32.mrf.mxu0
        %v1694 = vadd.f32 %v1621, %v1693
        %v1695 = vpop.f32.mrf.mxu0
        %v1696 = vadd.f32 %v1623, %v1695
        %1697 = vmatmul.bf16.gmra.mxu0 %v1661
        %v1698 = vpop.f32.mrf.mxu0
        %v1699 = vadd.f32 %v1626, %v1698
        %v1700 = vpop.f32.mrf.mxu0
        %v1701 = vadd.f32 %v1628, %v1700
        %1702 = vmatmul.bf16.gmra.mxu0 %v1663
        %v1703 = vpop.f32.mrf.mxu0
        %v1704 = vadd.f32 %v1631, %v1703
        %v1705 = vpop.f32.mrf.mxu0
        %v1706 = vadd.f32 %v1633, %v1705
        %1707 = vmatmul.bf16.gmra.mxu0 %v1665
        %v1708 = vpop.f32.mrf.mxu0
        %v1709 = vadd.f32 %v1636, %v1708
        %v1710 = vpop.f32.mrf.mxu0
        %v1711 = vadd.f32 %v1638, %v1710
        %1712 = vmatmul.bf16.gmra.mxu0 %v1667
        %v1713 = vpop.f32.mrf.mxu0
        %v1714 = vadd.f32 %v1641, %v1713
        %v1715 = vpop.f32.mrf.mxu0
        %v1716 = vadd.f32 %v1643, %v1715
        %1717 = vmatmul.bf16.gmra.mxu0 %v1669
        %v1718 = vpop.f32.mrf.mxu0
        %v1719 = vadd.f32 %v1646, %v1718
        %v1720 = vpop.f32.mrf.mxu0
        %v1721 = vadd.f32 %v1648, %v1720
        %1722 = vdwg.mxu0
        %v1723 = vld [vmem:[#allocation2] sm:$0xe]
        %v1724 = vld [vmem:[#allocation2 + $0xc] sm:$0xe]
        %v1725 = vld [vmem:[#allocation2 + $0x18] sm:$0xe]
        %v1726 = vld [vmem:[#allocation2 + $0x24] sm:$0xe]
        %v1727 = vld [vmem:[#allocation2 + $0x30] sm:$0xe]
        %v1728 = vld [vmem:[#allocation2 + $0x3c] sm:$0xe]
        %v1729 = vld [vmem:[#allocation2 + $0x48] sm:$0xe]
        %v1730 = vld [vmem:[#allocation2 + $0x54] sm:$0xe]
        %v1731 = vld [vmem:[#allocation2 + $0x60] sm:$0xe]
        %v1732 = vld [vmem:[#allocation2 + $0x6c] sm:$0xe]
        %s1733 = scalar_lea.vmem %s5, 16
        %v1734 = vld [vmem:[%s1733] sm:$0xf]
        %v1735 = vld [vmem:[%s1733 + $0x4] sm:$0x3]
        %vm1752 = vcmask 1042432
        %vm1753 = vcmask 1046532
        %vm1754 = vmor %vm1752, %vm1753
        %v1755 = vrot.slane %v1723, 5
        %v1756 = vrot.slane %v1755, 4
        %v1757 = vrot.slane %v1072, 5
        %v1758 = vsel %vm1754, %v1756, %v1757
        %v1759 = vrot.slane %v1757, 4
        %v1760 = vrot.slane %v1217, 5
        %v1761 = vsel %vm1754, %v1759, %v1760
        %v1762 = vrot.slane %v1724, 5
        %v1763 = vrot.slane %v1762, 4
        %v1764 = vrot.slane %v1074, 5
        %v1765 = vsel %vm1754, %v1763, %v1764
        %v1766 = vrot.slane %v1764, 4
        %v1767 = vrot.slane %v1218, 5
        %v1768 = vsel %vm1754, %v1766, %v1767
        %v1769 = vrot.slane %v1725, 5
        %v1770 = vrot.slane %v1769, 4
        %v1771 = vrot.slane %v1076, 5
        %v1772 = vsel %vm1754, %v1770, %v1771
        %v1773 = vrot.slane %v1771, 4
        %v1774 = vrot.slane %v1219, 5
        %v1775 = vsel %vm1754, %v1773, %v1774
        %v1776 = vrot.slane %v1726, 5
        %v1777 = vrot.slane %v1776, 4
        %v1778 = vrot.slane %v1078, 5
        %v1779 = vsel %vm1754, %v1777, %v1778
        %v1780 = vrot.slane %v1778, 4
        %v1781 = vrot.slane %v1220, 5
        %v1782 = vsel %vm1754, %v1780, %v1781
        %v1783 = vrot.slane %v1727, 5
        %v1784 = vrot.slane %v1783, 4
        %v1785 = vrot.slane %v1080, 5
        %v1786 = vsel %vm1754, %v1784, %v1785
        %v1787 = vrot.slane %v1785, 4
        %v1788 = vrot.slane %v1221, 5
        %v1789 = vsel %vm1754, %v1787, %v1788
        %v1790 = vrot.slane %v1728, 5
        %v1791 = vrot.slane %v1790, 4
        %v1792 = vrot.slane %v1082, 5
        %v1793 = vsel %vm1754, %v1791, %v1792
        %v1794 = vrot.slane %v1792, 4
        %v1795 = vrot.slane %v1222, 5
        %v1796 = vsel %vm1754, %v1794, %v1795
        %v1797 = vrot.slane %v1729, 5
        %v1798 = vrot.slane %v1797, 4
        %v1799 = vrot.slane %v1084, 5
        %v1800 = vsel %vm1754, %v1798, %v1799
        %v1801 = vrot.slane %v1799, 4
        %v1802 = vrot.slane %v1223, 5
        %v1803 = vsel %vm1754, %v1801, %v1802
        %v1804 = vrot.slane %v1730, 5
        %v1805 = vrot.slane %v1804, 4
        %v1806 = vrot.slane %v1086, 5
        %v1807 = vsel %vm1754, %v1805, %v1806
        %v1808 = vrot.slane %v1806, 4
        %v1809 = vrot.slane %v1224, 5
        %v1810 = vsel %vm1754, %v1808, %v1809
        %v1813 = vrot.slane %v1731, 5
        %v1814 = vrot.slane %v1813, 4
        %v1815 = vrot.slane %v1088, 5
        %v1816 = vsel %vm1754, %v1814, %v1815
        %v1817 = vrot.slane %v1815, 4
        %v1818 = vrot.slane %v1225, 5
        %v1819 = vsel %vm1754, %v1817, %v1818
        %v1822 = vrot.slane %v1732, 5
        %v1823 = vrot.slane %v1822, 4
        %v1824 = vrot.slane %v1090, 5
        %v1825 = vsel %vm1754, %v1823, %v1824
        %v1826 = vrot.slane %v1824, 4
        %v1827 = vrot.slane %v1226, 5
        %v1828 = vsel %vm1754, %v1826, %v1827
        %v1829 = vunpack.c.l.b16 %v1758
        %v1830 = vunpack.c.l.b16 %v1761
        %v1831 = vunpack.c.l.b16 %v1765
        %v1832 = vunpack.c.l.b16 %v1768
        %v1833 = vunpack.c.l.b16 %v1772
        %v1834 = vunpack.c.l.b16 %v1775
        %v1835 = vunpack.c.l.b16 %v1779
        %v1836 = vunpack.c.l.b16 %v1782
        %v1837 = vunpack.c.l.b16 %v1786
        %v1838 = vunpack.c.l.b16 %v1789
        %v1839 = vunpack.c.l.b16 %v1793
        %v1840 = vunpack.c.l.b16 %v1796
        %v1841 = vunpack.c.l.b16 %v1800
        %v1842 = vunpack.c.l.b16 %v1803
        %v1843 = vunpack.c.l.b16 %v1807
        %v1844 = vunpack.c.l.b16 %v1810
        %v1845 = vpack.c.b16 %v1830, %v1829
        %v1846 = vpack.c.b16 %v1832, %v1831
        %v1847 = vpack.c.b16 %v1834, %v1833
        %v1848 = vpack.c.b16 %v1836, %v1835
        %v1849 = vpack.c.b16 %v1838, %v1837
        %v1850 = vpack.c.b16 %v1840, %v1839
        %v1851 = vpack.c.b16 %v1842, %v1841
        %v1852 = vpack.c.b16 %v1844, %v1843
        %v1853 = vunpack.c.l.b16 %v1816
        %v1854 = vunpack.c.l.b16 %v1819
        %v1855 = vpack.c.b16 %v1854, %v1853
        %1856 = vrot.lane.b32.xlu0 %v1846, 4
        %v1857 = vpop.permute.xlu0 %1856
        %1858 = vrot.lane.b32.xlu0 %v1847, 4
        %v1859 = vpop.permute.xlu0 %1858
        %1860 = vrot.lane.b32.xlu0 %v1848, 4
        %v1861 = vpop.permute.xlu0 %1860
        %1862 = vrot.lane.b32.xlu0 %v1849, 4
        %v1863 = vpop.permute.xlu0 %1862
        %1864 = vrot.lane.b32.xlu0 %v1850, 4
        %v1865 = vpop.permute.xlu0 %1864
        %1866 = vrot.lane.b32.xlu0 %v1851, 4
        %v1867 = vpop.permute.xlu0 %1866
        %1868 = vrot.lane.b32.xlu0 %v1852, 4
        %v1869 = vpop.permute.xlu0 %1868
        %1870 = vrot.lane.b32.xlu0 %v1855, 4
        %v1871 = vpop.permute.xlu0 %1870
        %v1872 = vunpack.c.l.b16 %v1825
        %v1873 = vunpack.c.l.b16 %v1828
        %v1874 = vpack.c.b16 %v1873, %v1872
        %1875 = vrot.lane.b32.xlu0 %v1847, 8
        %v1876 = vpop.permute.xlu0 %1875
        %1877 = vrot.lane.b32.xlu0 %v1848, 8
        %v1878 = vpop.permute.xlu0 %1877
        %1879 = vrot.lane.b32.xlu0 %v1849, 8
        %v1880 = vpop.permute.xlu0 %1879
        %1881 = vrot.lane.b32.xlu0 %v1850, 8
        %v1882 = vpop.permute.xlu0 %1881
        %1883 = vrot.lane.b32.xlu0 %v1851, 8
        %v1884 = vpop.permute.xlu0 %1883
        %1885 = vrot.lane.b32.xlu0 %v1852, 8
        %v1886 = vpop.permute.xlu0 %1885
        %1887 = vrot.lane.b32.xlu0 %v1855, 8
        %v1888 = vpop.permute.xlu0 %1887
        %1889 = vrot.lane.b32.xlu0 %v1874, 8
        %v1890 = vpop.permute.xlu0 %1889
        %v1893 = vsel %vm1175, %v1845, %v1857
        %v1896 = vsel %vm1175, %v1846, %v1859
        %v1899 = vsel %vm1175, %v1847, %v1861
        %v1902 = vsel %vm1175, %v1848, %v1863
        %v1905 = vsel %vm1175, %v1849, %v1865
        %v1908 = vsel %vm1175, %v1850, %v1867
        %v1911 = vsel %vm1175, %v1851, %v1869
        %v1914 = vsel %vm1175, %v1852, %v1871
        %v1916 = vsel %vm1200, %v1893, %v1876
        %v1918 = vsel %vm1200, %v1896, %v1878
        %v1920 = vsel %vm1200, %v1899, %v1880
        %v1922 = vsel %vm1200, %v1902, %v1882
        %v1924 = vsel %vm1200, %v1905, %v1884
        %v1926 = vsel %vm1200, %v1908, %v1886
        %v1928 = vsel %vm1200, %v1911, %v1888
        %v1930 = vsel %vm1200, %v1914, %v1890
        %v1933 = vunpack.c.l.b16 %v1734
        %v1934 = vunpack.c.l.b16 %v1735
        %v1935 = vpack.c.b16 %v1934, %v1933
        %v1936 = vsel %vm1580, %v1916, 0
        %v1938 = vsel %vm1580, %v1918, 0
        %v1940 = vsel %vm1580, %v1920, 0
        %v1942 = vsel %vm1580, %v1922, 0
        %v1944 = vsel %vm1580, %v1924, 0
        %v1946 = vsel %vm1580, %v1926, 0
        %v1948 = vsel %vm1580, %v1928, 0
        %v1950 = vsel %vm1580, %v1930, 0
        %v1953 = vsel %vm1597, %v1935, 0
        %1955 = vmatpush.bf16.msra.mxu0 0
        %1956 = vmatpush.bf16.msra.mxu0 0
        %1957 = vmatpush.bf16.msra.mxu0 0
        %1958 = vmatpush.bf16.msra.mxu0 0
        %1959 = vmatpush.bf16.msra.mxu0 0
        %1960 = vmatpush.bf16.msra.mxu0 0
        %1961 = vmatpush.bf16.msra.mxu0 0
        %1962 = vmatpush.bf16.msra.mxu0 %v1953
        %1963 = vmatmul.bf16.gmra.mxu0 %v1936
        %v1964 = vpop.f32.mrf.mxu0
        %v1965 = vadd.f32 0.0, %v1964
        %v1966 = vpop.f32.mrf.mxu0
        %v1967 = vadd.f32 0.0, %v1966
        %1968 = vmatmul.bf16.gmra.mxu0 %v1938
        %v1969 = vpop.f32.mrf.mxu0
        %v1970 = vadd.f32 0.0, %v1969
        %v1971 = vpop.f32.mrf.mxu0
        %v1972 = vadd.f32 0.0, %v1971
        %1973 = vmatmul.bf16.gmra.mxu0 %v1940
        %v1974 = vpop.f32.mrf.mxu0
        %v1975 = vadd.f32 0.0, %v1974
        %v1976 = vpop.f32.mrf.mxu0
        %v1977 = vadd.f32 0.0, %v1976
        %1978 = vmatmul.bf16.gmra.mxu0 %v1942
        %v1979 = vpop.f32.mrf.mxu0
        %v1980 = vadd.f32 0.0, %v1979
        %v1981 = vpop.f32.mrf.mxu0
        %v1982 = vadd.f32 0.0, %v1981
        %1983 = vmatmul.bf16.gmra.mxu0 %v1944
        %v1984 = vpop.f32.mrf.mxu0
        %v1985 = vadd.f32 0.0, %v1984
        %v1986 = vpop.f32.mrf.mxu0
        %v1987 = vadd.f32 0.0, %v1986
        %1988 = vmatmul.bf16.gmra.mxu0 %v1946
        %v1989 = vpop.f32.mrf.mxu0
        %v1990 = vadd.f32 0.0, %v1989
        %v1991 = vpop.f32.mrf.mxu0
        %v1992 = vadd.f32 0.0, %v1991
        %1993 = vmatmul.bf16.gmra.mxu0 %v1948
        %v1994 = vpop.f32.mrf.mxu0
        %v1995 = vadd.f32 0.0, %v1994
        %v1996 = vpop.f32.mrf.mxu0
        %v1997 = vadd.f32 0.0, %v1996
        %1998 = vmatmul.bf16.gmra.mxu0 %v1950
        %v1999 = vpop.f32.mrf.mxu0
        %v2000 = vadd.f32 0.0, %v1999
        %v2001 = vpop.f32.mrf.mxu0
        %v2002 = vadd.f32 0.0, %v2001
        %2003 = vdwg.mxu0
        %v2004 = vadd.f32 %v1684, %v1965
        %v2005 = vadd.f32 %v1686, %v1967
        %v2006 = vadd.f32 %v1689, %v1970
        %v2007 = vadd.f32 %v1691, %v1972
        %v2008 = vadd.f32 %v1694, %v1975
        %v2009 = vadd.f32 %v1696, %v1977
        %v2010 = vadd.f32 %v1699, %v1980
        %v2011 = vadd.f32 %v1701, %v1982
        %v2012 = vadd.f32 %v1704, %v1985
        %v2013 = vadd.f32 %v1706, %v1987
        %v2014 = vadd.f32 %v1709, %v1990
        %v2015 = vadd.f32 %v1711, %v1992
        %v2016 = vadd.f32 %v1714, %v1995
        %v2017 = vadd.f32 %v1716, %v1997
        %v2018 = vadd.f32 %v1719, %v2000
        %v2019 = vadd.f32 %v1721, %v2002
        %v2020 = vld [vmem:[%s6] sm:$0x1]
        %v2022 = vperm.slane %v2020, 0
        %v2024 = vadd.f32 %v2004, %v2022
        %v2025 = vadd.f32 %v2005, %v2022
        %v2026 = vadd.f32 %v2006, %v2022
        %v2027 = vadd.f32 %v2007, %v2022
        %v2028 = vadd.f32 %v2008, %v2022
        %v2029 = vadd.f32 %v2009, %v2022
        %v2030 = vadd.f32 %v2010, %v2022
        %v2031 = vadd.f32 %v2011, %v2022
        %v2032 = vadd.f32 %v2012, %v2022
        %v2033 = vadd.f32 %v2013, %v2022
        %v2034 = vadd.f32 %v2014, %v2022
        %v2035 = vadd.f32 %v2015, %v2022
        %v2036 = vadd.f32 %v2016, %v2022
        %v2037 = vadd.f32 %v2017, %v2022
        %v2038 = vadd.f32 %v2018, %v2022
        %v2039 = vadd.f32 %v2019, %v2022
        %v2040 = vmax.f32 %v2024, 0.0
        %v2041 = vmax.f32 %v2025, 0.0
        %v2042 = vmax.f32 %v2026, 0.0
        %v2043 = vmax.f32 %v2027, 0.0
        %v2044 = vmax.f32 %v2028, 0.0
        %v2045 = vmax.f32 %v2029, 0.0
        %v2046 = vmax.f32 %v2030, 0.0
        %v2047 = vmax.f32 %v2031, 0.0
        %v2048 = vmax.f32 %v2032, 0.0
        %v2049 = vmax.f32 %v2033, 0.0
        %v2050 = vmax.f32 %v2034, 0.0
        %v2051 = vmax.f32 %v2035, 0.0
        %v2052 = vmax.f32 %v2036, 0.0
        %v2053 = vmax.f32 %v2037, 0.0
        %v2054 = vmax.f32 %v2038, 0.0
        %v2055 = vmax.f32 %v2039, 0.0
        %v2056 = vpack.c.bf16 %v2041, %v2040
        %v2057 = vpack.c.bf16 %v2043, %v2042
        %v2058 = vpack.c.bf16 %v2045, %v2044
        %v2059 = vpack.c.bf16 %v2047, %v2046
        %v2060 = vpack.c.bf16 %v2049, %v2048
        %v2061 = vpack.c.bf16 %v2051, %v2050
        %v2062 = vpack.c.bf16 %v2053, %v2052
        %v2063 = vpack.c.bf16 %v2055, %v2054
        %v2064 = vld [vmem:[%s7] sm:$0x3]
        %v2065 = vld [vmem:[%s8] sm:$0x1]
        %v2067 = vperm.slane %v2065, 0
        %v2070 = vsel %vm1175, %v2056, 0
        %v2073 = vsel %vm1175, %v2057, 0
        %v2076 = vsel %vm1175, %v2058, 0
        %v2079 = vsel %vm1175, %v2059, 0
        %v2082 = vsel %vm1175, %v2060, 0
        %v2085 = vsel %vm1175, %v2061, 0
        %v2088 = vsel %vm1175, %v2062, 0
        %v2091 = vsel %vm1175, %v2063, 0
        %vm2093 = vcmask 1041408
        %v2095 = vsel %vm2093, %v2064, 0
        %2097 = vmatpush.bf16.msra.mxu0 0
        %2098 = vmatpush.bf16.msra.mxu0 0
        %2099 = vmatpush.bf16.msra.mxu0 0
        %2100 = vmatpush.bf16.msra.mxu0 0
        %2101 = vmatpush.bf16.msra.mxu0 0
        %2102 = vmatpush.bf16.msra.mxu0 0
        %2103 = vmatpush.bf16.msra.mxu0 0
        %2104 = vmatpush.bf16.msra.mxu0 %v2095
        %2105 = vmatmul.bf16.gmra.mxu0 %v2070
        %v2106 = vpop.f32.mrf.mxu0
        %v2107 = vadd.f32 %v2067, %v2106
        %v2108 = vpop.f32.mrf.mxu0
        %v2109 = vadd.f32 %v2067, %v2108
        %2110 = vmatmul.bf16.gmra.mxu0 %v2073
        %v2111 = vpop.f32.mrf.mxu0
        %v2112 = vadd.f32 %v2067, %v2111
        %v2113 = vpop.f32.mrf.mxu0
        %v2114 = vadd.f32 %v2067, %v2113
        %2115 = vmatmul.bf16.gmra.mxu0 %v2076
        %v2116 = vpop.f32.mrf.mxu0
        %v2117 = vadd.f32 %v2067, %v2116
        %v2118 = vpop.f32.mrf.mxu0
        %v2119 = vadd.f32 %v2067, %v2118
        %2120 = vmatmul.bf16.gmra.mxu0 %v2079
        %v2121 = vpop.f32.mrf.mxu0
        %v2122 = vadd.f32 %v2067, %v2121
        %v2123 = vpop.f32.mrf.mxu0
        %v2124 = vadd.f32 %v2067, %v2123
        %2125 = vmatmul.bf16.gmra.mxu0 %v2082
        %v2126 = vpop.f32.mrf.mxu0
        %v2127 = vadd.f32 %v2067, %v2126
        %v2128 = vpop.f32.mrf.mxu0
        %v2129 = vadd.f32 %v2067, %v2128
        %2130 = vmatmul.bf16.gmra.mxu0 %v2085
        %v2131 = vpop.f32.mrf.mxu0
        %v2132 = vadd.f32 %v2067, %v2131
        %v2133 = vpop.f32.mrf.mxu0
        %v2134 = vadd.f32 %v2067, %v2133
        %2135 = vmatmul.bf16.gmra.mxu0 %v2088
        %v2136 = vpop.f32.mrf.mxu0
        %v2137 = vadd.f32 %v2067, %v2136
        %v2138 = vpop.f32.mrf.mxu0
        %v2139 = vadd.f32 %v2067, %v2138
        %2140 = vmatmul.bf16.gmra.mxu0 %v2091
        %v2141 = vpop.f32.mrf.mxu0
        %v2142 = vadd.f32 %v2067, %v2141
        %v2143 = vpop.f32.mrf.mxu0
        %v2144 = vadd.f32 %v2067, %v2143
        %2145 = vdwg.mxu0
        %v2146 = vld [vmem:[%s419] sm:$0xf]
        %v2147 = vld [vmem:[%s419 + $0x4] sm:$0xf]
        %v2148 = vld [vmem:[%s419 + $0x8] sm:$0xf]
        %v2149 = vld [vmem:[%s419 + $0xc] sm:$0xf]
        %v2150 = vld [vmem:[%s419 + $0x10] sm:$0xf]
        %v2151 = vld [vmem:[%s419 + $0x14] sm:$0xf]
        %v2152 = vld [vmem:[%s419 + $0x18] sm:$0xf]
        %v2153 = vld [vmem:[%s419 + $0x1c] sm:$0xf]
        %v2154 = vld [vmem:[%s419 + $0x20] sm:$0xf]
        %v2155 = vld [vmem:[%s419 + $0x24] sm:$0xf]
        %v2156 = vld [vmem:[%s419 + $0x28] sm:$0xf]
        %v2157 = vld [vmem:[%s419 + $0x2c] sm:$0xf]
        %v2158 = vld [vmem:[%s419 + $0x30] sm:$0xf]
        %v2159 = vld [vmem:[%s419 + $0x34] sm:$0xf]
        %v2160 = vld [vmem:[%s419 + $0x38] sm:$0xf]
        %v2161 = vld [vmem:[%s419 + $0x3c] sm:$0xf]
        %v2162 = vunpack.c.l.bf16 %v2146
        %v2163 = vunpack.c.l.bf16 %v2147
        %v2164 = vunpack.c.l.bf16 %v2148
        %v2165 = vunpack.c.l.bf16 %v2149
        %v2166 = vunpack.c.l.bf16 %v2150
        %v2167 = vunpack.c.l.bf16 %v2151
        %v2168 = vunpack.c.l.bf16 %v2152
        %v2169 = vunpack.c.l.bf16 %v2153
        %v2170 = vunpack.c.l.bf16 %v2154
        %v2171 = vunpack.c.l.bf16 %v2155
        %v2172 = vunpack.c.l.bf16 %v2156
        %v2173 = vunpack.c.l.bf16 %v2157
        %v2174 = vunpack.c.l.bf16 %v2158
        %v2175 = vunpack.c.l.bf16 %v2159
        %v2176 = vunpack.c.l.bf16 %v2160
        %v2177 = vunpack.c.l.bf16 %v2161
        %v2178 = vadd.f32 %v2107, %v2162
        %v2179 = vadd.f32 %v2109, %v2163
        %v2180 = vadd.f32 %v2112, %v2164
        %v2181 = vadd.f32 %v2114, %v2165
        %v2182 = vadd.f32 %v2117, %v2166
        %v2183 = vadd.f32 %v2119, %v2167
        %v2184 = vadd.f32 %v2122, %v2168
        %v2185 = vadd.f32 %v2124, %v2169
        %v2186 = vadd.f32 %v2127, %v2170
        %v2187 = vadd.f32 %v2129, %v2171
        %v2188 = vadd.f32 %v2132, %v2172
        %v2189 = vadd.f32 %v2134, %v2173
        %v2190 = vadd.f32 %v2137, %v2174
        %v2191 = vadd.f32 %v2139, %v2175
        %v2192 = vadd.f32 %v2142, %v2176
        %v2193 = vadd.f32 %v2144, %v2177
        %v2194 = vmax.f32 %v2178, 0.0
        %v2195 = vmax.f32 %v2179, 0.0
        %v2196 = vmax.f32 %v2180, 0.0
        %v2197 = vmax.f32 %v2181, 0.0
        %v2198 = vmax.f32 %v2182, 0.0
        %v2199 = vmax.f32 %v2183, 0.0
        %v2200 = vmax.f32 %v2184, 0.0
        %v2201 = vmax.f32 %v2185, 0.0
        %v2202 = vmax.f32 %v2186, 0.0
        %v2203 = vmax.f32 %v2187, 0.0
        %v2204 = vmax.f32 %v2188, 0.0
        %v2205 = vmax.f32 %v2189, 0.0
        %v2206 = vmax.f32 %v2190, 0.0
        %v2207 = vmax.f32 %v2191, 0.0
        %v2208 = vmax.f32 %v2192, 0.0
        %v2209 = vmax.f32 %v2193, 0.0
        %v2210 = vpack.c.bf16 %v2194, %v2194
        %v2211 = vpack.c.bf16 %v2195, %v2195
        %v2212 = vpack.c.bf16 %v2196, %v2196
        %v2213 = vpack.c.bf16 %v2197, %v2197
        %v2214 = vpack.c.bf16 %v2198, %v2198
        %v2215 = vpack.c.bf16 %v2199, %v2199
        %v2216 = vpack.c.bf16 %v2200, %v2200
        %v2217 = vpack.c.bf16 %v2201, %v2201
        %v2218 = vpack.c.bf16 %v2202, %v2202
        %v2219 = vpack.c.bf16 %v2203, %v2203
        %v2220 = vpack.c.bf16 %v2204, %v2204
        %v2221 = vpack.c.bf16 %v2205, %v2205
        %v2222 = vpack.c.bf16 %v2206, %v2206
        %v2223 = vpack.c.bf16 %v2207, %v2207
        %v2224 = vpack.c.bf16 %v2208, %v2208
        %v2225 = vpack.c.bf16 %v2209, %v2209
        %vm2226 = vcmask 125952
        %2227 = vst.msk [vmem:[%s484] sm:$0xf] %vm2226, %v2210
        %2228 = vst.msk [vmem:[%s484 + $0x4] sm:$0xf] %vm2226, %v2211
        %2229 = vst.msk [vmem:[%s484 + $0x8] sm:$0xf] %vm2226, %v2212
        %2230 = vst.msk [vmem:[%s484 + $0xc] sm:$0xf] %vm2226, %v2213
        %2231 = vst.msk [vmem:[%s484 + $0x10] sm:$0xf] %vm2226, %v2214
        %2232 = vst.msk [vmem:[%s484 + $0x14] sm:$0xf] %vm2226, %v2215
        %2233 = vst.msk [vmem:[%s484 + $0x18] sm:$0xf] %vm2226, %v2216
        %2234 = vst.msk [vmem:[%s484 + $0x1c] sm:$0xf] %vm2226, %v2217
        %2235 = vst.msk [vmem:[%s484 + $0x20] sm:$0xf] %vm2226, %v2218
        %2236 = vst.msk [vmem:[%s484 + $0x24] sm:$0xf] %vm2226, %v2219
        %2237 = vst.msk [vmem:[%s484 + $0x28] sm:$0xf] %vm2226, %v2220
        %2238 = vst.msk [vmem:[%s484 + $0x2c] sm:$0xf] %vm2226, %v2221
        %2239 = vst.msk [vmem:[%s484 + $0x30] sm:$0xf] %vm2226, %v2222
        %2240 = vst.msk [vmem:[%s484 + $0x34] sm:$0xf] %vm2226, %v2223
        %2241 = vst.msk [vmem:[%s484 + $0x38] sm:$0xf] %vm2226, %v2224
        %2242 = vst.msk [vmem:[%s484 + $0x3c] sm:$0xf] %vm2226, %v2225
        %s2243 = sand.u32 %s277, 1
        %s2244 = scalar_lea.sflag [#allocation5], %s2243
        %s2245 = sand.u32 %s277, 1
        %s2246 = smul.addr %s2245, 64
        %s2247 = scalar_lea.vmem [#allocation9], %s2246
        // Predicated region
        $region77: #{tpu_custom_call.1} parent=55 // pred_check
          %p2248 = pneg %p287
        $region78: #{tpu_custom_call.1} parent=55 // pred_check_branch
          %2250 = sbr.rel (%p2248) target = $region80
        $region79: #{tpu_custom_call.1} parent=55 // pred_region
          %s2251 = smul.u32 8, %s34
          %2253 = vsyncadd %s2244, 0
          %s2254 = smul.addr %s2251, 2
          %s2255 = smul.addr %s33, 32
          %s2256 = sadd.s32 %s2254, %s2255
          %s2257 = smul.addr %s2256, 4
          %s2258 = scalar_lea.hbm %s9, %s2257
          %s2259 = sshll.u32 %s2247, 4
          %s2260 = int_to_ptr.vmem [resolvable:$true] %s2259
          %s2261 = sshll.u32 %s2258, 4
          %s2262 = int_to_ptr.hbm [resolvable:$true] %s2261
          %2267 = dma.vmem_to_hbm [thread:$0]  %s2260, 1024, %s2262, %s2244, 64, 64, 4
        $region80: #{tpu_custom_call.1} parent=55 // pred_fallthru
          _
      $region56: #{tpu_custom_call.1} parent=5 // pred_fallthru
        _
      %p2268 = scmp.le.s32.totalorder 2, %s24
      // Predicated region
      $region81: #{tpu_custom_call.1} parent=5 // pred_check
        %p2269 = pneg %p2268
      $region82: #{tpu_custom_call.1} parent=5 // pred_check_branch
        %2271 = sbr.rel (%p2269) target = $region84
      $region83: #{tpu_custom_call.1} parent=5 // pred_region
        %s2272 = ssub.s32 %s24, 2
        // Predicated region
        $region85: #{tpu_custom_call.1} parent=83 // pred_check
          %p2273 = pneg %p293
        $region86: #{tpu_custom_call.1} parent=83 // pred_check_branch
          %2275 = sbr.rel (%p2273) target = $region88
        $region87: #{tpu_custom_call.1} parent=83 // pred_region
          %s2276 = sand.u32 %s278, 1
          %s2277 = scalar_lea.sflag [#allocation5], %s2276
          %s2278 = sand.u32 %s278, 1
          %s2279 = smul.addr %s2278, 64
          %s2280 = scalar_lea.vmem [#allocation9], %s2279
          %2282 = dma.done %s2277, 1024
        $region88: #{tpu_custom_call.1} parent=83 // pred_fallthru
          _
      $region84: #{tpu_custom_call.1} parent=5 // pred_fallthru
        _
    $region6: #{tpu_custom_call.1} parent=1 // loop_footer
      %s28 = sadd.s32 1, %s24
    $region7: #{tpu_custom_call.1} parent=1 // loop_footer_branch
      %23 = sbr.rel target = $region3
    $region8: #{tpu_custom_call.1} parent=1 // loop_exit
      _
    %2283 = vsyncpa [#allocation4], 1
    %s2284 = scalar_lea.sflag [#allocation4], 1
    %2285 = vsyncpa %s2284, 1
    %2286 = vsyncpa [#allocation7], 1
    %s2287 = scalar_lea.sflag [#allocation7], 1
    %2288 = vsyncpa %s2287, 1
    %2289 = vsyncpa [#allocation5], 1
    %s2290 = scalar_lea.sflag [#allocation5], 1
    %2291 = vsyncpa %s2290, 1

// kernel: tpu_custom_call.1
$region0: #{tpu_custom_call.1}
  #allocation0 [shape = 'u32[]', space=smem, size = 0x4, offset = 0x4, fixed_abs, tag = 'smem constant byte address 0x4 - core index']
  #allocation1 [shape = 'u32[72,128]{1,0:T(1,128)}', space=vmem, size = 0x9000, scoped, tag = 'internal scratch']
  #allocation2 [shape = 'bf16[10,18,4]{2,1,0:T(8,128)(2,1)}', space=vmem, size = 0xf000, scoped, tag = 'scratch operand']
  %s0 = inlined_call_operand.hbm [shape: bf16[2,16,16,16], index: 0, kind: input, shape index: {}]
  %s1 = inlined_call_operand.hbm [shape: bf16[2,16,16,16], index: 1, kind: input, shape index: {}]
  %s2 = inlined_call_operand.hbm [shape: bf16[2,16,16,16], index: 2, kind: input, shape index: {}]
  %s3 = inlined_call_operand.vmem [shape: bf16[16,4], index: 3, kind: input, shape index: {}]
  %s4 = inlined_call_operand.vmem [shape: f32[1,4], index: 4, kind: input, shape index: {}]
  %s5 = inlined_call_operand.vmem [shape: bf16[3,12,4], index: 5, kind: input, shape index: {}]
  %s6 = inlined_call_operand.vmem [shape: f32[1,4], index: 6, kind: input, shape index: {}]
  %s7 = inlined_call_operand.vmem [shape: bf16[4,16], index: 7, kind: input, shape index: {}]
  %s8 = inlined_call_operand.vmem [shape: f32[1,16], index: 8, kind: input, shape index: {}]
  %s9 = inlined_call_operand.hbm [shape: bf16[2,16,16,16], index: 9, kind: output, shape index: {}]
  %s10 = sld [smem:[#allocation0]]
  $region89: #{tpu_custom_call.1} parent=0
    _
  %s12 = ssub.s32 1, %s10
  %s13 = scalar_select 0, %s12, %s10
  $region1: #{tpu_custom_call.1} parent=0
    #allocation3 [shape = 'u8[65536]{0}', space=vmem, size = 0x10000, scoped, tag = 'input window, operand 0']
    #allocation4 [shape = 's32[2]{0}', space=sflag, size = 0x8, scoped, tag = 'scoped memory for tpu_custom_call.1']
    #allocation5 [shape = 's32[2]{0}', space=sflag, size = 0x8, scoped, tag = 'scoped memory for tpu_custom_call.1']
    #allocation6 [shape = 'u8[8192]{0}', space=vmem, size = 0x2000, scoped, tag = 'input window, operand 1']
    #allocation7 [shape = 's32[2]{0}', space=sflag, size = 0x8, scoped, tag = 'scoped memory for tpu_custom_call.1']
    #allocation8 [shape = 'u8[8192]{0}', space=vmem, size = 0x2000, scoped, tag = 'input window, operand 2']
    #allocation9 [shape = 'u8[65536]{0}', space=vmem, size = 0x10000, scoped, tag = 'output window, operand 0']
    %14 = vsyncpa [#allocation4], 0
    %s15 = scalar_lea.sflag [#allocation4], 1
    %16 = vsyncpa %s15, 0
    %17 = vsyncpa [#allocation7], 0
    %s18 = scalar_lea.sflag [#allocation7], 1
    %19 = vsyncpa %s18, 0
    %20 = vsyncpa [#allocation5], 0
    %s21 = scalar_lea.sflag [#allocation5], 1
    %22 = vsyncpa %s21, 0
    loop: start=0, step=1, limit=6
    $region2: #{tpu_custom_call.1} parent=1 // loop_pre_header
      _
    $region3: #{tpu_custom_call.1} parent=1 // loop_header
      %s24 = sphi 0, %s28
      %p25 = scmp.ge.s32.totalorder %s24, 6
      %s31 = sphi 0, %s43
      %s32 = sphi 0, %s39
      %s33 = sphi 0, %s31
      %s34 = sphi 0, %s32
      %s35 = sphi 0, %s33
      %s36 = sphi 0, %s34
      %s48 = sphi 0, %s50
      %s51 = sphi 0, %s48
      %s52 = sphi 0, %s51
      %s68 = sphi 0, %s52
      %s84 = sphi 0, %s86
      %s87 = sphi 0, %s84
      %s88 = sphi 0, %s87
      %s104 = sphi 0, %s88
      %s120 = sphi 0, %s122
      %s123 = sphi 0, %s120
      %s124 = sphi 0, %s123
      %s140 = sphi 0, %s124
      %s144 = sphi 0, %s144
      %s146 = sphi 0, %s144
      %s147 = sphi 0, %s146
      %s161 = sphi 0, %s147
      %s165 = sphi 0, %s165
      %s167 = sphi 0, %s165
      %s168 = sphi 0, %s167
      %s182 = sphi 0, %s168
      %s186 = sphi 0, %s186
      %s188 = sphi 0, %s186
      %s189 = sphi 0, %s188
      %s203 = sphi 0, %s189
      %s207 = sphi 0, %s207
      %s209 = sphi 0, %s207
      %s210 = sphi 0, %s209
      %s224 = sphi 0, %s210
      %s228 = sphi 0, %s228
      %s230 = sphi 0, %s228
      %s231 = sphi 0, %s230
      %s245 = sphi 0, %s231
      %s249 = sphi 0, %s249
      %s251 = sphi 0, %s249
      %s252 = sphi 0, %s251
      %s266 = sphi 0, %s252
      %s274 = sphi 0, %s276
      %s277 = sphi 0, %s274
      %s278 = sphi 0, %s277
      %s294 = sphi 0, %s278
    $region4: #{tpu_custom_call.1} parent=1 // loop_header_branch
      %27 = sbr.rel (%p25) target = $region8
    $region5: #{tpu_custom_call.1} parent=1 // loop_body
      %s29 = ssub.s32 %s24, 1
      %s30 = ssub.s32 %s24, 2
      %s37 = sadd.s32 1, %s32
      %p38 = scmp.ge.s32.totalorder %s37, 2
      %s39 = scalar_select %p38, 0, %s37
      %s40 = sadd.s32 1, %s31
      %s41 = scalar_select %p38, %s40, %s31
      %p42 = scmp.ge.s32.totalorder %s41, 2
      %s43 = scalar_select %p42, 0, %s41
      %s44 = ssub.s32 %s31, %s43
      %s45 = ssub.s32 %s32, %s39
      %s46 = sor.u32 %s44, %s45
      %p47 = scmp.eq.s32.totalorder %s46, 0
      %s49 = sadd.s32 %s48, 1
      %s50 = scalar_select %p47, %s48, %s49
      %p53 = pneg %p47
      %p54 = scmp.eq.s32.totalorder %s24, 3
      %p55 = por %p53, %p54
      %p56 = scmp.ne.s32.totalorder %s48, %s51
      %p57 = scmp.eq.s32.totalorder %s24, 0
      %p58 = por %p56, %p57
      %p59 = scmp.ne.s32.totalorder %s48, %s51
      %p60 = scmp.eq.s32.totalorder %s29, 3
      %p61 = por %p59, %p60
      %p62 = scmp.ne.s32.totalorder %s51, %s52
      %p63 = scmp.eq.s32.totalorder %s29, 0
      %p64 = por %p62, %p63
      %p65 = scmp.ne.s32.totalorder %s51, %s52
      %p66 = scmp.eq.s32.totalorder %s30, 3
      %p67 = por %p65, %p66
      %p69 = scmp.ne.s32.totalorder %s52, %s68
      %p70 = scmp.eq.s32.totalorder %s30, 0
      %p71 = por %p69, %p70
      %s72 = smul.u32 %s32, 8
      %s73 = ssub.s32 %s72, 1
      %p74 = scmp.gt.s32.totalorder %s73, 0
      %s75 = scalar_select %p74, %s73, 0
      %s76 = smul.u32 %s39, 8
      %s77 = ssub.s32 %s76, 1
      %p78 = scmp.gt.s32.totalorder %s77, 0
      %s79 = scalar_select %p78, %s77, 0
      %s80 = ssub.s32 %s31, %s43
      %s81 = ssub.s32 %s75, %s79
      %s82 = sor.u32 %s80, %s81
      %p83 = scmp.eq.s32.totalorder %s82, 0
      %s85 = sadd.s32 %s84, 1
      %s86 = scalar_select %p83, %s84, %s85
      %p89 = pneg %p83
      %p90 = scmp.eq.s32.totalorder %s24, 3
      %p91 = por %p89, %p90
      %p92 = scmp.ne.s32.totalorder %s84, %s87
      %p93 = scmp.eq.s32.totalorder %s24, 0
      %p94 = por %p92, %p93
      %p95 = scmp.ne.s32.totalorder %s84, %s87
      %p96 = scmp.eq.s32.totalorder %s29, 3
      %p97 = por %p95, %p96
      %p98 = scmp.ne.s32.totalorder %s87, %s88
      %p99 = scmp.eq.s32.totalorder %s29, 0
      %p100 = por %p98, %p99
      %p101 = scmp.ne.s32.totalorder %s87, %s88
      %p102 = scmp.eq.s32.totalorder %s30, 3
      %p103 = por %p101, %p102
      %p105 = scmp.ne.s32.totalorder %s88, %s104
      %p106 = scmp.eq.s32.totalorder %s30, 0
      %p107 = por %p105, %p106
      %s108 = sadd.s32 %s32, 1
      %s109 = smul.u32 %s108, 8
      %p110 = scmp.lt.s32.totalorder %s109, 15
      %s111 = scalar_select %p110, %s109, 15
      %s112 = sadd.s32 %s39, 1
      %s113 = smul.u32 %s112, 8
      %p114 = scmp.lt.s32.totalorder %s113, 15
      %s115 = scalar_select %p114, %s113, 15
      %s116 = ssub.s32 %s31, %s43
      %s117 = ssub.s32 %s111, %s115
      %s118 = sor.u32 %s116, %s117
      %p119 = scmp.eq.s32.totalorder %s118, 0
      %s121 = sadd.s32 %s120, 1
      %s122 = scalar_select %p119, %s120, %s121
      %p125 = pneg %p119
      %p126 = scmp.eq.s32.totalorder %s24, 3
      %p127 = por %p125, %p126
      %p128 = scmp.ne.s32.totalorder %s120, %s123
      %p129 = scmp.eq.s32.totalorder %s24, 0
      %p130 = por %p128, %p129
      %p131 = scmp.ne.s32.totalorder %s120, %s123
      %p132 = scmp.eq.s32.totalorder %s29, 3
      %p133 = por %p131, %p132
      %p134 = scmp.ne.s32.totalorder %s123, %s124
      %p135 = scmp.eq.s32.totalorder %s29, 0
      %p136 = por %p134, %p135
      %p137 = scmp.ne.s32.totalorder %s123, %s124
      %p138 = scmp.eq.s32.totalorder %s30, 3
      %p139 = por %p137, %p138
      %p141 = scmp.ne.s32.totalorder %s124, %s140
      %p142 = scmp.eq.s32.totalorder %s30, 0
      %p143 = por %p141, %p142
      %s145 = sadd.s32 %s144, 1
      %p148 = scmp.eq.s32.totalorder %s24, 3
      %p149 = scmp.ne.s32.totalorder %s144, %s146
      %p150 = scmp.eq.s32.totalorder %s24, 0
      %p151 = por %p149, %p150
      %p152 = scmp.ne.s32.totalorder %s144, %s146
      %p153 = scmp.eq.s32.totalorder %s29, 3
      %p154 = por %p152, %p153
      %p155 = scmp.ne.s32.totalorder %s146, %s147
      %p156 = scmp.eq.s32.totalorder %s29, 0
      %p157 = por %p155, %p156
      %p158 = scmp.ne.s32.totalorder %s146, %s147
      %p159 = scmp.eq.s32.totalorder %s30, 3
      %p160 = por %p158, %p159
      %p162 = scmp.ne.s32.totalorder %s147, %s161
      %p163 = scmp.eq.s32.totalorder %s30, 0
      %p164 = por %p162, %p163
      %s166 = sadd.s32 %s165, 1
      %p169 = scmp.eq.s32.totalorder %s24, 3
      %p170 = scmp.ne.s32.totalorder %s165, %s167
      %p171 = scmp.eq.s32.totalorder %s24, 0
      %p172 = por %p170, %p171
      %p173 = scmp.ne.s32.totalorder %s165, %s167
      %p174 = scmp.eq.s32.totalorder %s29, 3
      %p175 = por %p173, %p174
      %p176 = scmp.ne.s32.totalorder %s167, %s168
      %p177 = scmp.eq.s32.totalorder %s29, 0
      %p178 = por %p176, %p177
      %p179 = scmp.ne.s32.totalorder %s167, %s168
      %p180 = scmp.eq.s32.totalorder %s30, 3
      %p181 = por %p179, %p180
      %p183 = scmp.ne.s32.totalorder %s168, %s182
      %p184 = scmp.eq.s32.totalorder %s30, 0
      %p185 = por %p183, %p184
      %s187 = sadd.s32 %s186, 1
      %p190 = scmp.eq.s32.totalorder %s24, 3
      %p191 = scmp.ne.s32.totalorder %s186, %s188
      %p192 = scmp.eq.s32.totalorder %s24, 0
      %p193 = por %p191, %p192
      %p194 = scmp.ne.s32.totalorder %s186, %s188
      %p195 = scmp.eq.s32.totalorder %s29, 3
      %p196 = por %p194, %p195
      %p197 = scmp.ne.s32.totalorder %s188, %s189
      %p198 = scmp.eq.s32.totalorder %s29, 0
      %p199 = por %p197, %p198
      %p200 = scmp.ne.s32.totalorder %s188, %s189
      %p201 = scmp.eq.s32.totalorder %s30, 3
      %p202 = por %p200, %p201
      %p204 = scmp.ne.s32.totalorder %s189, %s203
      %p205 = scmp.eq.s32.totalorder %s30, 0
      %p206 = por %p204, %p205
      %s208 = sadd.s32 %s207, 1
      %p211 = scmp.eq.s32.totalorder %s24, 3
      %p212 = scmp.ne.s32.totalorder %s207, %s209
      %p213 = scmp.eq.s32.totalorder %s24, 0
      %p214 = por %p212, %p213
      %p215 = scmp.ne.s32.totalorder %s207, %s209
      %p216 = scmp.eq.s32.totalorder %s29, 3
      %p217 = por %p215, %p216
      %p218 = scmp.ne.s32.totalorder %s209, %s210
      %p219 = scmp.eq.s32.totalorder %s29, 0
      %p220 = por %p218, %p219
      %p221 = scmp.ne.s32.totalorder %s209, %s210
      %p222 = scmp.eq.s32.totalorder %s30, 3
      %p223 = por %p221, %p222
      %p225 = scmp.ne.s32.totalorder %s210, %s224
      %p226 = scmp.eq.s32.totalorder %s30, 0
      %p227 = por %p225, %p226
      %s229 = sadd.s32 %s228, 1
      %p232 = scmp.eq.s32.totalorder %s24, 3
      %p233 = scmp.ne.s32.totalorder %s228, %s230
      %p234 = scmp.eq.s32.totalorder %s24, 0
      %p235 = por %p233, %p234
      %p236 = scmp.ne.s32.totalorder %s228, %s230
      %p237 = scmp.eq.s32.totalorder %s29, 3
      %p238 = por %p236, %p237
      %p239 = scmp.ne.s32.totalorder %s230, %s231
      %p240 = scmp.eq.s32.totalorder %s29, 0
      %p241 = por %p239, %p240
      %p242 = scmp.ne.s32.totalorder %s230, %s231
      %p243 = scmp.eq.s32.totalorder %s30, 3
      %p244 = por %p242, %p243
      %p246 = scmp.ne.s32.totalorder %s231, %s245
      %p247 = scmp.eq.s32.totalorder %s30, 0
      %p248 = por %p246, %p247
      %s250 = sadd.s32 %s249, 1
      %p253 = scmp.eq.s32.totalorder %s24, 3
      %p254 = scmp.ne.s32.totalorder %s249, %s251
      %p255 = scmp.eq.s32.totalorder %s24, 0
      %p256 = por %p254, %p255
      %p257 = scmp.ne.s32.totalorder %s249, %s251
      %p258 = scmp.eq.s32.totalorder %s29, 3
      %p259 = por %p257, %p258
      %p260 = scmp.ne.s32.totalorder %s251, %s252
      %p261 = scmp.eq.s32.totalorder %s29, 0
      %p262 = por %p260, %p261
      %p263 = scmp.ne.s32.totalorder %s251, %s252
      %p264 = scmp.eq.s32.totalorder %s30, 3
      %p265 = por %p263, %p264
      %p267 = scmp.ne.s32.totalorder %s252, %s266
      %p268 = scmp.eq.s32.totalorder %s30, 0
      %p269 = por %p267, %p268
      %s270 = ssub.s32 %s31, %s43
      %s271 = ssub.s32 %s32, %s39
      %s272 = sor.u32 %s270, %s271
      %p273 = scmp.eq.s32.totalorder %s272, 0
      %s275 = sadd.s32 %s274, 1
      %s276 = scalar_select %p273, %s274, %s275
      %p279 = pneg %p273
      %p280 = scmp.eq.s32.totalorder %s24, 3
      %p281 = por %p279, %p280
      %p282 = scmp.ne.s32.totalorder %s274, %s277
      %p283 = scmp.eq.s32.totalorder %s24, 0
      %p284 = por %p282, %p283
      %p285 = scmp.ne.s32.totalorder %s274, %s277
      %p286 = scmp.eq.s32.totalorder %s29, 3
      %p287 = por %p285, %p286
      %p288 = scmp.ne.s32.totalorder %s277, %s278
      %p289 = scmp.eq.s32.totalorder %s29, 0
      %p290 = por %p288, %p289
      %p291 = scmp.ne.s32.totalorder %s277, %s278
      %p292 = scmp.eq.s32.totalorder %s30, 3
      %p293 = por %p291, %p292
      %p295 = scmp.ne.s32.totalorder %s278, %s294
      %p296 = scmp.eq.s32.totalorder %s30, 0
      %p297 = por %p295, %p296
      %p298 = scmp.le.s32.totalorder 1, %s24
      %p299 = scmp.lt.s32.totalorder %s24, 5
      %p300 = pnand %p298, %p299
      %p301 = pneg %p300
      // Predicated region
      $region9: #{tpu_custom_call.1} parent=5 // pred_check
        _
      $region10: #{tpu_custom_call.1} parent=5 // pred_check_branch
        %303 = sbr.rel (%p300) target = $region12
      $region11: #{tpu_custom_call.1} parent=5 // pred_region
        %s304 = ssub.s32 %s24, 1
        // Predicated region
        $region13: #{tpu_custom_call.1} parent=11 // pred_check
          %p305 = pneg %p157
        $region14: #{tpu_custom_call.1} parent=11 // pred_check_branch
          %307 = sbr.rel (%p305) target = $region16
        $region15: #{tpu_custom_call.1} parent=11 // pred_region
          _
        $region16: #{tpu_custom_call.1} parent=11 // pred_fallthru
          _
        // Predicated region
        $region17: #{tpu_custom_call.1} parent=11 // pred_check
          %p308 = pneg %p178
        $region18: #{tpu_custom_call.1} parent=11 // pred_check_branch
          %310 = sbr.rel (%p308) target = $region20
        $region19: #{tpu_custom_call.1} parent=11 // pred_region
          _
        $region20: #{tpu_custom_call.1} parent=11 // pred_fallthru
          _
        // Predicated region
        $region21: #{tpu_custom_call.1} parent=11 // pred_check
          %p311 = pneg %p199
        $region22: #{tpu_custom_call.1} parent=11 // pred_check_branch
          %313 = sbr.rel (%p311) target = $region24
        $region23: #{tpu_custom_call.1} parent=11 // pred_region
          _
        $region24: #{tpu_custom_call.1} parent=11 // pred_fallthru
          _
        // Predicated region
        $region25: #{tpu_custom_call.1} parent=11 // pred_check
          %p314 = pneg %p220
        $region26: #{tpu_custom_call.1} parent=11 // pred_check_branch
          %316 = sbr.rel (%p314) target = $region28
        $region27: #{tpu_custom_call.1} parent=11 // pred_region
          _
        $region28: #{tpu_custom_call.1} parent=11 // pred_fallthru
          _
        // Predicated region
        $region29: #{tpu_custom_call.1} parent=11 // pred_check
          %p317 = pneg %p241
        $region30: #{tpu_custom_call.1} parent=11 // pred_check_branch
          %319 = sbr.rel (%p317) target = $region32
        $region31: #{tpu_custom_call.1} parent=11 // pred_region
          _
        $region32: #{tpu_custom_call.1} parent=11 // pred_fallthru
          _
        // Predicated region
        $region33: #{tpu_custom_call.1} parent=11 // pred_check
          %p320 = pneg %p262
        $region34: #{tpu_custom_call.1} parent=11 // pred_check_branch
          %322 = sbr.rel (%p320) target = $region36
        $region35: #{tpu_custom_call.1} parent=11 // pred_region
          _
        $region36: #{tpu_custom_call.1} parent=11 // pred_fallthru
          _
      $region12: #{tpu_custom_call.1} parent=5 // pred_fallthru
        _
      %p323 = scmp.lt.s32.totalorder %s24, 4
      // Predicated region
      $region37: #{tpu_custom_call.1} parent=5 // pred_check
        %p324 = pneg %p323
      $region38: #{tpu_custom_call.1} parent=5 // pred_check_branch
        %326 = sbr.rel (%p324) target = $region40
      $region39: #{tpu_custom_call.1} parent=5 // pred_region
        // Predicated region
        $region41: #{tpu_custom_call.1} parent=39 // pred_check
          %p327 = pneg %p58
        $region42: #{tpu_custom_call.1} parent=39 // pred_check_branch
          %329 = sbr.rel (%p327) target = $region44
        $region43: #{tpu_custom_call.1} parent=39 // pred_region
          %s330 = sand.u32 %s48, 1
          %s331 = scalar_lea.sflag [#allocation4], %s330
          %s332 = sand.u32 %s48, 1
          %s333 = smul.addr %s332, 64
          %s334 = scalar_lea.vmem [#allocation3], %s333
          %s335 = smul.u32 8, %s32
          %337 = vsyncadd %s331, 0
          %s338 = smul.addr %s335, 2
          %s339 = smul.addr %s31, 32
          %s340 = sadd.s32 %s338, %s339
          %s341 = smul.addr %s340, 4
          %s342 = scalar_lea.hbm %s0, %s341
          %s343 = sshll.u32 %s342, 4
          %s344 = int_to_ptr.hbm [resolvable:$true] %s343
          %s345 = sshll.u32 %s334, 4
          %s346 = int_to_ptr.vmem [resolvable:$true] %s345
          %351 = dma.hbm_to_vmem [thread:$0]  %s344, 1024, %s346, %s331, 64, 64, 4
        $region44: #{tpu_custom_call.1} parent=39 // pred_fallthru
          _
        // Predicated region
        $region45: #{tpu_custom_call.1} parent=39 // pred_check
          %p352 = pneg %p94
        $region46: #{tpu_custom_call.1} parent=39 // pred_check_branch
          %354 = sbr.rel (%p352) target = $region48
        $region47: #{tpu_custom_call.1} parent=39 // pred_region
          %s355 = sand.u32 %s24, 1
          %s356 = scalar_lea.sflag [#allocation7], %s355
          %s357 = sand.u32 %s84, 1
          %s358 = smul.addr %s357, 8
          %s359 = scalar_lea.vmem [#allocation6], %s358
          %s360 = smul.u32 %s32, 8
          %s361 = ssub.s32 %s360, 1
          %p362 = scmp.gt.s32.totalorder %s361, 0
          %s363 = scalar_select %p362, %s361, 0
          %365 = vsyncadd %s356, 0
          %s366 = smul.addr %s363, 2
          %s367 = smul.addr %s31, 32
          %s368 = sadd.s32 %s366, %s367
          %s369 = smul.addr %s368, 4
          %s370 = scalar_lea.hbm %s1, %s369
          %s371 = sshll.u32 %s370, 4
          %s372 = int_to_ptr.hbm [resolvable:$true] %s371
          %s373 = sshll.u32 %s359, 4
          %s374 = int_to_ptr.vmem [resolvable:$true] %s373
          %379 = dma.hbm_to_vmem [thread:$0]  %s372, 128, %s374, %s356, 64, 64, 4
        $region48: #{tpu_custom_call.1} parent=39 // pred_fallthru
          _
        // Predicated region
        $region49: #{tpu_custom_call.1} parent=39 // pred_check
          %p380 = pneg %p130
        $region50: #{tpu_custom_call.1} parent=39 // pred_check_branch
          %382 = sbr.rel (%p380) target = $region52
        $region51: #{tpu_custom_call.1} parent=39 // pred_region
          %s383 = sand.u32 %s24, 1
          %s384 = scalar_lea.sflag [#allocation7], %s383
          %s385 = sand.u32 %s120, 1
          %s386 = smul.addr %s385, 8
          %s387 = scalar_lea.vmem [#allocation8], %s386
          %s388 = sadd.s32 %s32, 1
          %s389 = smul.u32 %s388, 8
          %p390 = scmp.lt.s32.totalorder %s389, 15
          %s391 = scalar_select %p390, %s389, 15
          %393 = vsyncadd %s384, 0
          %s394 = smul.addr %s391, 2
          %s395 = smul.addr %s31, 32
          %s396 = sadd.s32 %s394, %s395
          %s397 = smul.addr %s396, 4
          %s398 = scalar_lea.hbm %s2, %s397
          %s399 = sshll.u32 %s398, 4
          %s400 = int_to_ptr.hbm [resolvable:$true] %s399
          %s401 = sshll.u32 %s387, 4
          %s402 = int_to_ptr.vmem [resolvable:$true] %s401
          %407 = dma.hbm_to_vmem [thread:$0]  %s400, 128, %s402, %s384, 64, 64, 4
        $region52: #{tpu_custom_call.1} parent=39 // pred_fallthru
          _
      $region40: #{tpu_custom_call.1} parent=5 // pred_fallthru
        _
      %p408 = scmp.le.s32.totalorder 1, %s24
      %p409 = scmp.lt.s32.totalorder %s24, 5
      %p410 = pnand %p408, %p409
      %p411 = pneg %p410
      // Predicated region
      $region53: #{tpu_custom_call.1} parent=5 // pred_check
        _
      $region54: #{tpu_custom_call.1} parent=5 // pred_check_branch
        %413 = sbr.rel (%p410) target = $region56
      $region55: #{tpu_custom_call.1} parent=5 // pred_region
        %s414 = ssub.s32 %s24, 1
        %s415 = sand.u32 %s51, 1
        %s416 = scalar_lea.sflag [#allocation4], %s415
        %s417 = sand.u32 %s51, 1
        %s418 = smul.addr %s417, 64
        %s419 = scalar_lea.vmem [#allocation3], %s418
        // Predicated region
        $region57: #{tpu_custom_call.1} parent=55 // pred_check
          %p420 = pneg %p64
        $region58: #{tpu_custom_call.1} parent=55 // pred_check_branch
          %422 = sbr.rel (%p420) target = $region60
        $region59: #{tpu_custom_call.1} parent=55 // pred_region
          %424 = dma.done %s416, 1024
        $region60: #{tpu_custom_call.1} parent=55 // pred_fallthru
          _
        %s425 = sand.u32 %s29, 1
        %s426 = scalar_lea.sflag [#allocation7], %s425
        %s427 = sand.u32 %s87, 1
        %s428 = smul.addr %s427, 8
        %s429 = scalar_lea.vmem [#allocation6], %s428
        // Predicated region
        $region61: #{tpu_custom_call.1} parent=55 // pred_check
          %p430 = pneg %p100
        $region62: #{tpu_custom_call.1} parent=55 // pred_check_branch
          %432 = sbr.rel (%p430) target = $region64
        $region63: #{tpu_custom_call.1} parent=55 // pred_region
          %434 = dma.done %s426, 128
        $region64: #{tpu_custom_call.1} parent=55 // pred_fallthru
          _
        %s435 = sand.u32 %s29, 1
        %s436 = scalar_lea.sflag [#allocation7], %s435
        %s437 = sand.u32 %s123, 1
        %s438 = smul.addr %s437, 8
        %s439 = scalar_lea.vmem [#allocation8], %s438
        // Predicated region
        $region65: #{tpu_custom_call.1} parent=55 // pred_check
          %p440 = pneg %p136
        $region66: #{tpu_custom_call.1} parent=55 // pred_check_branch
          %442 = sbr.rel (%p440) target = $region68
        $region67: #{tpu_custom_call.1} parent=55 // pred_region
          %444 = dma.done %s436, 128
        $region68: #{tpu_custom_call.1} parent=55 // pred_fallthru
          _
        %s445 = sand.u32 %s51, 1
        %s446 = scalar_lea.sflag [#allocation4], %s445
        %s447 = sand.u32 %s51, 1
        %s448 = smul.addr %s447, 64
        %s449 = scalar_lea.vmem [#allocation3], %s448
        %p450 = pneg %p64
        %p451 = pneg %p61
        %s452 = sand.u32 %s29, 1
        %s453 = scalar_lea.sflag [#allocation7], %s452
        %s454 = sand.u32 %s87, 1
        %s455 = smul.addr %s454, 8
        %s456 = scalar_lea.vmem [#allocation6], %s455
        %p457 = pneg %p100
        %p458 = pneg %p97
        %s459 = sand.u32 %s29, 1
        %s460 = scalar_lea.sflag [#allocation7], %s459
        %s461 = sand.u32 %s123, 1
        %s462 = smul.addr %s461, 8
        %s463 = scalar_lea.vmem [#allocation8], %s462
        %p464 = pneg %p136
        %p465 = pneg %p133
        %p466 = pneg %p157
        %p467 = pneg %p154
        %p468 = pneg %p178
        %p469 = pneg %p175
        %p470 = pneg %p199
        %p471 = pneg %p196
        %p472 = pneg %p220
        %p473 = pneg %p217
        %p474 = pneg %p241
        %p475 = pneg %p238
        %p476 = pneg %p262
        %p477 = pneg %p259
        %p478 = pneg %p290
        %p479 = pneg %p287
        %s480 = sand.u32 %s277, 1
        %s481 = scalar_lea.sflag [#allocation5], %s480
        %s482 = sand.u32 %s277, 1
        %s483 = smul.addr %s482, 64
        %s484 = scalar_lea.vmem [#allocation9], %s483
        %s485 = smul.u32 8, %s34
        %s486 = smul.u32 %s34, 8
        %s487 = ssub.s32 %s486, 1
        %p488 = scmp.gt.s32.totalorder %s487, 0
        %s489 = scalar_select %p488, %s487, 0
        %s490 = sadd.s32 %s34, 1
        %s491 = smul.u32 %s490, 8
        %p492 = scmp.lt.s32.totalorder %s491, 15
        %s493 = scalar_select %p492, %s491, 15
        %s494 = smul.u32 8, %s34
        %v496 = vld [vmem:[%s429] sm:$0xf]
        %v497 = vld [vmem:[%s429 + $0x4] sm:$0xf]
        %v498 = vld [vmem:[%s419] sm:$0xf]
        %v499 = vld [vmem:[%s419 + $0x4] sm:$0xf]
        %v500 = vld [vmem:[%s419 + $0x8] sm:$0xf]
        %v501 = vld [vmem:[%s419 + $0xc] sm:$0xf]
        %v502 = vld [vmem:[%s419 + $0x10] sm:$0xf]
        %v503 = vld [vmem:[%s419 + $0x14] sm:$0xf]
        %v504 = vld [vmem:[%s419 + $0x18] sm:$0xf]
        %v505 = vld [vmem:[%s419 + $0x1c] sm:$0xf]
        %v506 = vld [vmem:[%s419 + $0x20] sm:$0xf]
        %v507 = vld [vmem:[%s419 + $0x24] sm:$0xf]
        %v508 = vld [vmem:[%s419 + $0x28] sm:$0xf]
        %v509 = vld [vmem:[%s419 + $0x2c] sm:$0xf]
        %v510 = vld [vmem:[%s419 + $0x30] sm:$0xf]
        %v511 = vld [vmem:[%s419 + $0x34] sm:$0xf]
        %v512 = vld [vmem:[%s419 + $0x38] sm:$0xf]
        %v513 = vld [vmem:[%s419 + $0x3c] sm:$0xf]
        %v514 = vld [vmem:[%s439] sm:$0xf]
        %v515 = vld [vmem:[%s439 + $0x4] sm:$0xf]
        %v516 = vld [vmem:[%s3] sm:$0xf]
        %v517 = vld [vmem:[%s3 + $0x4] sm:$0xf]
        %v518 = vld [vmem:[%s4] sm:$0x1]
        %v520 = vperm.slane %v518, 0
        %v542 = vunpack.c.l.b16 %v496
        %v543 = vunpack.c.l.b16 %v497
        %v544 = vunpack.c.l.b16 %v498
        %v545 = vunpack.c.l.b16 %v499
        %v546 = vunpack.c.l.b16 %v500
        %v547 = vunpack.c.l.b16 %v501
        %v548 = vunpack.c.l.b16 %v502
        %v549 = vunpack.c.l.b16 %v503
        %v550 = vunpack.c.l.b16 %v504
        %v551 = vunpack.c.l.b16 %v505
        %v552 = vunpack.c.l.b16 %v506
        %v553 = vunpack.c.l.b16 %v507
        %v554 = vunpack.c.l.b16 %v508
        %v555 = vunpack.c.l.b16 %v509
        %v556 = vunpack.c.l.b16 %v510
        %v557 = vunpack.c.l.b16 %v511
        %v558 = vunpack.c.l.b16 %v512
        %v559 = vunpack.c.l.b16 %v513
        %v560 = vunpack.c.l.b16 %v514
        %v561 = vunpack.c.l.b16 %v515
        %v562 = vpack.c.b16 %v543, %v542
        %v563 = vpack.c.b16 %v545, %v544
        %v564 = vpack.c.b16 %v547, %v546
        %v565 = vpack.c.b16 %v549, %v548
        %v566 = vpack.c.b16 %v551, %v550
        %v567 = vpack.c.b16 %v553, %v552
        %v568 = vpack.c.b16 %v555, %v554
        %v569 = vpack.c.b16 %v557, %v556
        %v570 = vpack.c.b16 %v559, %v558
        %v571 = vpack.c.b16 %v561, %v560
        %v574 = vunpack.c.l.b16 %v516
        %v575 = vunpack.c.l.b16 %v517
        %v576 = vpack.c.b16 %v575, %v574
        %vm578 = vcmask 130048
        %v580 = vsel %vm578, %v562, 0
        %v583 = vsel %vm578, %v563, 0
        %v586 = vsel %vm578, %v564, 0
        %v589 = vsel %vm578, %v565, 0
        %v592 = vsel %vm578, %v566, 0
        %v595 = vsel %vm578, %v567, 0
        %v598 = vsel %vm578, %v568, 0
        %v601 = vsel %vm578, %v569, 0
        %v604 = vsel %vm578, %v570, 0
        %v607 = vsel %vm578, %v571, 0
        %609 = vmatpush.bf16.msra.mxu0 0
        %610 = vmatpush.bf16.msra.mxu0 0
        %611 = vmatpush.bf16.msra.mxu0 0
        %612 = vmatpush.bf16.msra.mxu0 0
        %613 = vmatpush.bf16.msra.mxu0 0
        %614 = vmatpush.bf16.msra.mxu0 0
        %615 = vmatpush.bf16.msra.mxu0 0
        %616 = vmatpush.bf16.msra.mxu0 %v576
        %617 = vmatmul.bf16.gmra.mxu0 %v580
        %v618 = vpop.f32.mrf.mxu0
        %v619 = vadd.f32 %v520, %v618
        %v620 = vpop.f32.mrf.mxu0
        %v621 = vadd.f32 %v520, %v620
        %622 = vmatmul.bf16.gmra.mxu0 %v583
        %v623 = vpop.f32.mrf.mxu0
        %v624 = vadd.f32 %v520, %v623
        %v625 = vpop.f32.mrf.mxu0
        %v626 = vadd.f32 %v520, %v625
        %627 = vmatmul.bf16.gmra.mxu0 %v586
        %v628 = vpop.f32.mrf.mxu0
        %v629 = vadd.f32 %v520, %v628
        %v630 = vpop.f32.mrf.mxu0
        %v631 = vadd.f32 %v520, %v630
        %632 = vmatmul.bf16.gmra.mxu0 %v589
        %v633 = vpop.f32.mrf.mxu0
        %v634 = vadd.f32 %v520, %v633
        %v635 = vpop.f32.mrf.mxu0
        %v636 = vadd.f32 %v520, %v635
        %637 = vmatmul.bf16.gmra.mxu0 %v592
        %v638 = vpop.f32.mrf.mxu0
        %v639 = vadd.f32 %v520, %v638
        %v640 = vpop.f32.mrf.mxu0
        %v641 = vadd.f32 %v520, %v640
        %642 = vmatmul.bf16.gmra.mxu0 %v595
        %v643 = vpop.f32.mrf.mxu0
        %v644 = vadd.f32 %v520, %v643
        %v645 = vpop.f32.mrf.mxu0
        %v646 = vadd.f32 %v520, %v645
        %647 = vmatmul.bf16.gmra.mxu0 %v598
        %v648 = vpop.f32.mrf.mxu0
        %v649 = vadd.f32 %v520, %v648
        %v650 = vpop.f32.mrf.mxu0
        %v651 = vadd.f32 %v520, %v650
        %652 = vmatmul.bf16.gmra.mxu0 %v601
        %v653 = vpop.f32.mrf.mxu0
        %v654 = vadd.f32 %v520, %v653
        %v655 = vpop.f32.mrf.mxu0
        %v656 = vadd.f32 %v520, %v655
        %657 = vmatmul.bf16.gmra.mxu0 %v604
        %v658 = vpop.f32.mrf.mxu0
        %v659 = vadd.f32 %v520, %v658
        %v660 = vpop.f32.mrf.mxu0
        %v661 = vadd.f32 %v520, %v660
        %662 = vmatmul.bf16.gmra.mxu0 %v607
        %v663 = vpop.f32.mrf.mxu0
        %v664 = vadd.f32 %v520, %v663
        %v665 = vpop.f32.mrf.mxu0
        %v666 = vadd.f32 %v520, %v665
        %667 = vdwg.mxu0
        %v668 = vmax.f32 %v619, 0.0
        %v669 = vmax.f32 %v621, 0.0
        %v670 = vmax.f32 %v624, 0.0
        %v671 = vmax.f32 %v626, 0.0
        %v672 = vmax.f32 %v629, 0.0
        %v673 = vmax.f32 %v631, 0.0
        %v674 = vmax.f32 %v634, 0.0
        %v675 = vmax.f32 %v636, 0.0
        %v676 = vmax.f32 %v639, 0.0
        %v677 = vmax.f32 %v641, 0.0
        %v678 = vmax.f32 %v644, 0.0
        %v679 = vmax.f32 %v646, 0.0
        %v680 = vmax.f32 %v649, 0.0
        %v681 = vmax.f32 %v651, 0.0
        %v682 = vmax.f32 %v654, 0.0
        %v683 = vmax.f32 %v656, 0.0
        %v684 = vmax.f32 %v659, 0.0
        %v685 = vmax.f32 %v661, 0.0
        %v686 = vmax.f32 %v664, 0.0
        %v687 = vmax.f32 %v666, 0.0
        %v688 = vpack.c.bf16 %v668, %v668
        %v689 = vpack.c.bf16 %v669, %v669
        %v690 = vpack.c.bf16 %v670, %v670
        %v691 = vpack.c.bf16 %v671, %v671
        %v692 = vpack.c.bf16 %v672, %v672
        %v693 = vpack.c.bf16 %v673, %v673
        %v694 = vpack.c.bf16 %v674, %v674
        %v695 = vpack.c.bf16 %v675, %v675
        %v696 = vpack.c.bf16 %v676, %v676
        %v697 = vpack.c.bf16 %v677, %v677
        %v698 = vpack.c.bf16 %v678, %v678
        %v699 = vpack.c.bf16 %v679, %v679
        %v700 = vpack.c.bf16 %v680, %v680
        %v701 = vpack.c.bf16 %v681, %v681
        %v702 = vpack.c.bf16 %v682, %v682
        %v703 = vpack.c.bf16 %v683, %v683
        %v704 = vpack.c.bf16 %v684, %v684
        %v705 = vpack.c.bf16 %v685, %v685
        %v706 = vpack.c.bf16 %v686, %v686
        %v707 = vpack.c.bf16 %v687, %v687
        %vm708 = vcmask 24576
        %vm709 = vsmask.f32 256
        %vm710 = vmand %vm708, %vm709
        %v711 = vld [vmem:[#allocation2] sm:$0x1]
        %v712 = vsel %vm710, 0, %v711
        %713 = vst [vmem:[#allocation2] sm:$0x1] %v712
        %v714 = vld [vmem:[#allocation2 + $0xc] sm:$0x1]
        %v715 = vsel %vm710, 0, %v714
        %716 = vst [vmem:[#allocation2 + $0xc] sm:$0x1] %v715
        %v717 = vld [vmem:[#allocation2 + $0x18] sm:$0x1]
        %v718 = vsel %vm710, 0, %v717
        %719 = vst [vmem:[#allocation2 + $0x18] sm:$0x1] %v718
        %v720 = vld [vmem:[#allocation2 + $0x24] sm:$0x1]
        %v721 = vsel %vm710, 0, %v720
        %722 = vst [vmem:[#allocation2 + $0x24] sm:$0x1] %v721
        %v723 = vld [vmem:[#allocation2 + $0x30] sm:$0x1]
        %v724 = vsel %vm710, 0, %v723
        %725 = vst [vmem:[#allocation2 + $0x30] sm:$0x1] %v724
        %v726 = vld [vmem:[#allocation2 + $0x3c] sm:$0x1]
        %v727 = vsel %vm710, 0, %v726
        %728 = vst [vmem:[#allocation2 + $0x3c] sm:$0x1] %v727
        %v729 = vld [vmem:[#allocation2 + $0x48] sm:$0x1]
        %v730 = vsel %vm710, 0, %v729
        %731 = vst [vmem:[#allocation2 + $0x48] sm:$0x1] %v730
        %v732 = vld [vmem:[#allocation2 + $0x54] sm:$0x1]
        %v733 = vsel %vm710, 0, %v732
        %734 = vst [vmem:[#allocation2 + $0x54] sm:$0x1] %v733
        %v735 = vld [vmem:[#allocation2 + $0x60] sm:$0x1]
        %v736 = vsel %vm710, 0, %v735
        %737 = vst [vmem:[#allocation2 + $0x60] sm:$0x1] %v736
        %v738 = vld [vmem:[#allocation2 + $0x6c] sm:$0x1]
        %v739 = vsel %vm710, 0, %v738
        %740 = vst [vmem:[#allocation2 + $0x6c] sm:$0x1] %v739
        %vm741 = vsmask.f32 7938
        %vm742 = vmand %vm708, %vm741
        %v743 = vld [vmem:[#allocation2 + $0x8] sm:$0x1]
        %v744 = vsel %vm742, 0, %v743
        %745 = vst [vmem:[#allocation2 + $0x8] sm:$0x1] %v744
        %v746 = vld [vmem:[#allocation2 + $0x14] sm:$0x1]
        %v747 = vsel %vm742, 0, %v746
        %748 = vst [vmem:[#allocation2 + $0x14] sm:$0x1] %v747
        %v749 = vld [vmem:[#allocation2 + $0x20] sm:$0x1]
        %v750 = vsel %vm742, 0, %v749
        %751 = vst [vmem:[#allocation2 + $0x20] sm:$0x1] %v750
        %v752 = vld [vmem:[#allocation2 + $0x2c] sm:$0x1]
        %v753 = vsel %vm742, 0, %v752
        %754 = vst [vmem:[#allocation2 + $0x2c] sm:$0x1] %v753
        %v755 = vld [vmem:[#allocation2 + $0x38] sm:$0x1]
        %v756 = vsel %vm742, 0, %v755
        %757 = vst [vmem:[#allocation2 + $0x38] sm:$0x1] %v756
        %v758 = vld [vmem:[#allocation2 + $0x44] sm:$0x1]
        %v759 = vsel %vm742, 0, %v758
        %760 = vst [vmem:[#allocation2 + $0x44] sm:$0x1] %v759
        %v761 = vld [vmem:[#allocation2 + $0x50] sm:$0x1]
        %v762 = vsel %vm742, 0, %v761
        %763 = vst [vmem:[#allocation2 + $0x50] sm:$0x1] %v762
        %v764 = vld [vmem:[#allocation2 + $0x5c] sm:$0x1]
        %v765 = vsel %vm742, 0, %v764
        %766 = vst [vmem:[#allocation2 + $0x5c] sm:$0x1] %v765
        %v767 = vld [vmem:[#allocation2 + $0x68] sm:$0x1]
        %v768 = vsel %vm742, 0, %v767
        %769 = vst [vmem:[#allocation2 + $0x68] sm:$0x1] %v768
        %v770 = vld [vmem:[#allocation2 + $0x74] sm:$0x1]
        %v771 = vsel %vm742, 0, %v770
        %772 = vst [vmem:[#allocation2 + $0x74] sm:$0x1] %v771
        %vm773 = vsmask.f32 4368
        %vm774 = vmor %vm709, %vm773
        %v776 = vshrl.u32 %v688, 16
        %v778 = vrot.slane %v776, 7
        %v779 = vshll.u32 %v688, 16
        %v781 = vor.u32 %v778, %v779
        %v782 = vrot.slane %v778, 4
        %v784 = vshrl.u32 %v689, 16
        %v786 = vrot.slane %v784, 7
        %v787 = vshll.u32 %v689, 16
        %v789 = vor.u32 %v786, %v787
        %v790 = vsel %vm774, %v782, %v789
        %v791 = vrot.slane %v786, 4
        %v793 = vshrl.u32 %v690, 16
        %v795 = vrot.slane %v793, 7
        %v796 = vshll.u32 %v690, 16
        %v798 = vor.u32 %v795, %v796
        %v799 = vrot.slane %v795, 4
        %v801 = vshrl.u32 %v691, 16
        %v803 = vrot.slane %v801, 7
        %v804 = vshll.u32 %v691, 16
        %v806 = vor.u32 %v803, %v804
        %v807 = vsel %vm774, %v799, %v806
        %v808 = vrot.slane %v803, 4
        %v810 = vshrl.u32 %v692, 16
        %v812 = vrot.slane %v810, 7
        %v813 = vshll.u32 %v692, 16
        %v815 = vor.u32 %v812, %v813
        %v816 = vrot.slane %v812, 4
        %v818 = vshrl.u32 %v693, 16
        %v820 = vrot.slane %v818, 7
        %v821 = vshll.u32 %v693, 16
        %v823 = vor.u32 %v820, %v821
        %v824 = vsel %vm774, %v816, %v823
        %v825 = vrot.slane %v820, 4
        %v827 = vshrl.u32 %v694, 16
        %v829 = vrot.slane %v827, 7
        %v830 = vshll.u32 %v694, 16
        %v832 = vor.u32 %v829, %v830
        %v833 = vrot.slane %v829, 4
        %v835 = vshrl.u32 %v695, 16
        %v837 = vrot.slane %v835, 7
        %v838 = vshll.u32 %v695, 16
        %v840 = vor.u32 %v837, %v838
        %v841 = vsel %vm774, %v833, %v840
        %v842 = vrot.slane %v837, 4
        %v844 = vshrl.u32 %v696, 16
        %v846 = vrot.slane %v844, 7
        %v847 = vshll.u32 %v696, 16
        %v849 = vor.u32 %v846, %v847
        %v850 = vrot.slane %v846, 4
        %v852 = vshrl.u32 %v697, 16
        %v854 = vrot.slane %v852, 7
        %v855 = vshll.u32 %v697, 16
        %v857 = vor.u32 %v854, %v855
        %v858 = vsel %vm774, %v850, %v857
        %v859 = vrot.slane %v854, 4
        %v861 = vshrl.u32 %v698, 16
        %v863 = vrot.slane %v861, 7
        %v864 = vshll.u32 %v698, 16
        %v866 = vor.u32 %v863, %v864
        %v867 = vrot.slane %v863, 4
        %v869 = vshrl.u32 %v699, 16
        %v871 = vrot.slane %v869, 7
        %v872 = vshll.u32 %v699, 16
        %v874 = vor.u32 %v871, %v872
        %v875 = vsel %vm774, %v867, %v874
        %v876 = vrot.slane %v871, 4
        %v878 = vshrl.u32 %v700, 16
        %v880 = vrot.slane %v878, 7
        %v881 = vshll.u32 %v700, 16
        %v883 = vor.u32 %v880, %v881
        %v884 = vrot.slane %v880, 4
        %v886 = vshrl.u32 %v701, 16
        %v888 = vrot.slane %v886, 7
        %v889 = vshll.u32 %v701, 16
        %v891 = vor.u32 %v888, %v889
        %v892 = vsel %vm774, %v884, %v891
        %v893 = vrot.slane %v888, 4
        %v895 = vshrl.u32 %v702, 16
        %v897 = vrot.slane %v895, 7
        %v898 = vshll.u32 %v702, 16
        %v900 = vor.u32 %v897, %v898
        %v901 = vrot.slane %v897, 4
        %v903 = vshrl.u32 %v703, 16
        %v905 = vrot.slane %v903, 7
        %v906 = vshll.u32 %v703, 16
        %v908 = vor.u32 %v905, %v906
        %v909 = vsel %vm774, %v901, %v908
        %v910 = vrot.slane %v905, 4
        %v912 = vshrl.u32 %v704, 16
        %v914 = vrot.slane %v912, 7
        %v915 = vshll.u32 %v704, 16
        %v917 = vor.u32 %v914, %v915
        %v918 = vrot.slane %v914, 4
        %v920 = vshrl.u32 %v705, 16
        %v922 = vrot.slane %v920, 7
        %v923 = vshll.u32 %v705, 16
        %v925 = vor.u32 %v922, %v923
        %v926 = vsel %vm774, %v918, %v925
        %v927 = vrot.slane %v922, 4
        %v929 = vshrl.u32 %v706, 16
        %v931 = vrot.slane %v929, 7
        %v932 = vshll.u32 %v706, 16
        %v934 = vor.u32 %v931, %v932
        %v935 = vrot.slane %v931, 4
        %v937 = vshrl.u32 %v707, 16
        %v939 = vrot.slane %v937, 7
        %v940 = vshll.u32 %v707, 16
        %v942 = vor.u32 %v939, %v940
        %v943 = vsel %vm774, %v935, %v942
        %v944 = vrot.slane %v939, 4
        %vm975 = vcmask 27648
        %vm976 = vmand %vm975, %vm741
        %v977 = vld [vmem:[#allocation2] sm:$0xf]
        %v978 = vsel %vm976, %v781, %v977
        %979 = vst [vmem:[#allocation2] sm:$0xf] %v978
        %vm980 = vcmask 27648
        %981 = vst.msk [vmem:[#allocation2 + $0x4] sm:$0xf] %vm980, %v790
        %v982 = vld [vmem:[#allocation2 + $0x8] sm:$0x1]
        %v983 = vsel %vm710, %v791, %v982
        %984 = vst [vmem:[#allocation2 + $0x8] sm:$0x1] %v983
        %v985 = vld [vmem:[#allocation2 + $0xc] sm:$0xf]
        %v986 = vsel %vm976, %v798, %v985
        %987 = vst [vmem:[#allocation2 + $0xc] sm:$0xf] %v986
        %988 = vst.msk [vmem:[#allocation2 + $0x10] sm:$0xf] %vm980, %v807
        %v989 = vld [vmem:[#allocation2 + $0x14] sm:$0x1]
        %v990 = vsel %vm710, %v808, %v989
        %991 = vst [vmem:[#allocation2 + $0x14] sm:$0x1] %v990
        %v992 = vld [vmem:[#allocation2 + $0x18] sm:$0xf]
        %v993 = vsel %vm976, %v815, %v992
        %994 = vst [vmem:[#allocation2 + $0x18] sm:$0xf] %v993
        %995 = vst.msk [vmem:[#allocation2 + $0x1c] sm:$0xf] %vm980, %v824
        %v996 = vld [vmem:[#allocation2 + $0x20] sm:$0x1]
        %v997 = vsel %vm710, %v825, %v996
        %998 = vst [vmem:[#allocation2 + $0x20] sm:$0x1] %v997
        %v999 = vld [vmem:[#allocation2 + $0x24] sm:$0xf]
        %v1000 = vsel %vm976, %v832, %v999
        %1001 = vst [vmem:[#allocation2 + $0x24] sm:$0xf] %v1000
        %1002 = vst.msk [vmem:[#allocation2 + $0x28] sm:$0xf] %vm980, %v841
        %v1003 = vld [vmem:[#allocation2 + $0x2c] sm:$0x1]
        %v1004 = vsel %vm710, %v842, %v1003
        %1005 = vst [vmem:[#allocation2 + $0x2c] sm:$0x1] %v1004
        %v1006 = vld [vmem:[#allocation2 + $0x30] sm:$0xf]
        %v1007 = vsel %vm976, %v849, %v1006
        %1008 = vst [vmem:[#allocation2 + $0x30] sm:$0xf] %v1007
        %1009 = vst.msk [vmem:[#allocation2 + $0x34] sm:$0xf] %vm980, %v858
        %v1010 = vld [vmem:[#allocation2 + $0x38] sm:$0x1]
        %v1011 = vsel %vm710, %v859, %v1010
        %1012 = vst [vmem:[#allocation2 + $0x38] sm:$0x1] %v1011
        %v1013 = vld [vmem:[#allocation2 + $0x3c] sm:$0xf]
        %v1014 = vsel %vm976, %v866, %v1013
        %1015 = vst [vmem:[#allocation2 + $0x3c] sm:$0xf] %v1014
        %1016 = vst.msk [vmem:[#allocation2 + $0x40] sm:$0xf] %vm980, %v875
        %v1017 = vld [vmem:[#allocation2 + $0x44] sm:$0x1]
        %v1018 = vsel %vm710, %v876, %v1017
        %1019 = vst [vmem:[#allocation2 + $0x44] sm:$0x1] %v1018
        %v1020 = vld [vmem:[#allocation2 + $0x48] sm:$0xf]
        %v1021 = vsel %vm976, %v883, %v1020
        %1022 = vst [vmem:[#allocation2 + $0x48] sm:$0xf] %v1021
        %1023 = vst.msk [vmem:[#allocation2 + $0x4c] sm:$0xf] %vm980, %v892
        %v1024 = vld [vmem:[#allocation2 + $0x50] sm:$0x1]
        %v1025 = vsel %vm710, %v893, %v1024
        %1026 = vst [vmem:[#allocation2 + $0x50] sm:$0x1] %v1025
        %v1027 = vld [vmem:[#allocation2 + $0x54] sm:$0xf]
        %v1028 = vsel %vm976, %v900, %v1027
        %1029 = vst [vmem:[#allocation2 + $0x54] sm:$0xf] %v1028
        %1030 = vst.msk [vmem:[#allocation2 + $0x58] sm:$0xf] %vm980, %v909
        %v1031 = vld [vmem:[#allocation2 + $0x5c] sm:$0x1]
        %v1032 = vsel %vm710, %v910, %v1031
        %1033 = vst [vmem:[#allocation2 + $0x5c] sm:$0x1] %v1032
        %v1034 = vld [vmem:[#allocation2 + $0x60] sm:$0xf]
        %v1035 = vsel %vm976, %v917, %v1034
        %1036 = vst [vmem:[#allocation2 + $0x60] sm:$0xf] %v1035
        %1037 = vst.msk [vmem:[#allocation2 + $0x64] sm:$0xf] %vm980, %v926
        %v1038 = vld [vmem:[#allocation2 + $0x68] sm:$0x1]
        %v1039 = vsel %vm710, %v927, %v1038
        %1040 = vst [vmem:[#allocation2 + $0x68] sm:$0x1] %v1039
        %v1041 = vld [vmem:[#allocation2 + $0x6c] sm:$0xf]
        %v1042 = vsel %vm976, %v934, %v1041
        %1043 = vst [vmem:[#allocation2 + $0x6c] sm:$0xf] %v1042
        %1044 = vst.msk [vmem:[#allocation2 + $0x70] sm:$0xf] %vm980, %v943
        %v1045 = vld [vmem:[#allocation2 + $0x74] sm:$0x1]
        %v1046 = vsel %vm710, %v944, %v1045
        %1047 = vst [vmem:[#allocation2 + $0x74] sm:$0x1] %v1046
        %p1048 = scmp.eq.s32.totalorder %s34, 0
        // Predicated region
        $region69: #{tpu_custom_call.1} parent=55 // pred_check
          %p1049 = pneg %p1048
        $region70: #{tpu_custom_call.1} parent=55 // pred_check_branch
          %1051 = sbr.rel (%p1049) target = $region72
        $region71: #{tpu_custom_call.1} parent=55 // pred_region
          %v1052 = vld [vmem:[#allocation2] sm:$0xf]
          %v1053 = vsel %vm976, 0, %v1052
          %1054 = vst [vmem:[#allocation2] sm:$0xf] %v1053
          %1055 = vst.msk [vmem:[#allocation2 + $0x4] sm:$0xf] %vm980, 0
          %v1056 = vld [vmem:[#allocation2 + $0x8] sm:$0x1]
          %v1057 = vsel %vm710, 0, %v1056
          %1058 = vst [vmem:[#allocation2 + $0x8] sm:$0x1] %v1057
        $region72: #{tpu_custom_call.1} parent=55 // pred_fallthru
          _
        %p1059 = scmp.eq.s32.totalorder %s34, 1
        // Predicated region
        $region73: #{tpu_custom_call.1} parent=55 // pred_check
          %p1060 = pneg %p1059
        $region74: #{tpu_custom_call.1} parent=55 // pred_check_branch
          %1062 = sbr.rel (%p1060) target = $region76
        $region75: #{tpu_custom_call.1} parent=55 // pred_region
          %s1063 = scalar_lea.vmem [#allocation2], 108
          %v1064 = vld [vmem:[%s1063] sm:$0xf]
          %v1065 = vsel %vm976, 0, %v1064
          %1066 = vst [vmem:[%s1063] sm:$0xf] %v1065
          %1067 = vst.msk [vmem:[%s1063 + $0x4] sm:$0xf] %vm980, 0
          %v1068 = vld [vmem:[%s1063 + $0x8] sm:$0x1]
          %v1069 = vsel %vm710, 0, %v1068
          %1070 = vst [vmem:[%s1063 + $0x8] sm:$0x1] %v1069
        $region76: #{tpu_custom_call.1} parent=55 // pred_fallthru
          _
        %v1071 = vld [vmem:[#allocation2] sm:$0xf]
        %v1072 = vld [vmem:[#allocation2 + $0x4] sm:$0xf]
        %v1073 = vld [vmem:[#allocation2 + $0xc] sm:$0xf]
        %v1074 = vld [vmem:[#allocation2 + $0x10] sm:$0xf]
        %v1075 = vld [vmem:[#allocation2 + $0x18] sm:$0xf]
        %v1076 = vld [vmem:[#allocation2 + $0x1c] sm:$0xf]
        %v1077 = vld [vmem:[#allocation2 + $0x24] sm:$0xf]
        %v1078 = vld [vmem:[#allocation2 + $0x28] sm:$0xf]
        %v1079 = vld [vmem:[#allocation2 + $0x30] sm:$0xf]
        %v1080 = vld [vmem:[#allocation2 + $0x34] sm:$0xf]
        %v1081 = vld [vmem:[#allocation2 + $0x3c] sm:$0xf]
        %v1082 = vld [vmem:[#allocation2 + $0x40] sm:$0xf]
        %v1083 = vld [vmem:[#allocation2 + $0x48] sm:$0xf]
        %v1084 = vld [vmem:[#allocation2 + $0x4c] sm:$0xf]
        %v1085 = vld [vmem:[#allocation2 + $0x54] sm:$0xf]
        %v1086 = vld [vmem:[#allocation2 + $0x58] sm:$0xf]
        %v1087 = vld [vmem:[#allocation2 + $0x60] sm:$0xf]
        %v1088 = vld [vmem:[#allocation2 + $0x64] sm:$0xf]
        %v1089 = vld [vmem:[#allocation2 + $0x6c] sm:$0xf]
        %v1090 = vld [vmem:[#allocation2 + $0x70] sm:$0xf]
        %v1091 = vld [vmem:[%s5] sm:$0xf]
        %v1092 = vld [vmem:[%s5 + $0x4] sm:$0x3]
        %v1109 = vunpack.c.l.b16 %v1071
        %v1110 = vunpack.c.l.b16 %v1072
        %v1111 = vunpack.c.l.b16 %v1073
        %v1112 = vunpack.c.l.b16 %v1074
        %v1113 = vunpack.c.l.b16 %v1075
        %v1114 = vunpack.c.l.b16 %v1076
        %v1115 = vunpack.c.l.b16 %v1077
        %v1116 = vunpack.c.l.b16 %v1078
        %v1117 = vunpack.c.l.b16 %v1079
        %v1118 = vunpack.c.l.b16 %v1080
        %v1119 = vunpack.c.l.b16 %v1081
        %v1120 = vunpack.c.l.b16 %v1082
        %v1121 = vunpack.c.l.b16 %v1083
        %v1122 = vunpack.c.l.b16 %v1084
        %v1123 = vunpack.c.l.b16 %v1085
        %v1124 = vunpack.c.l.b16 %v1086
        %v1125 = vpack.c.b16 %v1110, %v1109
        %v1126 = vpack.c.b16 %v1112, %v1111
        %v1127 = vpack.c.b16 %v1114, %v1113
        %v1128 = vpack.c.b16 %v1116, %v1115
        %v1129 = vpack.c.b16 %v1118, %v1117
        %v1130 = vpack.c.b16 %v1120, %v1119
        %v1131 = vpack.c.b16 %v1122, %v1121
        %v1132 = vpack.c.b16 %v1124, %v1123
        %v1135 = vunpack.c.l.b16 %v1087
        %v1136 = vunpack.c.l.b16 %v1088
        %v1137 = vpack.c.b16 %v1136, %v1135
        %1138 = vrot.lane.b32.xlu0 %v1126, 4
        %v1139 = vpop.permute.xlu0 %1138
        %1140 = vrot.lane.b32.xlu0 %v1127, 4
        %v1141 = vpop.permute.xlu0 %1140
        %1142 = vrot.lane.b32.xlu0 %v1128, 4
        %v1143 = vpop.permute.xlu0 %1142
        %1144 = vrot.lane.b32.xlu0 %v1129, 4
        %v1145 = vpop.permute.xlu0 %1144
        %1146 = vrot.lane.b32.xlu0 %v1130, 4
        %v1147 = vpop.permute.xlu0 %1146
        %1148 = vrot.lane.b32.xlu0 %v1131, 4
        %v1149 = vpop.permute.xlu0 %1148
        %1150 = vrot.lane.b32.xlu0 %v1132, 4
        %v1151 = vpop.permute.xlu0 %1150
        %1152 = vrot.lane.b32.xlu0 %v1137, 4
        %v1153 = vpop.permute.xlu0 %1152
        %v1156 = vunpack.c.l.b16 %v1089
        %v1157 = vunpack.c.l.b16 %v1090
        %v1158 = vpack.c.b16 %v1157, %v1156
        %1159 = vrot.lane.b32.xlu0 %v1127, 8
        %v1160 = vpop.permute.xlu0 %1159
        %1161 = vrot.lane.b32.xlu0 %v1128, 8
        %v1162 = vpop.permute.xlu0 %1161
        %1163 = vrot.lane.b32.xlu0 %v1129, 8
        %v1164 = vpop.permute.xlu0 %1163
        %1165 = vrot.lane.b32.xlu0 %v1130, 8
        %v1166 = vpop.permute.xlu0 %1165
        %1167 = vrot.lane.b32.xlu0 %v1131, 8
        %v1168 = vpop.permute.xlu0 %1167
        %1169 = vrot.lane.b32.xlu0 %v1132, 8
        %v1170 = vpop.permute.xlu0 %1169
        %1171 = vrot.lane.b32.xlu0 %v1137, 8
        %v1172 = vpop.permute.xlu0 %1171
        %1173 = vrot.lane.b32.xlu0 %v1158, 8
        %v1174 = vpop.permute.xlu0 %1173
        %vm1175 = vcmask 31744
        %v1178 = vsel %vm1175, %v1125, %v1139
        %v1181 = vsel %vm1175, %v1126, %v1141
        %v1184 = vsel %vm1175, %v1127, %v1143
        %v1187 = vsel %vm1175, %v1128, %v1145
        %v1190 = vsel %vm1175, %v1129, %v1147
        %v1193 = vsel %vm1175, %v1130, %v1149
        %v1196 = vsel %vm1175, %v1131, %v1151
        %v1199 = vsel %vm1175, %v1132, %v1153
        %vm1200 = vcmask 64512
        %v1202 = vsel %vm1200, %v1178, %v1160
        %v1204 = vsel %vm1200, %v1181, %v1162
        %v1206 = vsel %vm1200, %v1184, %v1164
        %v1208 = vsel %vm1200, %v1187, %v1166
        %v1210 = vsel %vm1200, %v1190, %v1168
        %v1212 = vsel %vm1200, %v1193, %v1170
        %v1214 = vsel %vm1200, %v1196, %v1172
        %v1216 = vsel %vm1200, %v1199, %v1174
        %v1217 = vld [vmem:[#allocation2 + $0x8] sm:$0x1]
        %v1218 = vld [vmem:[#allocation2 + $0x14] sm:$0x1]
        %v1219 = vld [vmem:[#allocation2 + $0x20] sm:$0x1]
        %v1220 = vld [vmem:[#allocation2 + $0x2c] sm:$0x1]
        %v1221 = vld [vmem:[#allocation2 + $0x38] sm:$0x1]
        %v1222 = vld [vmem:[#allocation2 + $0x44] sm:$0x1]
        %v1223 = vld [vmem:[#allocation2 + $0x50] sm:$0x1]
        %v1224 = vld [vmem:[#allocation2 + $0x5c] sm:$0x1]
        %v1225 = vld [vmem:[#allocation2 + $0x68] sm:$0x1]
        %v1226 = vld [vmem:[#allocation2 + $0x74] sm:$0x1]
        %s1227 = scalar_lea.vmem %s5, 8
        %v1228 = vld [vmem:[%s1227] sm:$0xf]
        %v1229 = vld [vmem:[%s1227 + $0x4] sm:$0x3]
        %vm1230 = vsmask.f32 3328
        %vm1231 = vsmask.f32 7440
        %vm1232 = vmor %vm1230, %vm1231
        %v1234 = vshrl.u32 %v1071, 16
        %v1236 = vrot.slane %v1234, 4
        %v1237 = vshll.u32 %v1071, 16
        %v1239 = vrot.slane %v1237, 5
        %v1240 = vor.u32 %v1236, %v1239
        %v1241 = vrot.slane %v1240, 4
        %v1243 = vshll.u32 %v1072, 16
        %v1245 = vrot.slane %v1243, 5
        %v1246 = vsel %vm1232, %v1241, %v1245
        %v1247 = vshrl.u32 %v1072, 16
        %v1249 = vrot.slane %v1247, 4
        %v1250 = vor.u32 %v1249, %v1245
        %v1251 = vrot.slane %v1250, 4
        %v1253 = vshll.u32 %v1217, 16
        %v1255 = vrot.slane %v1253, 5
        %v1256 = vsel %vm1232, %v1251, %v1255
        %v1258 = vshrl.u32 %v1073, 16
        %v1260 = vrot.slane %v1258, 4
        %v1261 = vshll.u32 %v1073, 16
        %v1263 = vrot.slane %v1261, 5
        %v1264 = vor.u32 %v1260, %v1263
        %v1265 = vrot.slane %v1264, 4
        %v1267 = vshll.u32 %v1074, 16
        %v1269 = vrot.slane %v1267, 5
        %v1270 = vsel %vm1232, %v1265, %v1269
        %v1271 = vshrl.u32 %v1074, 16
        %v1273 = vrot.slane %v1271, 4
        %v1274 = vor.u32 %v1273, %v1269
        %v1275 = vrot.slane %v1274, 4
        %v1277 = vshll.u32 %v1218, 16
        %v1279 = vrot.slane %v1277, 5
        %v1280 = vsel %vm1232, %v1275, %v1279
        %v1282 = vshrl.u32 %v1075, 16
        %v1284 = vrot.slane %v1282, 4
        %v1285 = vshll.u32 %v1075, 16
        %v1287 = vrot.slane %v1285, 5
        %v1288 = vor.u32 %v1284, %v1287
        %v1289 = vrot.slane %v1288, 4
        %v1291 = vshll.u32 %v1076, 16
        %v1293 = vrot.slane %v1291, 5
        %v1294 = vsel %vm1232, %v1289, %v1293
        %v1295 = vshrl.u32 %v1076, 16
        %v1297 = vrot.slane %v1295, 4
        %v1298 = vor.u32 %v1297, %v1293
        %v1299 = vrot.slane %v1298, 4
        %v1301 = vshll.u32 %v1219, 16
        %v1303 = vrot.slane %v1301, 5
        %v1304 = vsel %vm1232, %v1299, %v1303
        %v1306 = vshrl.u32 %v1077, 16
        %v1308 = vrot.slane %v1306, 4
        %v1309 = vshll.u32 %v1077, 16
        %v1311 = vrot.slane %v1309, 5
        %v1312 = vor.u32 %v1308, %v1311
        %v1313 = vrot.slane %v1312, 4
        %v1315 = vshll.u32 %v1078, 16
        %v1317 = vrot.slane %v1315, 5
        %v1318 = vsel %vm1232, %v1313, %v1317
        %v1319 = vshrl.u32 %v1078, 16
        %v1321 = vrot.slane %v1319, 4
        %v1322 = vor.u32 %v1321, %v1317
        %v1323 = vrot.slane %v1322, 4
        %v1325 = vshll.u32 %v1220, 16
        %v1327 = vrot.slane %v1325, 5
        %v1328 = vsel %vm1232, %v1323, %v1327
        %v1330 = vshrl.u32 %v1079, 16
        %v1332 = vrot.slane %v1330, 4
        %v1333 = vshll.u32 %v1079, 16
        %v1335 = vrot.slane %v1333, 5
        %v1336 = vor.u32 %v1332, %v1335
        %v1337 = vrot.slane %v1336, 4
        %v1339 = vshll.u32 %v1080, 16
        %v1341 = vrot.slane %v1339, 5
        %v1342 = vsel %vm1232, %v1337, %v1341
        %v1343 = vshrl.u32 %v1080, 16
        %v1345 = vrot.slane %v1343, 4
        %v1346 = vor.u32 %v1345, %v1341
        %v1347 = vrot.slane %v1346, 4
        %v1349 = vshll.u32 %v1221, 16
        %v1351 = vrot.slane %v1349, 5
        %v1352 = vsel %vm1232, %v1347, %v1351
        %v1354 = vshrl.u32 %v1081, 16
        %v1356 = vrot.slane %v1354, 4
        %v1357 = vshll.u32 %v1081, 16
        %v1359 = vrot.slane %v1357, 5
        %v1360 = vor.u32 %v1356, %v1359
        %v1361 = vrot.slane %v1360, 4
        %v1363 = vshll.u32 %v1082, 16
        %v1365 = vrot.slane %v1363, 5
        %v1366 = vsel %vm1232, %v1361, %v1365
        %v1367 = vshrl.u32 %v1082, 16
        %v1369 = vrot.slane %v1367, 4
        %v1370 = vor.u32 %v1369, %v1365
        %v1371 = vrot.slane %v1370, 4
        %v1373 = vshll.u32 %v1222, 16
        %v1375 = vrot.slane %v1373, 5
        %v1376 = vsel %vm1232, %v1371, %v1375
        %v1378 = vshrl.u32 %v1083, 16
        %v1380 = vrot.slane %v1378, 4
        %v1381 = vshll.u32 %v1083, 16
        %v1383 = vrot.slane %v1381, 5
        %v1384 = vor.u32 %v1380, %v1383
        %v1385 = vrot.slane %v1384, 4
        %v1387 = vshll.u32 %v1084, 16
        %v1389 = vrot.slane %v1387, 5
        %v1390 = vsel %vm1232, %v1385, %v1389
        %v1391 = vshrl.u32 %v1084, 16
        %v1393 = vrot.slane %v1391, 4
        %v1394 = vor.u32 %v1393, %v1389
        %v1395 = vrot.slane %v1394, 4
        %v1397 = vshll.u32 %v1223, 16
        %v1399 = vrot.slane %v1397, 5
        %v1400 = vsel %vm1232, %v1395, %v1399
        %v1402 = vshrl.u32 %v1085, 16
        %v1404 = vrot.slane %v1402, 4
        %v1405 = vshll.u32 %v1085, 16
        %v1407 = vrot.slane %v1405, 5
        %v1408 = vor.u32 %v1404, %v1407
        %v1409 = vrot.slane %v1408, 4
        %v1411 = vshll.u32 %v1086, 16
        %v1413 = vrot.slane %v1411, 5
        %v1414 = vsel %vm1232, %v1409, %v1413
        %v1415 = vshrl.u32 %v1086, 16
        %v1417 = vrot.slane %v1415, 4
        %v1418 = vor.u32 %v1417, %v1413
        %v1419 = vrot.slane %v1418, 4
        %v1421 = vshll.u32 %v1224, 16
        %v1423 = vrot.slane %v1421, 5
        %v1424 = vsel %vm1232, %v1419, %v1423
        %v1426 = vshrl.u32 %v1087, 16
        %v1428 = vrot.slane %v1426, 4
        %v1429 = vshll.u32 %v1087, 16
        %v1431 = vrot.slane %v1429, 5
        %v1432 = vor.u32 %v1428, %v1431
        %v1433 = vrot.slane %v1432, 4
        %v1435 = vshll.u32 %v1088, 16
        %v1437 = vrot.slane %v1435, 5
        %v1438 = vsel %vm1232, %v1433, %v1437
        %v1439 = vshrl.u32 %v1088, 16
        %v1441 = vrot.slane %v1439, 4
        %v1442 = vor.u32 %v1441, %v1437
        %v1443 = vrot.slane %v1442, 4
        %v1445 = vshll.u32 %v1225, 16
        %v1447 = vrot.slane %v1445, 5
        %v1448 = vsel %vm1232, %v1443, %v1447
        %v1450 = vshrl.u32 %v1089, 16
        %v1452 = vrot.slane %v1450, 4
        %v1453 = vshll.u32 %v1089, 16
        %v1455 = vrot.slane %v1453, 5
        %v1456 = vor.u32 %v1452, %v1455
        %v1457 = vrot.slane %v1456, 4
        %v1459 = vshll.u32 %v1090, 16
        %v1461 = vrot.slane %v1459, 5
        %v1462 = vsel %vm1232, %v1457, %v1461
        %v1463 = vshrl.u32 %v1090, 16
        %v1465 = vrot.slane %v1463, 4
        %v1466 = vor.u32 %v1465, %v1461
        %v1467 = vrot.slane %v1466, 4
        %v1469 = vshll.u32 %v1226, 16
        %v1471 = vrot.slane %v1469, 5
        %v1472 = vsel %vm1232, %v1467, %v1471
        %v1473 = vunpack.c.l.b16 %v1246
        %v1474 = vunpack.c.l.b16 %v1256
        %v1475 = vunpack.c.l.b16 %v1270
        %v1476 = vunpack.c.l.b16 %v1280
        %v1477 = vunpack.c.l.b16 %v1294
        %v1478 = vunpack.c.l.b16 %v1304
        %v1479 = vunpack.c.l.b16 %v1318
        %v1480 = vunpack.c.l.b16 %v1328
        %v1481 = vunpack.c.l.b16 %v1342
        %v1482 = vunpack.c.l.b16 %v1352
        %v1483 = vunpack.c.l.b16 %v1366
        %v1484 = vunpack.c.l.b16 %v1376
        %v1485 = vunpack.c.l.b16 %v1390
        %v1486 = vunpack.c.l.b16 %v1400
        %v1487 = vunpack.c.l.b16 %v1414
        %v1488 = vunpack.c.l.b16 %v1424
        %v1489 = vpack.c.b16 %v1474, %v1473
        %v1490 = vpack.c.b16 %v1476, %v1475
        %v1491 = vpack.c.b16 %v1478, %v1477
        %v1492 = vpack.c.b16 %v1480, %v1479
        %v1493 = vpack.c.b16 %v1482, %v1481
        %v1494 = vpack.c.b16 %v1484, %v1483
        %v1495 = vpack.c.b16 %v1486, %v1485
        %v1496 = vpack.c.b16 %v1488, %v1487
        %v1497 = vunpack.c.l.b16 %v1438
        %v1498 = vunpack.c.l.b16 %v1448
        %v1499 = vpack.c.b16 %v1498, %v1497
        %1500 = vrot.lane.b32.xlu0 %v1490, 4
        %v1501 = vpop.permute.xlu0 %1500
        %1502 = vrot.lane.b32.xlu0 %v1491, 4
        %v1503 = vpop.permute.xlu0 %1502
        %1504 = vrot.lane.b32.xlu0 %v1492, 4
        %v1505 = vpop.permute.xlu0 %1504
        %1506 = vrot.lane.b32.xlu0 %v1493, 4
        %v1507 = vpop.permute.xlu0 %1506
        %1508 = vrot.lane.b32.xlu0 %v1494, 4
        %v1509 = vpop.permute.xlu0 %1508
        %1510 = vrot.lane.b32.xlu0 %v1495, 4
        %v1511 = vpop.permute.xlu0 %1510
        %1512 = vrot.lane.b32.xlu0 %v1496, 4
        %v1513 = vpop.permute.xlu0 %1512
        %1514 = vrot.lane.b32.xlu0 %v1499, 4
        %v1515 = vpop.permute.xlu0 %1514
        %v1516 = vunpack.c.l.b16 %v1462
        %v1517 = vunpack.c.l.b16 %v1472
        %v1518 = vpack.c.b16 %v1517, %v1516
        %1519 = vrot.lane.b32.xlu0 %v1491, 8
        %v1520 = vpop.permute.xlu0 %1519
        %1521 = vrot.lane.b32.xlu0 %v1492, 8
        %v1522 = vpop.permute.xlu0 %1521
        %1523 = vrot.lane.b32.xlu0 %v1493, 8
        %v1524 = vpop.permute.xlu0 %1523
        %1525 = vrot.lane.b32.xlu0 %v1494, 8
        %v1526 = vpop.permute.xlu0 %1525
        %1527 = vrot.lane.b32.xlu0 %v1495, 8
        %v1528 = vpop.permute.xlu0 %1527
        %1529 = vrot.lane.b32.xlu0 %v1496, 8
        %v1530 = vpop.permute.xlu0 %1529
        %1531 = vrot.lane.b32.xlu0 %v1499, 8
        %v1532 = vpop.permute.xlu0 %1531
        %1533 = vrot.lane.b32.xlu0 %v1518, 8
        %v1534 = vpop.permute.xlu0 %1533
        %v1537 = vsel %vm1175, %v1489, %v1501
        %v1540 = vsel %vm1175, %v1490, %v1503
        %v1543 = vsel %vm1175, %v1491, %v1505
        %v1546 = vsel %vm1175, %v1492, %v1507
        %v1549 = vsel %vm1175, %v1493, %v1509
        %v1552 = vsel %vm1175, %v1494, %v1511
        %v1555 = vsel %vm1175, %v1495, %v1513
        %v1558 = vsel %vm1175, %v1496, %v1515
        %v1560 = vsel %vm1200, %v1537, %v1520
        %v1562 = vsel %vm1200, %v1540, %v1522
        %v1564 = vsel %vm1200, %v1543, %v1524
        %v1566 = vsel %vm1200, %v1546, %v1526
        %v1568 = vsel %vm1200, %v1549, %v1528
        %v1570 = vsel %vm1200, %v1552, %v1530
        %v1572 = vsel %vm1200, %v1555, %v1532
        %v1574 = vsel %vm1200, %v1558, %v1534
        %v1577 = vunpack.c.l.b16 %v1228
        %v1578 = vunpack.c.l.b16 %v1229
        %v1579 = vpack.c.b16 %v1578, %v1577
        %vm1580 = vcmask 97280
        %v1581 = vsel %vm1580, %v1560, 0
        %v1583 = vsel %vm1580, %v1562, 0
        %v1585 = vsel %vm1580, %v1564, 0
        %v1587 = vsel %vm1580, %v1566, 0
        %v1589 = vsel %vm1580, %v1568, 0
        %v1591 = vsel %vm1580, %v1570, 0
        %v1593 = vsel %vm1580, %v1572, 0
        %v1595 = vsel %vm1580, %v1574, 0
        %vm1597 = vcmask 1045504
        %v1599 = vsel %vm1597, %v1579, 0
        %1601 = vmatpush.bf16.msra.mxu0 0
        %1602 = vmatpush.bf16.msra.mxu0 0
        %1603 = vmatpush.bf16.msra.mxu0 0
        %1604 = vmatpush.bf16.msra.mxu0 0
        %1605 = vmatpush.bf16.msra.mxu0 0
        %1606 = vmatpush.bf16.msra.mxu0 0
        %1607 = vmatpush.bf16.msra.mxu0 0
        %1608 = vmatpush.bf16.msra.mxu0 %v1599
        %1609 = vmatmul.bf16.gmra.mxu0 %v1581
        %v1610 = vpop.f32.mrf.mxu0
        %v1611 = vadd.f32 0.0, %v1610
        %v1612 = vpop.f32.mrf.mxu0
        %v1613 = vadd.f32 0.0, %v1612
        %1614 = vmatmul.bf16.gmra.mxu0 %v1583
        %v1615 = vpop.f32.mrf.mxu0
        %v1616 = vadd.f32 0.0, %v1615
        %v1617 = vpop.f32.mrf.mxu0
        %v1618 = vadd.f32 0.0, %v1617
        %1619 = vmatmul.bf16.gmra.mxu0 %v1585
        %v1620 = vpop.f32.mrf.mxu0
        %v1621 = vadd.f32 0.0, %v1620
        %v1622 = vpop.f32.mrf.mxu0
        %v1623 = vadd.f32 0.0, %v1622
        %1624 = vmatmul.bf16.gmra.mxu0 %v1587
        %v1625 = vpop.f32.mrf.mxu0
        %v1626 = vadd.f32 0.0, %v1625
        %v1627 = vpop.f32.mrf.mxu0
        %v1628 = vadd.f32 0.0, %v1627
        %1629 = vmatmul.bf16.gmra.mxu0 %v1589
        %v1630 = vpop.f32.mrf.mxu0
        %v1631 = vadd.f32 0.0, %v1630
        %v1632 = vpop.f32.mrf.mxu0
        %v1633 = vadd.f32 0.0, %v1632
        %1634 = vmatmul.bf16.gmra.mxu0 %v1591
        %v1635 = vpop.f32.mrf.mxu0
        %v1636 = vadd.f32 0.0, %v1635
        %v1637 = vpop.f32.mrf.mxu0
        %v1638 = vadd.f32 0.0, %v1637
        %1639 = vmatmul.bf16.gmra.mxu0 %v1593
        %v1640 = vpop.f32.mrf.mxu0
        %v1641 = vadd.f32 0.0, %v1640
        %v1642 = vpop.f32.mrf.mxu0
        %v1643 = vadd.f32 0.0, %v1642
        %1644 = vmatmul.bf16.gmra.mxu0 %v1595
        %v1645 = vpop.f32.mrf.mxu0
        %v1646 = vadd.f32 0.0, %v1645
        %v1647 = vpop.f32.mrf.mxu0
        %v1648 = vadd.f32 0.0, %v1647
        %1649 = vdwg.mxu0
        %v1652 = vunpack.c.l.b16 %v1091
        %v1653 = vunpack.c.l.b16 %v1092
        %v1654 = vpack.c.b16 %v1653, %v1652
        %v1655 = vsel %vm1580, %v1202, 0
        %v1657 = vsel %vm1580, %v1204, 0
        %v1659 = vsel %vm1580, %v1206, 0
        %v1661 = vsel %vm1580, %v1208, 0
        %v1663 = vsel %vm1580, %v1210, 0
        %v1665 = vsel %vm1580, %v1212, 0
        %v1667 = vsel %vm1580, %v1214, 0
        %v1669 = vsel %vm1580, %v1216, 0
        %v1672 = vsel %vm1597, %v1654, 0
        %1674 = vmatpush.bf16.msra.mxu0 0
        %1675 = vmatpush.bf16.msra.mxu0 0
        %1676 = vmatpush.bf16.msra.mxu0 0
        %1677 = vmatpush.bf16.msra.mxu0 0
        %1678 = vmatpush.bf16.msra.mxu0 0
        %1679 = vmatpush.bf16.msra.mxu0 0
        %1680 = vmatpush.bf16.msra.mxu0 0
        %1681 = vmatpush.bf16.msra.mxu0 %v1672
        %1682 = vmatmul.bf16.gmra.mxu0 %v1655
        %v1683 = vpop.f32.mrf.mxu0
        %v1684 = vadd.f32 %v1611, %v1683
        %v1685 = vpop.f32.mrf.mxu0
        %v1686 = vadd.f32 %v1613, %v1685
        %1687 = vmatmul.bf16.gmra.mxu0 %v1657
        %v1688 = vpop.f32.mrf.mxu0
        %v1689 = vadd.f32 %v1616, %v1688
        %v1690 = vpop.f32.mrf.mxu0
        %v1691 = vadd.f32 %v1618, %v1690
        %1692 = vmatmul.bf16.gmra.mxu0 %v1659
        %v1693 = vpop.f32.mrf.mxu0
        %v1694 = vadd.f32 %v1621, %v1693
        %v1695 = vpop.f32.mrf.mxu0
        %v1696 = vadd.f32 %v1623, %v1695
        %1697 = vmatmul.bf16.gmra.mxu0 %v1661
        %v1698 = vpop.f32.mrf.mxu0
        %v1699 = vadd.f32 %v1626, %v1698
        %v1700 = vpop.f32.mrf.mxu0
        %v1701 = vadd.f32 %v1628, %v1700
        %1702 = vmatmul.bf16.gmra.mxu0 %v1663
        %v1703 = vpop.f32.mrf.mxu0
        %v1704 = vadd.f32 %v1631, %v1703
        %v1705 = vpop.f32.mrf.mxu0
        %v1706 = vadd.f32 %v1633, %v1705
        %1707 = vmatmul.bf16.gmra.mxu0 %v1665
        %v1708 = vpop.f32.mrf.mxu0
        %v1709 = vadd.f32 %v1636, %v1708
        %v1710 = vpop.f32.mrf.mxu0
        %v1711 = vadd.f32 %v1638, %v1710
        %1712 = vmatmul.bf16.gmra.mxu0 %v1667
        %v1713 = vpop.f32.mrf.mxu0
        %v1714 = vadd.f32 %v1641, %v1713
        %v1715 = vpop.f32.mrf.mxu0
        %v1716 = vadd.f32 %v1643, %v1715
        %1717 = vmatmul.bf16.gmra.mxu0 %v1669
        %v1718 = vpop.f32.mrf.mxu0
        %v1719 = vadd.f32 %v1646, %v1718
        %v1720 = vpop.f32.mrf.mxu0
        %v1721 = vadd.f32 %v1648, %v1720
        %1722 = vdwg.mxu0
        %v1723 = vld [vmem:[#allocation2] sm:$0xe]
        %v1724 = vld [vmem:[#allocation2 + $0xc] sm:$0xe]
        %v1725 = vld [vmem:[#allocation2 + $0x18] sm:$0xe]
        %v1726 = vld [vmem:[#allocation2 + $0x24] sm:$0xe]
        %v1727 = vld [vmem:[#allocation2 + $0x30] sm:$0xe]
        %v1728 = vld [vmem:[#allocation2 + $0x3c] sm:$0xe]
        %v1729 = vld [vmem:[#allocation2 + $0x48] sm:$0xe]
        %v1730 = vld [vmem:[#allocation2 + $0x54] sm:$0xe]
        %v1731 = vld [vmem:[#allocation2 + $0x60] sm:$0xe]
        %v1732 = vld [vmem:[#allocation2 + $0x6c] sm:$0xe]
        %s1733 = scalar_lea.vmem %s5, 16
        %v1734 = vld [vmem:[%s1733] sm:$0xf]
        %v1735 = vld [vmem:[%s1733 + $0x4] sm:$0x3]
        %vm1752 = vcmask 1042432
        %vm1753 = vcmask 1046532
        %vm1754 = vmor %vm1752, %vm1753
        %v1755 = vrot.slane %v1723, 5
        %v1756 = vrot.slane %v1755, 4
        %v1757 = vrot.slane %v1072, 5
        %v1758 = vsel %vm1754, %v1756, %v1757
        %v1759 = vrot.slane %v1757, 4
        %v1760 = vrot.slane %v1217, 5
        %v1761 = vsel %vm1754, %v1759, %v1760
        %v1762 = vrot.slane %v1724, 5
        %v1763 = vrot.slane %v1762, 4
        %v1764 = vrot.slane %v1074, 5
        %v1765 = vsel %vm1754, %v1763, %v1764
        %v1766 = vrot.slane %v1764, 4
        %v1767 = vrot.slane %v1218, 5
        %v1768 = vsel %vm1754, %v1766, %v1767
        %v1769 = vrot.slane %v1725, 5
        %v1770 = vrot.slane %v1769, 4
        %v1771 = vrot.slane %v1076, 5
        %v1772 = vsel %vm1754, %v1770, %v1771
        %v1773 = vrot.slane %v1771, 4
        %v1774 = vrot.slane %v1219, 5
        %v1775 = vsel %vm1754, %v1773, %v1774
        %v1776 = vrot.slane %v1726, 5
        %v1777 = vrot.slane %v1776, 4
        %v1778 = vrot.slane %v1078, 5
        %v1779 = vsel %vm1754, %v1777, %v1778
        %v1780 = vrot.slane %v1778, 4
        %v1781 = vrot.slane %v1220, 5
        %v1782 = vsel %vm1754, %v1780, %v1781
        %v1783 = vrot.slane %v1727, 5
        %v1784 = vrot.slane %v1783, 4
        %v1785 = vrot.slane %v1080, 5
        %v1786 = vsel %vm1754, %v1784, %v1785
        %v1787 = vrot.slane %v1785, 4
        %v1788 = vrot.slane %v1221, 5
        %v1789 = vsel %vm1754, %v1787, %v1788
        %v1790 = vrot.slane %v1728, 5
        %v1791 = vrot.slane %v1790, 4
        %v1792 = vrot.slane %v1082, 5
        %v1793 = vsel %vm1754, %v1791, %v1792
        %v1794 = vrot.slane %v1792, 4
        %v1795 = vrot.slane %v1222, 5
        %v1796 = vsel %vm1754, %v1794, %v1795
        %v1797 = vrot.slane %v1729, 5
        %v1798 = vrot.slane %v1797, 4
        %v1799 = vrot.slane %v1084, 5
        %v1800 = vsel %vm1754, %v1798, %v1799
        %v1801 = vrot.slane %v1799, 4
        %v1802 = vrot.slane %v1223, 5
        %v1803 = vsel %vm1754, %v1801, %v1802
        %v1804 = vrot.slane %v1730, 5
        %v1805 = vrot.slane %v1804, 4
        %v1806 = vrot.slane %v1086, 5
        %v1807 = vsel %vm1754, %v1805, %v1806
        %v1808 = vrot.slane %v1806, 4
        %v1809 = vrot.slane %v1224, 5
        %v1810 = vsel %vm1754, %v1808, %v1809
        %v1813 = vrot.slane %v1731, 5
        %v1814 = vrot.slane %v1813, 4
        %v1815 = vrot.slane %v1088, 5
        %v1816 = vsel %vm1754, %v1814, %v1815
        %v1817 = vrot.slane %v1815, 4
        %v1818 = vrot.slane %v1225, 5
        %v1819 = vsel %vm1754, %v1817, %v1818
        %v1822 = vrot.slane %v1732, 5
        %v1823 = vrot.slane %v1822, 4
        %v1824 = vrot.slane %v1090, 5
        %v1825 = vsel %vm1754, %v1823, %v1824
        %v1826 = vrot.slane %v1824, 4
        %v1827 = vrot.slane %v1226, 5
        %v1828 = vsel %vm1754, %v1826, %v1827
        %v1829 = vunpack.c.l.b16 %v1758
        %v1830 = vunpack.c.l.b16 %v1761
        %v1831 = vunpack.c.l.b16 %v1765
        %v1832 = vunpack.c.l.b16 %v1768
        %v1833 = vunpack.c.l.b16 %v1772
        %v1834 = vunpack.c.l.b16 %v1775
        %v1835 = vunpack.c.l.b16 %v1779
        %v1836 = vunpack.c.l.b16 %v1782
        %v1837 = vunpack.c.l.b16 %v1786
        %v1838 = vunpack.c.l.b16 %v1789
        %v1839 = vunpack.c.l.b16 %v1793
        %v1840 = vunpack.c.l.b16 %v1796
        %v1841 = vunpack.c.l.b16 %v1800
        %v1842 = vunpack.c.l.b16 %v1803
        %v1843 = vunpack.c.l.b16 %v1807
        %v1844 = vunpack.c.l.b16 %v1810
        %v1845 = vpack.c.b16 %v1830, %v1829
        %v1846 = vpack.c.b16 %v1832, %v1831
        %v1847 = vpack.c.b16 %v1834, %v1833
        %v1848 = vpack.c.b16 %v1836, %v1835
        %v1849 = vpack.c.b16 %v1838, %v1837
        %v1850 = vpack.c.b16 %v1840, %v1839
        %v1851 = vpack.c.b16 %v1842, %v1841
        %v1852 = vpack.c.b16 %v1844, %v1843
        %v1853 = vunpack.c.l.b16 %v1816
        %v1854 = vunpack.c.l.b16 %v1819
        %v1855 = vpack.c.b16 %v1854, %v1853
        %1856 = vrot.lane.b32.xlu0 %v1846, 4
        %v1857 = vpop.permute.xlu0 %1856
        %1858 = vrot.lane.b32.xlu0 %v1847, 4
        %v1859 = vpop.permute.xlu0 %1858
        %1860 = vrot.lane.b32.xlu0 %v1848, 4
        %v1861 = vpop.permute.xlu0 %1860
        %1862 = vrot.lane.b32.xlu0 %v1849, 4
        %v1863 = vpop.permute.xlu0 %1862
        %1864 = vrot.lane.b32.xlu0 %v1850, 4
        %v1865 = vpop.permute.xlu0 %1864
        %1866 = vrot.lane.b32.xlu0 %v1851, 4
        %v1867 = vpop.permute.xlu0 %1866
        %1868 = vrot.lane.b32.xlu0 %v1852, 4
        %v1869 = vpop.permute.xlu0 %1868
        %1870 = vrot.lane.b32.xlu0 %v1855, 4
        %v1871 = vpop.permute.xlu0 %1870
        %v1872 = vunpack.c.l.b16 %v1825
        %v1873 = vunpack.c.l.b16 %v1828
        %v1874 = vpack.c.b16 %v1873, %v1872
        %1875 = vrot.lane.b32.xlu0 %v1847, 8
        %v1876 = vpop.permute.xlu0 %1875
        %1877 = vrot.lane.b32.xlu0 %v1848, 8
        %v1878 = vpop.permute.xlu0 %1877
        %1879 = vrot.lane.b32.xlu0 %v1849, 8
        %v1880 = vpop.permute.xlu0 %1879
        %1881 = vrot.lane.b32.xlu0 %v1850, 8
        %v1882 = vpop.permute.xlu0 %1881
        %1883 = vrot.lane.b32.xlu0 %v1851, 8
        %v1884 = vpop.permute.xlu0 %1883
        %1885 = vrot.lane.b32.xlu0 %v1852, 8
        %v1886 = vpop.permute.xlu0 %1885
        %1887 = vrot.lane.b32.xlu0 %v1855, 8
        %v1888 = vpop.permute.xlu0 %1887
        %1889 = vrot.lane.b32.xlu0 %v1874, 8
        %v1890 = vpop.permute.xlu0 %1889
        %v1893 = vsel %vm1175, %v1845, %v1857
        %v1896 = vsel %vm1175, %v1846, %v1859
        %v1899 = vsel %vm1175, %v1847, %v1861
        %v1902 = vsel %vm1175, %v1848, %v1863
        %v1905 = vsel %vm1175, %v1849, %v1865
        %v1908 = vsel %vm1175, %v1850, %v1867
        %v1911 = vsel %vm1175, %v1851, %v1869
        %v1914 = vsel %vm1175, %v1852, %v1871
        %v1916 = vsel %vm1200, %v1893, %v1876
        %v1918 = vsel %vm1200, %v1896, %v1878
        %v1920 = vsel %vm1200, %v1899, %v1880
        %v1922 = vsel %vm1200, %v1902, %v1882
        %v1924 = vsel %vm1200, %v1905, %v1884
        %v1926 = vsel %vm1200, %v1908, %v1886
        %v1928 = vsel %vm1200, %v1911, %v1888
        %v1930 = vsel %vm1200, %v1914, %v1890
        %v1933 = vunpack.c.l.b16 %v1734
        %v1934 = vunpack.c.l.b16 %v1735
        %v1935 = vpack.c.b16 %v1934, %v1933
        %v1936 = vsel %vm1580, %v1916, 0
        %v1938 = vsel %vm1580, %v1918, 0
        %v1940 = vsel %vm1580, %v1920, 0
        %v1942 = vsel %vm1580, %v1922, 0
        %v1944 = vsel %vm1580, %v1924, 0
        %v1946 = vsel %vm1580, %v1926, 0
        %v1948 = vsel %vm1580, %v1928, 0
        %v1950 = vsel %vm1580, %v1930, 0
        %v1953 = vsel %vm1597, %v1935, 0
        %1955 = vmatpush.bf16.msra.mxu0 0
        %1956 = vmatpush.bf16.msra.mxu0 0
        %1957 = vmatpush.bf16.msra.mxu0 0
        %1958 = vmatpush.bf16.msra.mxu0 0
        %1959 = vmatpush.bf16.msra.mxu0 0
        %1960 = vmatpush.bf16.msra.mxu0 0
        %1961 = vmatpush.bf16.msra.mxu0 0
        %1962 = vmatpush.bf16.msra.mxu0 %v1953
        %1963 = vmatmul.bf16.gmra.mxu0 %v1936
        %v1964 = vpop.f32.mrf.mxu0
        %v1965 = vadd.f32 0.0, %v1964
        %v1966 = vpop.f32.mrf.mxu0
        %v1967 = vadd.f32 0.0, %v1966
        %1968 = vmatmul.bf16.gmra.mxu0 %v1938
        %v1969 = vpop.f32.mrf.mxu0
        %v1970 = vadd.f32 0.0, %v1969
        %v1971 = vpop.f32.mrf.mxu0
        %v1972 = vadd.f32 0.0, %v1971
        %1973 = vmatmul.bf16.gmra.mxu0 %v1940
        %v1974 = vpop.f32.mrf.mxu0
        %v1975 = vadd.f32 0.0, %v1974
        %v1976 = vpop.f32.mrf.mxu0
        %v1977 = vadd.f32 0.0, %v1976
        %1978 = vmatmul.bf16.gmra.mxu0 %v1942
        %v1979 = vpop.f32.mrf.mxu0
        %v1980 = vadd.f32 0.0, %v1979
        %v1981 = vpop.f32.mrf.mxu0
        %v1982 = vadd.f32 0.0, %v1981
        %1983 = vmatmul.bf16.gmra.mxu0 %v1944
        %v1984 = vpop.f32.mrf.mxu0
        %v1985 = vadd.f32 0.0, %v1984
        %v1986 = vpop.f32.mrf.mxu0
        %v1987 = vadd.f32 0.0, %v1986
        %1988 = vmatmul.bf16.gmra.mxu0 %v1946
        %v1989 = vpop.f32.mrf.mxu0
        %v1990 = vadd.f32 0.0, %v1989
        %v1991 = vpop.f32.mrf.mxu0
        %v1992 = vadd.f32 0.0, %v1991
        %1993 = vmatmul.bf16.gmra.mxu0 %v1948
        %v1994 = vpop.f32.mrf.mxu0
        %v1995 = vadd.f32 0.0, %v1994
        %v1996 = vpop.f32.mrf.mxu0
        %v1997 = vadd.f32 0.0, %v1996
        %1998 = vmatmul.bf16.gmra.mxu0 %v1950
        %v1999 = vpop.f32.mrf.mxu0
        %v2000 = vadd.f32 0.0, %v1999
        %v2001 = vpop.f32.mrf.mxu0
        %v2002 = vadd.f32 0.0, %v2001
        %2003 = vdwg.mxu0
        %v2004 = vadd.f32 %v1684, %v1965
        %v2005 = vadd.f32 %v1686, %v1967
        %v2006 = vadd.f32 %v1689, %v1970
        %v2007 = vadd.f32 %v1691, %v1972
        %v2008 = vadd.f32 %v1694, %v1975
        %v2009 = vadd.f32 %v1696, %v1977
        %v2010 = vadd.f32 %v1699, %v1980
        %v2011 = vadd.f32 %v1701, %v1982
        %v2012 = vadd.f32 %v1704, %v1985
        %v2013 = vadd.f32 %v1706, %v1987
        %v2014 = vadd.f32 %v1709, %v1990
        %v2015 = vadd.f32 %v1711, %v1992
        %v2016 = vadd.f32 %v1714, %v1995
        %v2017 = vadd.f32 %v1716, %v1997
        %v2018 = vadd.f32 %v1719, %v2000
        %v2019 = vadd.f32 %v1721, %v2002
        %v2020 = vld [vmem:[%s6] sm:$0x1]
        %v2022 = vperm.slane %v2020, 0
        %v2024 = vadd.f32 %v2004, %v2022
        %v2025 = vadd.f32 %v2005, %v2022
        %v2026 = vadd.f32 %v2006, %v2022
        %v2027 = vadd.f32 %v2007, %v2022
        %v2028 = vadd.f32 %v2008, %v2022
        %v2029 = vadd.f32 %v2009, %v2022
        %v2030 = vadd.f32 %v2010, %v2022
        %v2031 = vadd.f32 %v2011, %v2022
        %v2032 = vadd.f32 %v2012, %v2022
        %v2033 = vadd.f32 %v2013, %v2022
        %v2034 = vadd.f32 %v2014, %v2022
        %v2035 = vadd.f32 %v2015, %v2022
        %v2036 = vadd.f32 %v2016, %v2022
        %v2037 = vadd.f32 %v2017, %v2022
        %v2038 = vadd.f32 %v2018, %v2022
        %v2039 = vadd.f32 %v2019, %v2022
        %v2040 = vmax.f32 %v2024, 0.0
        %v2041 = vmax.f32 %v2025, 0.0
        %v2042 = vmax.f32 %v2026, 0.0
        %v2043 = vmax.f32 %v2027, 0.0
        %v2044 = vmax.f32 %v2028, 0.0
        %v2045 = vmax.f32 %v2029, 0.0
        %v2046 = vmax.f32 %v2030, 0.0
        %v2047 = vmax.f32 %v2031, 0.0
        %v2048 = vmax.f32 %v2032, 0.0
        %v2049 = vmax.f32 %v2033, 0.0
        %v2050 = vmax.f32 %v2034, 0.0
        %v2051 = vmax.f32 %v2035, 0.0
        %v2052 = vmax.f32 %v2036, 0.0
        %v2053 = vmax.f32 %v2037, 0.0
        %v2054 = vmax.f32 %v2038, 0.0
        %v2055 = vmax.f32 %v2039, 0.0
        %v2056 = vpack.c.bf16 %v2041, %v2040
        %v2057 = vpack.c.bf16 %v2043, %v2042
        %v2058 = vpack.c.bf16 %v2045, %v2044
        %v2059 = vpack.c.bf16 %v2047, %v2046
        %v2060 = vpack.c.bf16 %v2049, %v2048
        %v2061 = vpack.c.bf16 %v2051, %v2050
        %v2062 = vpack.c.bf16 %v2053, %v2052
        %v2063 = vpack.c.bf16 %v2055, %v2054
        %v2064 = vld [vmem:[%s7] sm:$0x3]
        %v2065 = vld [vmem:[%s8] sm:$0x1]
        %v2067 = vperm.slane %v2065, 0
        %v2070 = vsel %vm1175, %v2056, 0
        %v2073 = vsel %vm1175, %v2057, 0
        %v2076 = vsel %vm1175, %v2058, 0
        %v2079 = vsel %vm1175, %v2059, 0
        %v2082 = vsel %vm1175, %v2060, 0
        %v2085 = vsel %vm1175, %v2061, 0
        %v2088 = vsel %vm1175, %v2062, 0
        %v2091 = vsel %vm1175, %v2063, 0
        %vm2093 = vcmask 1041408
        %v2095 = vsel %vm2093, %v2064, 0
        %2097 = vmatpush.bf16.msra.mxu0 0
        %2098 = vmatpush.bf16.msra.mxu0 0
        %2099 = vmatpush.bf16.msra.mxu0 0
        %2100 = vmatpush.bf16.msra.mxu0 0
        %2101 = vmatpush.bf16.msra.mxu0 0
        %2102 = vmatpush.bf16.msra.mxu0 0
        %2103 = vmatpush.bf16.msra.mxu0 0
        %2104 = vmatpush.bf16.msra.mxu0 %v2095
        %2105 = vmatmul.bf16.gmra.mxu0 %v2070
        %v2106 = vpop.f32.mrf.mxu0
        %v2107 = vadd.f32 %v2067, %v2106
        %v2108 = vpop.f32.mrf.mxu0
        %v2109 = vadd.f32 %v2067, %v2108
        %2110 = vmatmul.bf16.gmra.mxu0 %v2073
        %v2111 = vpop.f32.mrf.mxu0
        %v2112 = vadd.f32 %v2067, %v2111
        %v2113 = vpop.f32.mrf.mxu0
        %v2114 = vadd.f32 %v2067, %v2113
        %2115 = vmatmul.bf16.gmra.mxu0 %v2076
        %v2116 = vpop.f32.mrf.mxu0
        %v2117 = vadd.f32 %v2067, %v2116
        %v2118 = vpop.f32.mrf.mxu0
        %v2119 = vadd.f32 %v2067, %v2118
        %2120 = vmatmul.bf16.gmra.mxu0 %v2079
        %v2121 = vpop.f32.mrf.mxu0
        %v2122 = vadd.f32 %v2067, %v2121
        %v2123 = vpop.f32.mrf.mxu0
        %v2124 = vadd.f32 %v2067, %v2123
        %2125 = vmatmul.bf16.gmra.mxu0 %v2082
        %v2126 = vpop.f32.mrf.mxu0
        %v2127 = vadd.f32 %v2067, %v2126
        %v2128 = vpop.f32.mrf.mxu0
        %v2129 = vadd.f32 %v2067, %v2128
        %2130 = vmatmul.bf16.gmra.mxu0 %v2085
        %v2131 = vpop.f32.mrf.mxu0
        %v2132 = vadd.f32 %v2067, %v2131
        %v2133 = vpop.f32.mrf.mxu0
        %v2134 = vadd.f32 %v2067, %v2133
        %2135 = vmatmul.bf16.gmra.mxu0 %v2088
        %v2136 = vpop.f32.mrf.mxu0
        %v2137 = vadd.f32 %v2067, %v2136
        %v2138 = vpop.f32.mrf.mxu0
        %v2139 = vadd.f32 %v2067, %v2138
        %2140 = vmatmul.bf16.gmra.mxu0 %v2091
        %v2141 = vpop.f32.mrf.mxu0
        %v2142 = vadd.f32 %v2067, %v2141
        %v2143 = vpop.f32.mrf.mxu0
        %v2144 = vadd.f32 %v2067, %v2143
        %2145 = vdwg.mxu0
        %v2146 = vld [vmem:[%s419] sm:$0xf]
        %v2147 = vld [vmem:[%s419 + $0x4] sm:$0xf]
        %v2148 = vld [vmem:[%s419 + $0x8] sm:$0xf]
        %v2149 = vld [vmem:[%s419 + $0xc] sm:$0xf]
        %v2150 = vld [vmem:[%s419 + $0x10] sm:$0xf]
        %v2151 = vld [vmem:[%s419 + $0x14] sm:$0xf]
        %v2152 = vld [vmem:[%s419 + $0x18] sm:$0xf]
        %v2153 = vld [vmem:[%s419 + $0x1c] sm:$0xf]
        %v2154 = vld [vmem:[%s419 + $0x20] sm:$0xf]
        %v2155 = vld [vmem:[%s419 + $0x24] sm:$0xf]
        %v2156 = vld [vmem:[%s419 + $0x28] sm:$0xf]
        %v2157 = vld [vmem:[%s419 + $0x2c] sm:$0xf]
        %v2158 = vld [vmem:[%s419 + $0x30] sm:$0xf]
        %v2159 = vld [vmem:[%s419 + $0x34] sm:$0xf]
        %v2160 = vld [vmem:[%s419 + $0x38] sm:$0xf]
        %v2161 = vld [vmem:[%s419 + $0x3c] sm:$0xf]
        %v2162 = vunpack.c.l.bf16 %v2146
        %v2163 = vunpack.c.l.bf16 %v2147
        %v2164 = vunpack.c.l.bf16 %v2148
        %v2165 = vunpack.c.l.bf16 %v2149
        %v2166 = vunpack.c.l.bf16 %v2150
        %v2167 = vunpack.c.l.bf16 %v2151
        %v2168 = vunpack.c.l.bf16 %v2152
        %v2169 = vunpack.c.l.bf16 %v2153
        %v2170 = vunpack.c.l.bf16 %v2154
        %v2171 = vunpack.c.l.bf16 %v2155
        %v2172 = vunpack.c.l.bf16 %v2156
        %v2173 = vunpack.c.l.bf16 %v2157
        %v2174 = vunpack.c.l.bf16 %v2158
        %v2175 = vunpack.c.l.bf16 %v2159
        %v2176 = vunpack.c.l.bf16 %v2160
        %v2177 = vunpack.c.l.bf16 %v2161
        %v2178 = vadd.f32 %v2107, %v2162
        %v2179 = vadd.f32 %v2109, %v2163
        %v2180 = vadd.f32 %v2112, %v2164
        %v2181 = vadd.f32 %v2114, %v2165
        %v2182 = vadd.f32 %v2117, %v2166
        %v2183 = vadd.f32 %v2119, %v2167
        %v2184 = vadd.f32 %v2122, %v2168
        %v2185 = vadd.f32 %v2124, %v2169
        %v2186 = vadd.f32 %v2127, %v2170
        %v2187 = vadd.f32 %v2129, %v2171
        %v2188 = vadd.f32 %v2132, %v2172
        %v2189 = vadd.f32 %v2134, %v2173
        %v2190 = vadd.f32 %v2137, %v2174
        %v2191 = vadd.f32 %v2139, %v2175
        %v2192 = vadd.f32 %v2142, %v2176
        %v2193 = vadd.f32 %v2144, %v2177
        %v2194 = vmax.f32 %v2178, 0.0
        %v2195 = vmax.f32 %v2179, 0.0
        %v2196 = vmax.f32 %v2180, 0.0
        %v2197 = vmax.f32 %v2181, 0.0
        %v2198 = vmax.f32 %v2182, 0.0
        %v2199 = vmax.f32 %v2183, 0.0
        %v2200 = vmax.f32 %v2184, 0.0
        %v2201 = vmax.f32 %v2185, 0.0
        %v2202 = vmax.f32 %v2186, 0.0
        %v2203 = vmax.f32 %v2187, 0.0
        %v2204 = vmax.f32 %v2188, 0.0
        %v2205 = vmax.f32 %v2189, 0.0
        %v2206 = vmax.f32 %v2190, 0.0
        %v2207 = vmax.f32 %v2191, 0.0
        %v2208 = vmax.f32 %v2192, 0.0
        %v2209 = vmax.f32 %v2193, 0.0
        %v2210 = vpack.c.bf16 %v2194, %v2194
        %v2211 = vpack.c.bf16 %v2195, %v2195
        %v2212 = vpack.c.bf16 %v2196, %v2196
        %v2213 = vpack.c.bf16 %v2197, %v2197
        %v2214 = vpack.c.bf16 %v2198, %v2198
        %v2215 = vpack.c.bf16 %v2199, %v2199
        %v2216 = vpack.c.bf16 %v2200, %v2200
        %v2217 = vpack.c.bf16 %v2201, %v2201
        %v2218 = vpack.c.bf16 %v2202, %v2202
        %v2219 = vpack.c.bf16 %v2203, %v2203
        %v2220 = vpack.c.bf16 %v2204, %v2204
        %v2221 = vpack.c.bf16 %v2205, %v2205
        %v2222 = vpack.c.bf16 %v2206, %v2206
        %v2223 = vpack.c.bf16 %v2207, %v2207
        %v2224 = vpack.c.bf16 %v2208, %v2208
        %v2225 = vpack.c.bf16 %v2209, %v2209
        %vm2226 = vcmask 125952
        %2227 = vst.msk [vmem:[%s484] sm:$0xf] %vm2226, %v2210
        %2228 = vst.msk [vmem:[%s484 + $0x4] sm:$0xf] %vm2226, %v2211
        %2229 = vst.msk [vmem:[%s484 + $0x8] sm:$0xf] %vm2226, %v2212
        %2230 = vst.msk [vmem:[%s484 + $0xc] sm:$0xf] %vm2226, %v2213
        %2231 = vst.msk [vmem:[%s484 + $0x10] sm:$0xf] %vm2226, %v2214
        %2232 = vst.msk [vmem:[%s484 + $0x14] sm:$0xf] %vm2226, %v2215
        %2233 = vst.msk [vmem:[%s484 + $0x18] sm:$0xf] %vm2226, %v2216
        %2234 = vst.msk [vmem:[%s484 + $0x1c] sm:$0xf] %vm2226, %v2217
        %2235 = vst.msk [vmem:[%s484 + $0x20] sm:$0xf] %vm2226, %v2218
        %2236 = vst.msk [vmem:[%s484 + $0x24] sm:$0xf] %vm2226, %v2219
        %2237 = vst.msk [vmem:[%s484 + $0x28] sm:$0xf] %vm2226, %v2220
        %2238 = vst.msk [vmem:[%s484 + $0x2c] sm:$0xf] %vm2226, %v2221
        %2239 = vst.msk [vmem:[%s484 + $0x30] sm:$0xf] %vm2226, %v2222
        %2240 = vst.msk [vmem:[%s484 + $0x34] sm:$0xf] %vm2226, %v2223
        %2241 = vst.msk [vmem:[%s484 + $0x38] sm:$0xf] %vm2226, %v2224
        %2242 = vst.msk [vmem:[%s484 + $0x3c] sm:$0xf] %vm2226, %v2225
        %s2243 = sand.u32 %s277, 1
        %s2244 = scalar_lea.sflag [#allocation5], %s2243
        %s2245 = sand.u32 %s277, 1
        %s2246 = smul.addr %s2245, 64
        %s2247 = scalar_lea.vmem [#allocation9], %s2246
        // Predicated region
        $region77: #{tpu_custom_call.1} parent=55 // pred_check
          %p2248 = pneg %p287
        $region78: #{tpu_custom_call.1} parent=55 // pred_check_branch
          %2250 = sbr.rel (%p2248) target = $region80
        $region79: #{tpu_custom_call.1} parent=55 // pred_region
          %s2251 = smul.u32 8, %s34
          %2253 = vsyncadd %s2244, 0
          %s2254 = smul.addr %s2251, 2
          %s2255 = smul.addr %s33, 32
          %s2256 = sadd.s32 %s2254, %s2255
          %s2257 = smul.addr %s2256, 4
          %s2258 = scalar_lea.hbm %s9, %s2257
          %s2259 = sshll.u32 %s2247, 4
          %s2260 = int_to_ptr.vmem [resolvable:$true] %s2259
          %s2261 = sshll.u32 %s2258, 4
          %s2262 = int_to_ptr.hbm [resolvable:$true] %s2261
          %2267 = dma.vmem_to_hbm [thread:$0]  %s2260, 1024, %s2262, %s2244, 64, 64, 4
        $region80: #{tpu_custom_call.1} parent=55 // pred_fallthru
          _
      $region56: #{tpu_custom_call.1} parent=5 // pred_fallthru
        _
      %p2268 = scmp.le.s32.totalorder 2, %s24
      // Predicated region
      $region81: #{tpu_custom_call.1} parent=5 // pred_check
        %p2269 = pneg %p2268
      $region82: #{tpu_custom_call.1} parent=5 // pred_check_branch
        %2271 = sbr.rel (%p2269) target = $region84
      $region83: #{tpu_custom_call.1} parent=5 // pred_region
        %s2272 = ssub.s32 %s24, 2
        // Predicated region
        $region85: #{tpu_custom_call.1} parent=83 // pred_check
          %p2273 = pneg %p293
        $region86: #{tpu_custom_call.1} parent=83 // pred_check_branch
          %2275 = sbr.rel (%p2273) target = $region88
        $region87: #{tpu_custom_call.1} parent=83 // pred_region
          %s2276 = sand.u32 %s278, 1
          %s2277 = scalar_lea.sflag [#allocation5], %s2276
          %s2278 = sand.u32 %s278, 1
          %s2279 = smul.addr %s2278, 64
          %s2280 = scalar_lea.vmem [#allocation9], %s2279
          %2282 = dma.done %s2277, 1024
        $region88: #{tpu_custom_call.1} parent=83 // pred_fallthru
          _
      $region84: #{tpu_custom_call.1} parent=5 // pred_fallthru
        _
    $region6: #{tpu_custom_call.1} parent=1 // loop_footer
      %s28 = sadd.s32 1, %s24
    $region7: #{tpu_custom_call.1} parent=1 // loop_footer_branch
      %23 = sbr.rel target = $region3
    $region8: #{tpu_custom_call.1} parent=1 // loop_exit
      _
    %2283 = vsyncpa [#allocation4], 1
    %s2284 = scalar_lea.sflag [#allocation4], 1
    %2285 = vsyncpa %s2284, 1
    %2286 = vsyncpa [#allocation7], 1
    %s2287 = scalar_lea.sflag [#allocation7], 1
    %2288 = vsyncpa %s2287, 1
    %2289 = vsyncpa [#allocation5], 1
    %s2290 = scalar_lea.sflag [#allocation5], 1
    %2291 = vsyncpa %s2290, 1

</llo_original>
